<compile_context>
chip_gen: v7x
topology: tpu7x:2x2x1
jax: 0.10.0
libtpu: 0.0.40
codegen_flags: <defaults>
</compile_context>

<pallas_src>
import functools

import jax
import jax.numpy as jnp
from jax import lax
from jax.experimental import pallas as pl
from jax.experimental.pallas import tpu as pltpu

EPS = 1e-5


# ------------------------------ Pallas kernel ------------------------------ #

def _fused_resnet_down_kernel(p1_ref, w1_ref, we_ref, w2_ref,
                              g1_ref, bt1_ref, ge_ref, bte_ref, b2_ref,
                              o_ref, y1pad_ref,
                              *, n, ho1, wo1, ho2, wo2, s1):
    cp = o_ref.shape[-1]

    # ---- conv1 (im2col matmul) + BatchNorm(batch stats) + ReLU ----------------
    # conv1 bias is dropped: it cancels exactly in (y - mean) for batch-stat BN.
    y1 = jnp.dot(p1_ref[...], w1_ref[...], preferred_element_type=jnp.float32)
    mu1 = jnp.mean(y1, axis=0, keepdims=True)
    var1 = jnp.maximum(jnp.mean(y1 * y1, axis=0, keepdims=True) - mu1 * mu1, 0.0)
    y1 = jnp.maximum((y1 - mu1) * lax.rsqrt(var1 + EPS) * g1_ref[...] + bt1_ref[...],
                     0.0)

    # ---- shortcut: 1x1 conv (centre-tap rows of the SAME patch matrix) + BN ---
    # shortcut conv bias dropped for the same reason.
    e = jnp.dot(p1_ref[...], we_ref[...], preferred_element_type=jnp.float32)
    mue = jnp.mean(e, axis=0, keepdims=True)
    vare = jnp.maximum(jnp.mean(e * e, axis=0, keepdims=True) - mue * mue, 0.0)
    e = (e - mue) * lax.rsqrt(vare + EPS) * ge_ref[...] + bte_ref[...]

    # ---- conv2 on y1, entirely in VMEM: zero-padded scratch + 9 shifted matmuls
    y1pad_ref[...] = jnp.zeros(y1pad_ref.shape, jnp.float32)
    y1pad_ref[:, 1:1 + ho1, 1:1 + wo1, :] = y1.reshape(n, ho1, wo1, cp)

    acc = e + b2_ref[...]                     # conv2 bias kept (no BN follows it)
    for t in range(9):
        ki, kj = t // 3, t % 3
        if s1 == 1:
            patch = y1pad_ref[:, ki:ki + ho2, kj:kj + wo2, :]
        else:
            # TODO(synk): strided inner conv (stride[1] > 1) is untested; PyTorch's own
            # forward would shape-mismatch at the residual add in that case anyway.
            patch = lax.slice(y1pad_ref[...],
                              (0, ki, kj, 0),
                              (n, ki + s1 * (ho2 - 1) + 1, kj + s1 * (wo2 - 1) + 1, cp),
                              (1, s1, s1, 1))
        acc = acc + jnp.dot(patch.reshape(n * ho2 * wo2, cp), w2_ref[t],
                            preferred_element_type=jnp.float32)

    # ---- residual add already folded into acc; final ReLU ---------------------
    o_ref[...] = jnp.maximum(acc, 0.0)


# ------------------------------- JAX wrapper -------------------------------- #

def _ceil_to(v, m):
    return ((v + m - 1) // m) * m


def _full_spec(shape):
    nd = len(shape)

    def index_map(i):
        return (0,) * nd

    return pl.BlockSpec(shape, index_map)


def _im2col(x_nhwc, ksize, stride, pad):
    """im2col for a KxK conv. Returns (N*Ho*Wo, K*K*C) patches and (Ho, Wo)."""
    N, H, W, C = x_nhwc.shape
    xp = jnp.pad(x_nhwc, ((0, 0), (pad, pad), (pad, pad), (0, 0)))
    Ho = (H + 2 * pad - ksize) // stride + 1
    Wo = (W + 2 * pad - ksize) // stride + 1
    patches = []
    for i in range(ksize):
        for j in range(ksize):
            patches.append(xp[:, i:i + Ho * stride:stride, j:j + Wo * stride:stride, :])
    p = jnp.stack(patches, axis=3)                      # (N, Ho, Wo, K*K, C)
    return p.reshape(N * Ho * Wo, ksize * ksize * C), (Ho, Wo)


def resnet_down_block(x_nchw, params, stride):
    s0, s1 = stride
    x = jnp.transpose(x_nchw, (0, 2, 3, 1)).astype(jnp.float32)   # NHWC
    N, H, W, Cin = x.shape
    Cout = params["w1"].shape[0]
    Cp = _ceil_to(Cout, 128)                # lane-dense output channel axis

    # conv1 patches (rows ordered (n, ho, wo)), contraction dim padded to mult. of 8
    p1, (Ho1, Wo1) = _im2col(x, 3, s0, 1)
    Ho2 = (Ho1 + 2 - 3) // s1 + 1
    Wo2 = (Wo1 + 2 - 3) // s1 + 1
    K1 = 9 * Cin
    K1p = _ceil_to(K1, 8)
    p1 = jnp.pad(p1, ((0, 0), (0, K1p - K1)))

    # conv1 weights OIHW -> (kh, kw, cin, cout) -> (9*Cin, Cout), zero-padded
    w1 = jnp.transpose(params["w1"], (2, 3, 1, 0)).reshape(K1, Cout)
    w1p = jnp.zeros((K1p, Cp), jnp.float32).at[:K1, :Cout].set(w1)

    # 1x1 shortcut weights embedded at the centre-tap rows (tap index 4 -> cols 4*Cin..)
    we = jnp.transpose(params["we"].reshape(Cout, Cin), (1, 0))   # (Cin, Cout)
    wep = jnp.zeros((K1p, Cp), jnp.float32).at[4 * Cin:5 * Cin, :Cout].set(we)

    # conv2 weights as 9 per-tap (Cp, Cp) matrices
    w2 = jnp.transpose(params["w2"], (2, 3, 1, 0)).reshape(9, Cout, Cout)
    w2p = jnp.zeros((9, Cp, Cp), jnp.float32).at[:, :Cout, :Cout].set(w2)

    def cvec(v):                                        # (Cout,) -> (1, Cp) zero-padded
        return jnp.zeros((1, Cp), jnp.float32).at[0, :Cout].set(v)

    arrays = [p1, w1p, wep, w2p,
              cvec(params["g1"]), cvec(params["bt1"]),
              cvec(params["ge"]), cvec(params["bte"]),
              cvec(params["b2"])]

    M2 = N * Ho2 * Wo2
    kernel = functools.partial(_fused_resnet_down_kernel,
                               n=N, ho1=Ho1, wo1=Wo1, ho2=Ho2, wo2=Wo2, s1=s1)

    out = pl.pallas_call(
        kernel,
        out_shape=jax.ShapeDtypeStruct((M2, Cp), jnp.float32),
        grid=(1,),
        in_specs=[_full_spec(a.shape) for a in arrays],
        out_specs=_full_spec((M2, Cp)),
        scratch_shapes=[pltpu.VMEM((N, Ho1 + 2, Wo1 + 2, Cp), jnp.float32)],
        compiler_params=pltpu.CompilerParams(dimension_semantics=("arbitrary",)),
    )(*arrays)

    out = out.reshape(N, Ho2, Wo2, Cp)[..., :Cout]
    return jnp.transpose(out, (0, 3, 1, 2))             # back to NCHW


# ---------------------------- pure-JAX reference ----------------------------- #

def reference(x, params, stride):
    def conv(x, w, b, s, pad):
        y = lax.conv_general_dilated(x, w, (s, s), [(pad, pad), (pad, pad)],
                                     dimension_numbers=("NCHW", "OIHW", "NCHW"))
        return y + b.reshape(1, -1, 1, 1)

    def bn(y, g, bt):
        mean = jnp.mean(y, axis=(0, 2, 3), keepdims=True)
        var = jnp.mean((y - mean) ** 2, axis=(0, 2, 3), keepdims=True)
        return (y - mean) * lax.rsqrt(var + EPS) * g.reshape(1, -1, 1, 1) + bt.reshape(1, -1, 1, 1)

    e = bn(conv(x, params["we"], params["be"], stride[0], 0), params["ge"], params["bte"])
    o = jax.nn.relu(bn(conv(x, params["w1"], params["b1"], stride[0], 1),
                       params["g1"], params["bt1"]))
    o = conv(o, params["w2"], params["b2"], stride[1], 1)
    return jax.nn.relu(e + o)


# ----------------------------------- main ------------------------------------ #

if __name__ == "__main__":
    N, Cin, Cout, H, W = 2, 4, 8, 16, 16
    stride = (2, 1)

    key = jax.random.PRNGKey(0)
    ks = jax.random.split(key, 7)
    x = jax.random.normal(ks[0], (N, Cin, H, W), jnp.float32)

    params = dict(
        w1=0.1 * jax.random.normal(ks[1], (Cout, Cin, 3, 3), jnp.float32),
        b1=0.1 * jax.random.normal(ks[2], (Cout,), jnp.float32),
        g1=jnp.ones((Cout,), jnp.float32),
        bt1=jnp.zeros((Cout,), jnp.float32),
        w2=0.1 * jax.random.normal(ks[3], (Cout, Cout, 3, 3), jnp.float32),
        b2=0.1 * jax.random.normal(ks[4], (Cout,), jnp.float32),
        we=0.1 * jax.random.normal(ks[5], (Cout, Cin, 1, 1), jnp.float32),
        be=0.1 * jax.random.normal(ks[6], (Cout,), jnp.float32),
        ge=jnp.ones((Cout,), jnp.float32),
        bte=jnp.zeros((Cout,), jnp.float32),
    )

    out = resnet_down_block(x, params, stride)
    jax.block_until_ready(out)

    assert out.shape == (N, Cout, H // stride[0], W // stride[0]), out.shape
    ref = reference(x, params, stride)
    assert jnp.allclose(out, ref, atol=1e-4, rtol=1e-4), float(jnp.max(jnp.abs(out - ref)))

    print("KERNEL_OK")
</pallas_src>

<mosaic_0001>
module attributes {stable_mosaic.version = 11 : i64} {
  func.func @_fused_resnet_down_kernel(%arg0: i32, %arg1: memref<128x40xf32, #tpu.memory_space<vmem>>, %arg2: memref<40x128xf32, #tpu.memory_space<vmem>>, %arg3: memref<40x128xf32, #tpu.memory_space<vmem>>, %arg4: memref<9x128x128xf32, #tpu.memory_space<vmem>>, %arg5: memref<1x128xf32, #tpu.memory_space<vmem>>, %arg6: memref<1x128xf32, #tpu.memory_space<vmem>>, %arg7: memref<1x128xf32, #tpu.memory_space<vmem>>, %arg8: memref<1x128xf32, #tpu.memory_space<vmem>>, %arg9: memref<1x128xf32, #tpu.memory_space<vmem>>, %arg10: memref<128x128xf32, #tpu.memory_space<vmem>>, %arg11: memref<2x10x10x128xf32, #tpu.memory_space<vmem>>) attributes {dimension_semantics = [#tpu.dimension_semantics<arbitrary>], iteration_bounds = array<i64: 1>, scalar_prefetch = 0 : i64, scratch_operands = 1 : i64, tpu.core_type = #tpu.core_type<tc>, window_params = [{pipeline_mode = #tpu.pipeline_mode<synchronous>, transform_indices = @transform_0, window_bounds = array<i64: 128, 40>}, {pipeline_mode = #tpu.pipeline_mode<synchronous>, transform_indices = @transform_1, window_bounds = array<i64: 40, 128>}, {pipeline_mode = #tpu.pipeline_mode<synchronous>, transform_indices = @transform_2, window_bounds = array<i64: 40, 128>}, {pipeline_mode = #tpu.pipeline_mode<synchronous>, transform_indices = @transform_3, window_bounds = array<i64: 9, 128, 128>}, {pipeline_mode = #tpu.pipeline_mode<synchronous>, transform_indices = @transform_4, window_bounds = array<i64: 1, 128>}, {pipeline_mode = #tpu.pipeline_mode<synchronous>, transform_indices = @transform_5, window_bounds = array<i64: 1, 128>}, {pipeline_mode = #tpu.pipeline_mode<synchronous>, transform_indices = @transform_6, window_bounds = array<i64: 1, 128>}, {pipeline_mode = #tpu.pipeline_mode<synchronous>, transform_indices = @transform_7, window_bounds = array<i64: 1, 128>}, {pipeline_mode = #tpu.pipeline_mode<synchronous>, transform_indices = @transform_8, window_bounds = array<i64: 1, 128>}, {pipeline_mode = #tpu.pipeline_mode<synchronous>, transform_indices = @transform_9, window_bounds = array<i64: 128, 128>}]} {
    %c0 = arith.constant 0 : index
    %c0_0 = arith.constant 0 : index
    %0 = vector.load %arg1[%c0, %c0_0] : memref<128x40xf32, #tpu.memory_space<vmem>>, vector<128x40xf32>
    %c0_1 = arith.constant 0 : index
    %c0_2 = arith.constant 0 : index
    %1 = vector.load %arg2[%c0_1, %c0_2] : memref<40x128xf32, #tpu.memory_space<vmem>>, vector<40x128xf32>
    %cst = arith.constant dense<0.000000e+00> : vector<128x128xf32>
    %2 = tpu.matmul %0, %1, %cst {dimension_numbers = #tpu.dot_dimension_numbers<[1], [0], [0], [1], [0, 0, 1, 1], [], []>} : vector<128x40xf32>, vector<40x128xf32>, vector<128x128xf32> -> vector<128x128xf32>
    %cst_3 = arith.constant dense<0.000000e+00> : vector<128xf32>
    %3 = vector.multi_reduction <add>, %2, %cst_3 [0] : vector<128x128xf32> to vector<128xf32>
    %4 = vector.shape_cast %3 : vector<128xf32> to vector<1x128xf32>
    %cst_4 = arith.constant 1.280000e+02 : f32
    %5 = vector.broadcast %cst_4 : f32 to vector<1x128xf32>
    %6 = arith.divf %4, %5 : vector<1x128xf32>
    %7 = arith.mulf %2, %2 : vector<128x128xf32>
    %cst_5 = arith.constant dense<0.000000e+00> : vector<128xf32>
    %8 = vector.multi_reduction <add>, %7, %cst_5 [0] : vector<128x128xf32> to vector<128xf32>
    %9 = vector.shape_cast %8 : vector<128xf32> to vector<1x128xf32>
    %cst_6 = arith.constant 1.280000e+02 : f32
    %10 = vector.broadcast %cst_6 : f32 to vector<1x128xf32>
    %11 = arith.divf %9, %10 : vector<1x128xf32>
    %12 = arith.mulf %6, %6 : vector<1x128xf32>
    %13 = arith.subf %11, %12 : vector<1x128xf32>
    %cst_7 = arith.constant 0.000000e+00 : f32
    %14 = vector.broadcast %cst_7 : f32 to vector<1x128xf32>
    %15 = arith.maximumf %13, %14 : vector<1x128xf32>
    %16 = vector.broadcast %6 : vector<1x128xf32> to vector<128x128xf32>
    %17 = arith.subf %2, %16 : vector<128x128xf32>
    %cst_8 = arith.constant 9.99999974E-6 : f32
    %18 = vector.broadcast %cst_8 : f32 to vector<1x128xf32>
    %19 = arith.addf %15, %18 : vector<1x128xf32>
    %20 = math.rsqrt %19 : vector<1x128xf32>
    %21 = vector.broadcast %20 : vector<1x128xf32> to vector<128x128xf32>
    %22 = arith.mulf %17, %21 : vector<128x128xf32>
    %c0_9 = arith.constant 0 : index
    %c0_10 = arith.constant 0 : index
    %23 = vector.load %arg5[%c0_9, %c0_10] : memref<1x128xf32, #tpu.memory_space<vmem>>, vector<1x128xf32>
    %24 = vector.broadcast %23 : vector<1x128xf32> to vector<128x128xf32>
    %25 = arith.mulf %22, %24 : vector<128x128xf32>
    %c0_11 = arith.constant 0 : index
    %c0_12 = arith.constant 0 : index
    %26 = vector.load %arg6[%c0_11, %c0_12] : memref<1x128xf32, #tpu.memory_space<vmem>>, vector<1x128xf32>
    %27 = vector.broadcast %26 : vector<1x128xf32> to vector<128x128xf32>
    %28 = arith.addf %25, %27 : vector<128x128xf32>
    %cst_13 = arith.constant 0.000000e+00 : f32
    %29 = vector.broadcast %cst_13 : f32 to vector<128x128xf32>
    %30 = arith.maximumf %28, %29 : vector<128x128xf32>
    %c0_14 = arith.constant 0 : index
    %c0_15 = arith.constant 0 : index
    %31 = vector.load %arg1[%c0_14, %c0_15] : memref<128x40xf32, #tpu.memory_space<vmem>>, vector<128x40xf32>
    %c0_16 = arith.constant 0 : index
    %c0_17 = arith.constant 0 : index
    %32 = vector.load %arg3[%c0_16, %c0_17] : memref<40x128xf32, #tpu.memory_space<vmem>>, vector<40x128xf32>
    %cst_18 = arith.constant dense<0.000000e+00> : vector<128x128xf32>
    %33 = tpu.matmul %31, %32, %cst_18 {dimension_numbers = #tpu.dot_dimension_numbers<[1], [0], [0], [1], [0, 0, 1, 1], [], []>} : vector<128x40xf32>, vector<40x128xf32>, vector<128x128xf32> -> vector<128x128xf32>
    %cst_19 = arith.constant dense<0.000000e+00> : vector<128xf32>
    %34 = vector.multi_reduction <add>, %33, %cst_19 [0] : vector<128x128xf32> to vector<128xf32>
    %35 = vector.shape_cast %34 : vector<128xf32> to vector<1x128xf32>
    %cst_20 = arith.constant 1.280000e+02 : f32
    %36 = vector.broadcast %cst_20 : f32 to vector<1x128xf32>
    %37 = arith.divf %35, %36 : vector<1x128xf32>
    %38 = arith.mulf %33, %33 : vector<128x128xf32>
    %cst_21 = arith.constant dense<0.000000e+00> : vector<128xf32>
    %39 = vector.multi_reduction <add>, %38, %cst_21 [0] : vector<128x128xf32> to vector<128xf32>
    %40 = vector.shape_cast %39 : vector<128xf32> to vector<1x128xf32>
    %cst_22 = arith.constant 1.280000e+02 : f32
    %41 = vector.broadcast %cst_22 : f32 to vector<1x128xf32>
    %42 = arith.divf %40, %41 : vector<1x128xf32>
    %43 = arith.mulf %37, %37 : vector<1x128xf32>
    %44 = arith.subf %42, %43 : vector<1x128xf32>
    %cst_23 = arith.constant 0.000000e+00 : f32
    %45 = vector.broadcast %cst_23 : f32 to vector<1x128xf32>
    %46 = arith.maximumf %44, %45 : vector<1x128xf32>
    %47 = vector.broadcast %37 : vector<1x128xf32> to vector<128x128xf32>
    %48 = arith.subf %33, %47 : vector<128x128xf32>
    %cst_24 = arith.constant 9.99999974E-6 : f32
    %49 = vector.broadcast %cst_24 : f32 to vector<1x128xf32>
    %50 = arith.addf %46, %49 : vector<1x128xf32>
    %51 = math.rsqrt %50 : vector<1x128xf32>
    %52 = vector.broadcast %51 : vector<1x128xf32> to vector<128x128xf32>
    %53 = arith.mulf %48, %52 : vector<128x128xf32>
    %c0_25 = arith.constant 0 : index
    %c0_26 = arith.constant 0 : index
    %54 = vector.load %arg7[%c0_25, %c0_26] : memref<1x128xf32, #tpu.memory_space<vmem>>, vector<1x128xf32>
    %55 = vector.broadcast %54 : vector<1x128xf32> to vector<128x128xf32>
    %56 = arith.mulf %53, %55 : vector<128x128xf32>
    %c0_27 = arith.constant 0 : index
    %c0_28 = arith.constant 0 : index
    %57 = vector.load %arg8[%c0_27, %c0_28] : memref<1x128xf32, #tpu.memory_space<vmem>>, vector<1x128xf32>
    %58 = vector.broadcast %57 : vector<1x128xf32> to vector<128x128xf32>
    %59 = arith.addf %56, %58 : vector<128x128xf32>
    %cst_29 = arith.constant 0.000000e+00 : f32
    %60 = vector.broadcast %cst_29 : f32 to vector<2x10x10x128xf32>
    %c0_30 = arith.constant 0 : index
    %c0_31 = arith.constant 0 : index
    %c0_32 = arith.constant 0 : index
    %c0_33 = arith.constant 0 : index
    %61 = vector.load %arg11[%c0_30, %c0_31, %c0_32, %c0_33] : memref<2x10x10x128xf32, #tpu.memory_space<vmem>>, vector<2x10x10x128xf32>
    tpu.vector_store %arg11[%c0_30, %c0_31, %c0_32, %c0_33], %60 {strides = array<i32>} : memref<2x10x10x128xf32, #tpu.memory_space<vmem>>, vector<2x10x10x128xf32>,
    %62 = vector.shape_cast %30 : vector<128x128xf32> to vector<2x8x8x128xf32>
    %c0_34 = arith.constant 0 : index
    %c1 = arith.constant 1 : index
    %c1_35 = arith.constant 1 : index
    %c0_36 = arith.constant 0 : index
    %63 = vector.load %arg11[%c0_34, %c1, %c1_35, %c0_36] : memref<2x10x10x128xf32, #tpu.memory_space<vmem>>, vector<2x8x8x128xf32>
    tpu.vector_store %arg11[%c0_34, %c1, %c1_35, %c0_36], %62 {strides = array<i32>} : memref<2x10x10x128xf32, #tpu.memory_space<vmem>>, vector<2x8x8x128xf32>,
    %c0_37 = arith.constant 0 : index
    %c0_38 = arith.constant 0 : index
    %64 = vector.load %arg9[%c0_37, %c0_38] : memref<1x128xf32, #tpu.memory_space<vmem>>, vector<1x128xf32>
    %65 = vector.broadcast %64 : vector<1x128xf32> to vector<128x128xf32>
    %66 = arith.addf %59, %65 : vector<128x128xf32>
    %c0_39 = arith.constant 0 : index
    %c0_40 = arith.constant 0 : index
    %c0_41 = arith.constant 0 : index
    %c0_42 = arith.constant 0 : index
    %67 = vector.load %arg11[%c0_39, %c0_40, %c0_41, %c0_42] : memref<2x10x10x128xf32, #tpu.memory_space<vmem>>, vector<2x8x8x128xf32>
    %68 = vector.shape_cast %67 : vector<2x8x8x128xf32> to vector<128x128xf32>
    %c0_43 = arith.constant 0 : index
    %c0_44 = arith.constant 0 : index
    %c0_45 = arith.constant 0 : index
    %69 = vector.load %arg4[%c0_43, %c0_44, %c0_45] : memref<9x128x128xf32, #tpu.memory_space<vmem>>, vector<1x128x128xf32>
    %70 = vector.shape_cast %69 : vector<1x128x128xf32> to vector<128x128xf32>
    %cst_46 = arith.constant dense<0.000000e+00> : vector<128x128xf32>
    %71 = tpu.matmul %68, %70, %cst_46 {dimension_numbers = #tpu.dot_dimension_numbers<[1], [0], [0], [1], [0, 0, 1, 1], [], []>} : vector<128x128xf32>, vector<128x128xf32>, vector<128x128xf32> -> vector<128x128xf32>
    %72 = arith.addf %66, %71 : vector<128x128xf32>
    %c0_47 = arith.constant 0 : index
    %c0_48 = arith.constant 0 : index
    %c1_49 = arith.constant 1 : index
    %c0_50 = arith.constant 0 : index
    %73 = vector.load %arg11[%c0_47, %c0_48, %c1_49, %c0_50] : memref<2x10x10x128xf32, #tpu.memory_space<vmem>>, vector<2x8x8x128xf32>
    %74 = vector.shape_cast %73 : vector<2x8x8x128xf32> to vector<128x128xf32>
    %c1_51 = arith.constant 1 : index
    %c0_52 = arith.constant 0 : index
    %c0_53 = arith.constant 0 : index
    %75 = vector.load %arg4[%c1_51, %c0_52, %c0_53] : memref<9x128x128xf32, #tpu.memory_space<vmem>>, vector<1x128x128xf32>
    %76 = vector.shape_cast %75 : vector<1x128x128xf32> to vector<128x128xf32>
    %cst_54 = arith.constant dense<0.000000e+00> : vector<128x128xf32>
    %77 = tpu.matmul %74, %76, %cst_54 {dimension_numbers = #tpu.dot_dimension_numbers<[1], [0], [0], [1], [0, 0, 1, 1], [], []>} : vector<128x128xf32>, vector<128x128xf32>, vector<128x128xf32> -> vector<128x128xf32>
    %78 = arith.addf %72, %77 : vector<128x128xf32>
    %c0_55 = arith.constant 0 : index
    %c0_56 = arith.constant 0 : index
    %c2 = arith.constant 2 : index
    %c0_57 = arith.constant 0 : index
    %79 = vector.load %arg11[%c0_55, %c0_56, %c2, %c0_57] : memref<2x10x10x128xf32, #tpu.memory_space<vmem>>, vector<2x8x8x128xf32>
    %80 = vector.shape_cast %79 : vector<2x8x8x128xf32> to vector<128x128xf32>
    %c2_58 = arith.constant 2 : index
    %c0_59 = arith.constant 0 : index
    %c0_60 = arith.constant 0 : index
    %81 = vector.load %arg4[%c2_58, %c0_59, %c0_60] : memref<9x128x128xf32, #tpu.memory_space<vmem>>, vector<1x128x128xf32>
    %82 = vector.shape_cast %81 : vector<1x128x128xf32> to vector<128x128xf32>
    %cst_61 = arith.constant dense<0.000000e+00> : vector<128x128xf32>
    %83 = tpu.matmul %80, %82, %cst_61 {dimension_numbers = #tpu.dot_dimension_numbers<[1], [0], [0], [1], [0, 0, 1, 1], [], []>} : vector<128x128xf32>, vector<128x128xf32>, vector<128x128xf32> -> vector<128x128xf32>
    %84 = arith.addf %78, %83 : vector<128x128xf32>
    %c0_62 = arith.constant 0 : index
    %c1_63 = arith.constant 1 : index
    %c0_64 = arith.constant 0 : index
    %c0_65 = arith.constant 0 : index
    %85 = vector.load %arg11[%c0_62, %c1_63, %c0_64, %c0_65] : memref<2x10x10x128xf32, #tpu.memory_space<vmem>>, vector<2x8x8x128xf32>
    %86 = vector.shape_cast %85 : vector<2x8x8x128xf32> to vector<128x128xf32>
    %c3 = arith.constant 3 : index
    %c0_66 = arith.constant 0 : index
    %c0_67 = arith.constant 0 : index
    %87 = vector.load %arg4[%c3, %c0_66, %c0_67] : memref<9x128x128xf32, #tpu.memory_space<vmem>>, vector<1x128x128xf32>
    %88 = vector.shape_cast %87 : vector<1x128x128xf32> to vector<128x128xf32>
    %cst_68 = arith.constant dense<0.000000e+00> : vector<128x128xf32>
    %89 = tpu.matmul %86, %88, %cst_68 {dimension_numbers = #tpu.dot_dimension_numbers<[1], [0], [0], [1], [0, 0, 1, 1], [], []>} : vector<128x128xf32>, vector<128x128xf32>, vector<128x128xf32> -> vector<128x128xf32>
    %90 = arith.addf %84, %89 : vector<128x128xf32>
    %c0_69 = arith.constant 0 : index
    %c1_70 = arith.constant 1 : index
    %c1_71 = arith.constant 1 : index
    %c0_72 = arith.constant 0 : index
    %91 = vector.load %arg11[%c0_69, %c1_70, %c1_71, %c0_72] : memref<2x10x10x128xf32, #tpu.memory_space<vmem>>, vector<2x8x8x128xf32>
    %92 = vector.shape_cast %91 : vector<2x8x8x128xf32> to vector<128x128xf32>
    %c4 = arith.constant 4 : index
    %c0_73 = arith.constant 0 : index
    %c0_74 = arith.constant 0 : index
    %93 = vector.load %arg4[%c4, %c0_73, %c0_74] : memref<9x128x128xf32, #tpu.memory_space<vmem>>, vector<1x128x128xf32>
    %94 = vector.shape_cast %93 : vector<1x128x128xf32> to vector<128x128xf32>
    %cst_75 = arith.constant dense<0.000000e+00> : vector<128x128xf32>
    %95 = tpu.matmul %92, %94, %cst_75 {dimension_numbers = #tpu.dot_dimension_numbers<[1], [0], [0], [1], [0, 0, 1, 1], [], []>} : vector<128x128xf32>, vector<128x128xf32>, vector<128x128xf32> -> vector<128x128xf32>
    %96 = arith.addf %90, %95 : vector<128x128xf32>
    %c0_76 = arith.constant 0 : index
    %c1_77 = arith.constant 1 : index
    %c2_78 = arith.constant 2 : index
    %c0_79 = arith.constant 0 : index
    %97 = vector.load %arg11[%c0_76, %c1_77, %c2_78, %c0_79] : memref<2x10x10x128xf32, #tpu.memory_space<vmem>>, vector<2x8x8x128xf32>
    %98 = vector.shape_cast %97 : vector<2x8x8x128xf32> to vector<128x128xf32>
    %c5 = arith.constant 5 : index
    %c0_80 = arith.constant 0 : index
    %c0_81 = arith.constant 0 : index
    %99 = vector.load %arg4[%c5, %c0_80, %c0_81] : memref<9x128x128xf32, #tpu.memory_space<vmem>>, vector<1x128x128xf32>
    %100 = vector.shape_cast %99 : vector<1x128x128xf32> to vector<128x128xf32>
    %cst_82 = arith.constant dense<0.000000e+00> : vector<128x128xf32>
    %101 = tpu.matmul %98, %100, %cst_82 {dimension_numbers = #tpu.dot_dimension_numbers<[1], [0], [0], [1], [0, 0, 1, 1], [], []>} : vector<128x128xf32>, vector<128x128xf32>, vector<128x128xf32> -> vector<128x128xf32>
    %102 = arith.addf %96, %101 : vector<128x128xf32>
    %c0_83 = arith.constant 0 : index
    %c2_84 = arith.constant 2 : index
    %c0_85 = arith.constant 0 : index
    %c0_86 = arith.constant 0 : index
    %103 = vector.load %arg11[%c0_83, %c2_84, %c0_85, %c0_86] : memref<2x10x10x128xf32, #tpu.memory_space<vmem>>, vector<2x8x8x128xf32>
    %104 = vector.shape_cast %103 : vector<2x8x8x128xf32> to vector<128x128xf32>
    %c6 = arith.constant 6 : index
    %c0_87 = arith.constant 0 : index
    %c0_88 = arith.constant 0 : index
    %105 = vector.load %arg4[%c6, %c0_87, %c0_88] : memref<9x128x128xf32, #tpu.memory_space<vmem>>, vector<1x128x128xf32>
    %106 = vector.shape_cast %105 : vector<1x128x128xf32> to vector<128x128xf32>
    %cst_89 = arith.constant dense<0.000000e+00> : vector<128x128xf32>
    %107 = tpu.matmul %104, %106, %cst_89 {dimension_numbers = #tpu.dot_dimension_numbers<[1], [0], [0], [1], [0, 0, 1, 1], [], []>} : vector<128x128xf32>, vector<128x128xf32>, vector<128x128xf32> -> vector<128x128xf32>
    %108 = arith.addf %102, %107 : vector<128x128xf32>
    %c0_90 = arith.constant 0 : index
    %c2_91 = arith.constant 2 : index
    %c1_92 = arith.constant 1 : index
    %c0_93 = arith.constant 0 : index
    %109 = vector.load %arg11[%c0_90, %c2_91, %c1_92, %c0_93] : memref<2x10x10x128xf32, #tpu.memory_space<vmem>>, vector<2x8x8x128xf32>
    %110 = vector.shape_cast %109 : vector<2x8x8x128xf32> to vector<128x128xf32>
    %c7 = arith.constant 7 : index
    %c0_94 = arith.constant 0 : index
    %c0_95 = arith.constant 0 : index
    %111 = vector.load %arg4[%c7, %c0_94, %c0_95] : memref<9x128x128xf32, #tpu.memory_space<vmem>>, vector<1x128x128xf32>
    %112 = vector.shape_cast %111 : vector<1x128x128xf32> to vector<128x128xf32>
    %cst_96 = arith.constant dense<0.000000e+00> : vector<128x128xf32>
    %113 = tpu.matmul %110, %112, %cst_96 {dimension_numbers = #tpu.dot_dimension_numbers<[1], [0], [0], [1], [0, 0, 1, 1], [], []>} : vector<128x128xf32>, vector<128x128xf32>, vector<128x128xf32> -> vector<128x128xf32>
    %114 = arith.addf %108, %113 : vector<128x128xf32>
    %c0_97 = arith.constant 0 : index
    %c2_98 = arith.constant 2 : index
    %c2_99 = arith.constant 2 : index
    %c0_100 = arith.constant 0 : index
    %115 = vector.load %arg11[%c0_97, %c2_98, %c2_99, %c0_100] : memref<2x10x10x128xf32, #tpu.memory_space<vmem>>, vector<2x8x8x128xf32>
    %116 = vector.shape_cast %115 : vector<2x8x8x128xf32> to vector<128x128xf32>
    %c8 = arith.constant 8 : index
    %c0_101 = arith.constant 0 : index
    %c0_102 = arith.constant 0 : index
    %117 = vector.load %arg4[%c8, %c0_101, %c0_102] : memref<9x128x128xf32, #tpu.memory_space<vmem>>, vector<1x128x128xf32>
    %118 = vector.shape_cast %117 : vector<1x128x128xf32> to vector<128x128xf32>
    %cst_103 = arith.constant dense<0.000000e+00> : vector<128x128xf32>
    %119 = tpu.matmul %116, %118, %cst_103 {dimension_numbers = #tpu.dot_dimension_numbers<[1], [0], [0], [1], [0, 0, 1, 1], [], []>} : vector<128x128xf32>, vector<128x128xf32>, vector<128x128xf32> -> vector<128x128xf32>
    %120 = arith.addf %114, %119 : vector<128x128xf32>
    %cst_104 = arith.constant 0.000000e+00 : f32
    %121 = vector.broadcast %cst_104 : f32 to vector<128x128xf32>
    %122 = arith.maximumf %120, %121 : vector<128x128xf32>
    %c0_105 = arith.constant 0 : index
    %c0_106 = arith.constant 0 : index
    %123 = vector.load %arg10[%c0_105, %c0_106] : memref<128x128xf32, #tpu.memory_space<vmem>>, vector<128x128xf32>
    tpu.vector_store %arg10[%c0_105, %c0_106], %122 {strides = array<i32>} : memref<128x128xf32, #tpu.memory_space<vmem>>, vector<128x128xf32>,
    return
  }
  func.func @transform_0(%arg0: i32) -> (i32, i32) {
    %c0_i32 = arith.constant 0 : i32
    %c0_i32_0 = arith.constant 0 : i32
    %c0_i32_1 = arith.constant 0 : i32
    return %c0_i32, %c0_i32_0 : i32, i32
  }
  func.func @transform_1(%arg0: i32) -> (i32, i32) {
    %c0_i32 = arith.constant 0 : i32
    %c0_i32_0 = arith.constant 0 : i32
    %c0_i32_1 = arith.constant 0 : i32
    return %c0_i32, %c0_i32_0 : i32, i32
  }
  func.func @transform_2(%arg0: i32) -> (i32, i32) {
    %c0_i32 = arith.constant 0 : i32
    %c0_i32_0 = arith.constant 0 : i32
    %c0_i32_1 = arith.constant 0 : i32
    return %c0_i32, %c0_i32_0 : i32, i32
  }
  func.func @transform_3(%arg0: i32) -> (i32, i32, i32) {
    %c0_i32 = arith.constant 0 : i32
    %c0_i32_0 = arith.constant 0 : i32
    %c0_i32_1 = arith.constant 0 : i32
    %c0_i32_2 = arith.constant 0 : i32
    return %c0_i32, %c0_i32_0, %c0_i32_1 : i32, i32, i32
  }
  func.func @transform_4(%arg0: i32) -> (i32, i32) {
    %c0_i32 = arith.constant 0 : i32
    %c0_i32_0 = arith.constant 0 : i32
    %c0_i32_1 = arith.constant 0 : i32
    return %c0_i32, %c0_i32_0 : i32, i32
  }
  func.func @transform_5(%arg0: i32) -> (i32, i32) {
    %c0_i32 = arith.constant 0 : i32
    %c0_i32_0 = arith.constant 0 : i32
    %c0_i32_1 = arith.constant 0 : i32
    return %c0_i32, %c0_i32_0 : i32, i32
  }
  func.func @transform_6(%arg0: i32) -> (i32, i32) {
    %c0_i32 = arith.constant 0 : i32
    %c0_i32_0 = arith.constant 0 : i32
    %c0_i32_1 = arith.constant 0 : i32
    return %c0_i32, %c0_i32_0 : i32, i32
  }
  func.func @transform_7(%arg0: i32) -> (i32, i32) {
    %c0_i32 = arith.constant 0 : i32
    %c0_i32_0 = arith.constant 0 : i32
    %c0_i32_1 = arith.constant 0 : i32
    return %c0_i32, %c0_i32_0 : i32, i32
  }
  func.func @transform_8(%arg0: i32) -> (i32, i32) {
    %c0_i32 = arith.constant 0 : i32
    %c0_i32_0 = arith.constant 0 : i32
    %c0_i32_1 = arith.constant 0 : i32
    return %c0_i32, %c0_i32_0 : i32, i32
  }
  func.func @transform_9(%arg0: i32) -> (i32, i32) {
    %c0_i32 = arith.constant 0 : i32
    %c0_i32_0 = arith.constant 0 : i32
    %c0_i32_1 = arith.constant 0 : i32
    return %c0_i32, %c0_i32_0 : i32, i32
  }
}

</mosaic_0001>

<llo_original>
// kernel: tpu_custom_call.1
$region0: #{tpu_custom_call.1}
  #allocation0 [shape = 'u32[]', space=smem, size = 0x4, offset = 0x4, fixed_abs, tag = 'smem constant byte address 0x4 - core index']
  #allocation1 [shape = 'u32[144,128]{1,0:T(1,128)}', space=vmem, size = 0x12000, scoped, tag = 'internal scratch']
  #allocation2 [shape = 'f32[2,10,10,128]{3,2,1,0:T(8,128)}', space=vmem, size = 0x28000, scoped, tag = 'scratch operand']
  %s0 = inlined_call_operand.vmem [shape: f32[128,40], index: 0, kind: input, shape index: {}]
  %s1 = inlined_call_operand.vmem [shape: f32[40,128], index: 1, kind: input, shape index: {}]
  %s2 = inlined_call_operand.vmem [shape: f32[40,128], index: 2, kind: input, shape index: {}]
  %s3 = inlined_call_operand.hbm [shape: f32[9,128,128], index: 3, kind: input, shape index: {}]
  %s4 = inlined_call_operand.vmem [shape: f32[1,128], index: 4, kind: input, shape index: {}]
  %s5 = inlined_call_operand.vmem [shape: f32[1,128], index: 5, kind: input, shape index: {}]
  %s6 = inlined_call_operand.vmem [shape: f32[1,128], index: 6, kind: input, shape index: {}]
  %s7 = inlined_call_operand.vmem [shape: f32[1,128], index: 7, kind: input, shape index: {}]
  %s8 = inlined_call_operand.vmem [shape: f32[1,128], index: 8, kind: input, shape index: {}]
  %s9 = inlined_call_operand.hbm [shape: f32[128,128], index: 9, kind: output, shape index: {}]
  %s10 = sld [smem:[#allocation0]]
  $region50: #{tpu_custom_call.1} parent=0
    _
  %s12 = ssub.s32 1, %s10
  %s13 = scalar_select 0, %s12, %s10
  $region1: #{tpu_custom_call.1} parent=0
    #allocation3 [shape = 'u8[589824]{0}', space=vmem, size = 0x90000, scoped, tag = 'input window, operand 3, single buffered']
    #allocation4 [shape = 's32[1]{0}', space=sflag, size = 0x4, scoped, tag = 'scoped memory for tpu_custom_call.1']
    #allocation5 [shape = 's32[1]{0}', space=sflag, size = 0x4, scoped, tag = 'scoped memory for tpu_custom_call.1']
    #allocation6 [shape = 'u8[65536]{0}', space=vmem, size = 0x10000, scoped, tag = 'output window, operand 0, single buffered']
    %14 = vsyncpa [#allocation4], 0
    %15 = vsyncpa [#allocation5], 0
    // Predicated region
    $region2: #{tpu_custom_call.1} parent=1 // pred_check
      _
    $region3: #{tpu_custom_call.1} parent=1 // pred_check_branch
      %17 = sbr.rel (0) target = $region5
    $region4: #{tpu_custom_call.1} parent=1 // pred_region
      _
    $region5: #{tpu_custom_call.1} parent=1 // pred_fallthru
      _
    // Predicated region
    $region6: #{tpu_custom_call.1} parent=1 // pred_check
      _
    $region7: #{tpu_custom_call.1} parent=1 // pred_check_branch
      %19 = sbr.rel (0) target = $region9
    $region8: #{tpu_custom_call.1} parent=1 // pred_region
      _
    $region9: #{tpu_custom_call.1} parent=1 // pred_fallthru
      _
    // Predicated region
    $region10: #{tpu_custom_call.1} parent=1 // pred_check
      _
    $region11: #{tpu_custom_call.1} parent=1 // pred_check_branch
      %21 = sbr.rel (0) target = $region13
    $region12: #{tpu_custom_call.1} parent=1 // pred_region
      _
    $region13: #{tpu_custom_call.1} parent=1 // pred_fallthru
      _
    // Predicated region
    $region14: #{tpu_custom_call.1} parent=1 // pred_check
      _
    $region15: #{tpu_custom_call.1} parent=1 // pred_check_branch
      %23 = sbr.rel (0) target = $region17
    $region16: #{tpu_custom_call.1} parent=1 // pred_region
      %s25 = ssub.s32 18432, 18432
      %26 = vsyncadd [#allocation4], %s25
      %s27 = sshll.u32 [#allocation3], 4
      %s28 = int_to_ptr.vmem [resolvable:$true] %s27
      %33 = dma.hbm_to_vmem [thread:$0]  %s3, 18432, %s28, [#allocation4], 128, 128, 8
    $region17: #{tpu_custom_call.1} parent=1 // pred_fallthru
      _
    // Predicated region
    $region18: #{tpu_custom_call.1} parent=1 // pred_check
      _
    $region19: #{tpu_custom_call.1} parent=1 // pred_check_branch
      %35 = sbr.rel (0) target = $region21
    $region20: #{tpu_custom_call.1} parent=1 // pred_region
      _
    $region21: #{tpu_custom_call.1} parent=1 // pred_fallthru
      _
    // Predicated region
    $region22: #{tpu_custom_call.1} parent=1 // pred_check
      _
    $region23: #{tpu_custom_call.1} parent=1 // pred_check_branch
      %37 = sbr.rel (0) target = $region25
    $region24: #{tpu_custom_call.1} parent=1 // pred_region
      _
    $region25: #{tpu_custom_call.1} parent=1 // pred_fallthru
      _
    // Predicated region
    $region26: #{tpu_custom_call.1} parent=1 // pred_check
      _
    $region27: #{tpu_custom_call.1} parent=1 // pred_check_branch
      %39 = sbr.rel (0) target = $region29
    $region28: #{tpu_custom_call.1} parent=1 // pred_region
      _
    $region29: #{tpu_custom_call.1} parent=1 // pred_fallthru
      _
    // Predicated region
    $region30: #{tpu_custom_call.1} parent=1 // pred_check
      _
    $region31: #{tpu_custom_call.1} parent=1 // pred_check_branch
      %41 = sbr.rel (0) target = $region33
    $region32: #{tpu_custom_call.1} parent=1 // pred_region
      _
    $region33: #{tpu_custom_call.1} parent=1 // pred_fallthru
      _
    // Predicated region
    $region34: #{tpu_custom_call.1} parent=1 // pred_check
      _
    $region35: #{tpu_custom_call.1} parent=1 // pred_check_branch
      %43 = sbr.rel (0) target = $region37
    $region36: #{tpu_custom_call.1} parent=1 // pred_region
      _
    $region37: #{tpu_custom_call.1} parent=1 // pred_fallthru
      _
    // Predicated region
    $region38: #{tpu_custom_call.1} parent=1 // pred_check
      _
    $region39: #{tpu_custom_call.1} parent=1 // pred_check_branch
      %45 = sbr.rel (0) target = $region41
    $region40: #{tpu_custom_call.1} parent=1 // pred_region
      %46 = dma.done [#allocation4], 18432
    $region41: #{tpu_custom_call.1} parent=1 // pred_fallthru
      _
    %v47 = vld [vmem:[%s0] sm:$0xff]
    %v48 = vld [vmem:[%s0 + $0x8] sm:$0xff]
    %v49 = vld [vmem:[%s0 + $0x10] sm:$0xff]
    %v50 = vld [vmem:[%s0 + $0x18] sm:$0xff]
    %v51 = vld [vmem:[%s0 + $0x20] sm:$0xff]
    %v52 = vld [vmem:[%s0 + $0x28] sm:$0xff]
    %v53 = vld [vmem:[%s0 + $0x30] sm:$0xff]
    %v54 = vld [vmem:[%s0 + $0x38] sm:$0xff]
    %v55 = vld [vmem:[%s0 + $0x40] sm:$0xff]
    %v56 = vld [vmem:[%s0 + $0x48] sm:$0xff]
    %v57 = vld [vmem:[%s0 + $0x50] sm:$0xff]
    %v58 = vld [vmem:[%s0 + $0x58] sm:$0xff]
    %v59 = vld [vmem:[%s0 + $0x60] sm:$0xff]
    %v60 = vld [vmem:[%s0 + $0x68] sm:$0xff]
    %v61 = vld [vmem:[%s0 + $0x70] sm:$0xff]
    %v62 = vld [vmem:[%s0 + $0x78] sm:$0xff]
    %v63 = vld [vmem:[%s1] sm:$0xff]
    %v64 = vld [vmem:[%s1 + $0x8] sm:$0xff]
    %v65 = vld [vmem:[%s1 + $0x10] sm:$0xff]
    %v66 = vld [vmem:[%s1 + $0x18] sm:$0xff]
    %v67 = vld [vmem:[%s1 + $0x20] sm:$0xff]
    %vm68 = vcmask 326656
    %v70 = vsel %vm68, %v47, 0
    %v73 = vsel %vm68, %v48, 0
    %v76 = vsel %vm68, %v49, 0
    %v79 = vsel %vm68, %v50, 0
    %v82 = vsel %vm68, %v51, 0
    %v85 = vsel %vm68, %v52, 0
    %v88 = vsel %vm68, %v53, 0
    %v91 = vsel %vm68, %v54, 0
    %v94 = vsel %vm68, %v55, 0
    %v97 = vsel %vm68, %v56, 0
    %v100 = vsel %vm68, %v57, 0
    %v103 = vsel %vm68, %v58, 0
    %v106 = vsel %vm68, %v59, 0
    %v109 = vsel %vm68, %v60, 0
    %v112 = vsel %vm68, %v61, 0
    %v115 = vsel %vm68, %v62, 0
    %117 = vmatprep.subr.mxu0 0.0
    %118 = vmatpush1.msra.mxu0 %v63
    %119 = vmatprep.subr.mxu0 0.0
    %120 = vmatpush1.msra.mxu0 %v64
    %121 = vmatprep.subr.mxu0 0.0
    %122 = vmatpush1.msra.mxu0 %v65
    %123 = vmatprep.subr.mxu0 0.0
    %124 = vmatpush1.msra.mxu0 %v66
    %125 = vmatprep.subr.mxu0 0.0
    %126 = vmatpush1.msra.mxu0 %v67
    %127 = vmatprep.subr.mxu0 0.0
    %128 = vmatpush1.msra.mxu0 0.0
    %129 = vmatprep.subr.mxu0 0.0
    %130 = vmatpush1.msra.mxu0 0.0
    %131 = vmatprep.subr.mxu0 0.0
    %132 = vmatpush1.msra.mxu0 0.0
    %133 = vmatprep.subr.mxu0 0.0
    %134 = vmatpush1.msra.mxu0 0.0
    %135 = vmatprep.subr.mxu0 0.0
    %136 = vmatpush1.msra.mxu0 0.0
    %137 = vmatprep.subr.mxu0 0.0
    %138 = vmatpush1.msra.mxu0 0.0
    %139 = vmatprep.subr.mxu0 0.0
    %140 = vmatpush1.msra.mxu0 0.0
    %141 = vmatprep.subr.mxu0 0.0
    %142 = vmatpush1.msra.mxu0 0.0
    %143 = vmatprep.subr.mxu0 0.0
    %144 = vmatpush1.msra.mxu0 0.0
    %145 = vmatprep.subr.mxu0 0.0
    %146 = vmatpush1.msra.mxu0 0.0
    %147 = vmatprep.subr.mxu0 0.0
    %148 = vmatpush1.msra.mxu0 0.0
    %149 = vmatprep.subr.mxu0 0.0
    %150 = vmatpush1.msra.mxu0 0.0
    %151 = vmatprep.subr.mxu0 0.0
    %152 = vmatpush1.msra.mxu0 0.0
    %153 = vmatprep.subr.mxu0 0.0
    %154 = vmatpush1.msra.mxu0 0.0
    %155 = vmatprep.subr.mxu0 0.0
    %156 = vmatpush1.msra.mxu0 0.0
    %157 = vmatprep.subr.mxu0 0.0
    %158 = vmatpush1.msra.mxu0 0.0
    %159 = vmatprep.subr.mxu0 0.0
    %160 = vmatpush1.msra.mxu0 0.0
    %161 = vmatprep.subr.mxu0 0.0
    %162 = vmatpush1.msra.mxu0 0.0
    %163 = vmatprep.subr.mxu0 0.0
    %164 = vmatpush1.msra.mxu0 0.0
    %165 = vmatprep.subr.mxu0 0.0
    %166 = vmatpush1.msra.mxu0 0.0
    %167 = vmatprep.subr.mxu0 0.0
    %168 = vmatpush1.msra.mxu0 0.0
    %169 = vmatprep.subr.mxu0 0.0
    %170 = vmatpush1.msra.mxu0 0.0
    %171 = vmatprep.subr.mxu0 0.0
    %172 = vmatpush1.msra.mxu0 0.0
    %173 = vmatprep.subr.mxu0 0.0
    %174 = vmatpush1.msra.mxu0 0.0
    %175 = vmatprep.subr.mxu0 0.0
    %176 = vmatpush1.msra.mxu0 0.0
    %177 = vmatprep.subr.mxu0 0.0
    %178 = vmatpush1.msra.mxu0 0.0
    %179 = vmatprep.subr.mxu0 0.0
    %180 = vmatpush1.msra.mxu0 0.0
    %181 = vmatprep.mubr.f32.mxu0 0.0
    %182 = vmatmul.mubr.f32.gmra.mrb[0].mxu0 %v70
    %v183 = vpop.f32.mrb[0].mxu0
    %v184 = vadd.f32 0.0, %v183
    %v185 = vpop.f32.mrb[0].mxu0
    %186 = vmatprep.mubr.f32.mxu0 0.0
    %187 = vmatmul.mubr.f32.gmra.mrb[0].mxu0 %v73
    %v188 = vpop.f32.mrb[0].mxu0
    %v189 = vadd.f32 0.0, %v188
    %v190 = vpop.f32.mrb[0].mxu0
    %191 = vmatprep.mubr.f32.mxu0 0.0
    %192 = vmatmul.mubr.f32.gmra.mrb[0].mxu0 %v76
    %v193 = vpop.f32.mrb[0].mxu0
    %v194 = vadd.f32 0.0, %v193
    %v195 = vpop.f32.mrb[0].mxu0
    %196 = vmatprep.mubr.f32.mxu0 0.0
    %197 = vmatmul.mubr.f32.gmra.mrb[0].mxu0 %v79
    %v198 = vpop.f32.mrb[0].mxu0
    %v199 = vadd.f32 0.0, %v198
    %v200 = vpop.f32.mrb[0].mxu0
    %201 = vmatprep.mubr.f32.mxu0 0.0
    %202 = vmatmul.mubr.f32.gmra.mrb[0].mxu0 %v82
    %v203 = vpop.f32.mrb[0].mxu0
    %v204 = vadd.f32 0.0, %v203
    %v205 = vpop.f32.mrb[0].mxu0
    %206 = vmatprep.mubr.f32.mxu0 0.0
    %207 = vmatmul.mubr.f32.gmra.mrb[0].mxu0 %v85
    %v208 = vpop.f32.mrb[0].mxu0
    %v209 = vadd.f32 0.0, %v208
    %v210 = vpop.f32.mrb[0].mxu0
    %211 = vmatprep.mubr.f32.mxu0 0.0
    %212 = vmatmul.mubr.f32.gmra.mrb[0].mxu0 %v88
    %v213 = vpop.f32.mrb[0].mxu0
    %v214 = vadd.f32 0.0, %v213
    %v215 = vpop.f32.mrb[0].mxu0
    %216 = vmatprep.mubr.f32.mxu0 0.0
    %217 = vmatmul.mubr.f32.gmra.mrb[0].mxu0 %v91
    %v218 = vpop.f32.mrb[0].mxu0
    %v219 = vadd.f32 0.0, %v218
    %v220 = vpop.f32.mrb[0].mxu0
    %221 = vmatprep.mubr.f32.mxu0 0.0
    %222 = vmatmul.mubr.f32.gmra.mrb[0].mxu0 %v94
    %v223 = vpop.f32.mrb[0].mxu0
    %v224 = vadd.f32 0.0, %v223
    %v225 = vpop.f32.mrb[0].mxu0
    %226 = vmatprep.mubr.f32.mxu0 0.0
    %227 = vmatmul.mubr.f32.gmra.mrb[0].mxu0 %v97
    %v228 = vpop.f32.mrb[0].mxu0
    %v229 = vadd.f32 0.0, %v228
    %v230 = vpop.f32.mrb[0].mxu0
    %231 = vmatprep.mubr.f32.mxu0 0.0
    %232 = vmatmul.mubr.f32.gmra.mrb[0].mxu0 %v100
    %v233 = vpop.f32.mrb[0].mxu0
    %v234 = vadd.f32 0.0, %v233
    %v235 = vpop.f32.mrb[0].mxu0
    %236 = vmatprep.mubr.f32.mxu0 0.0
    %237 = vmatmul.mubr.f32.gmra.mrb[0].mxu0 %v103
    %v238 = vpop.f32.mrb[0].mxu0
    %v239 = vadd.f32 0.0, %v238
    %v240 = vpop.f32.mrb[0].mxu0
    %241 = vmatprep.mubr.f32.mxu0 0.0
    %242 = vmatmul.mubr.f32.gmra.mrb[0].mxu0 %v106
    %v243 = vpop.f32.mrb[0].mxu0
    %v244 = vadd.f32 0.0, %v243
    %v245 = vpop.f32.mrb[0].mxu0
    %246 = vmatprep.mubr.f32.mxu0 0.0
    %247 = vmatmul.mubr.f32.gmra.mrb[0].mxu0 %v109
    %v248 = vpop.f32.mrb[0].mxu0
    %v249 = vadd.f32 0.0, %v248
    %v250 = vpop.f32.mrb[0].mxu0
    %251 = vmatprep.mubr.f32.mxu0 0.0
    %252 = vmatmul.mubr.f32.gmra.mrb[0].mxu0 %v112
    %v253 = vpop.f32.mrb[0].mxu0
    %v254 = vadd.f32 0.0, %v253
    %v255 = vpop.f32.mrb[0].mxu0
    %256 = vmatprep.mubr.f32.mxu0 0.0
    %257 = vmatmul.mubr.f32.gmra.mrb[0].mxu0 %v115
    %v258 = vpop.f32.mrb[0].mxu0
    %v259 = vadd.f32 0.0, %v258
    %v260 = vpop.f32.mrb[0].mxu0
    %261 = vdwg.mxu0
    %v262 = vadd.f32 %v184, %v189
    %v263 = vadd.f32 %v262, %v194
    %v264 = vadd.f32 %v263, %v199
    %v265 = vadd.f32 %v264, %v204
    %v266 = vadd.f32 %v265, %v209
    %v267 = vadd.f32 %v266, %v214
    %v268 = vadd.f32 %v267, %v219
    %v269 = vadd.f32 %v268, %v224
    %v270 = vadd.f32 %v269, %v229
    %v271 = vadd.f32 %v270, %v234
    %v272 = vadd.f32 %v271, %v239
    %v273 = vadd.f32 %v272, %v244
    %v274 = vadd.f32 %v273, %v249
    %v275 = vadd.f32 %v274, %v254
    %v276 = vadd.f32 %v275, %v259
    %v277 = vrot.slane %v276, 4
    %v278 = vadd.f32 %v276, %v277
    %v279 = vrot.slane %v278, 2
    %v280 = vadd.f32 %v278, %v279
    %v281 = vrot.slane %v280, 1
    %v282 = vadd.f32 %v280, %v281
    %v283 = vrcp.pop 128.0
    %v284 = vmul.f32 %v282, %v283
    %v285 = vmul.f32 %v184, %v184
    %v286 = vmul.f32 %v189, %v189
    %v287 = vmul.f32 %v194, %v194
    %v288 = vmul.f32 %v199, %v199
    %v289 = vmul.f32 %v204, %v204
    %v290 = vmul.f32 %v209, %v209
    %v291 = vmul.f32 %v214, %v214
    %v292 = vmul.f32 %v219, %v219
    %v293 = vmul.f32 %v224, %v224
    %v294 = vmul.f32 %v229, %v229
    %v295 = vmul.f32 %v234, %v234
    %v296 = vmul.f32 %v239, %v239
    %v297 = vmul.f32 %v244, %v244
    %v298 = vmul.f32 %v249, %v249
    %v299 = vmul.f32 %v254, %v254
    %v300 = vmul.f32 %v259, %v259
    %v301 = vadd.f32 %v285, %v286
    %v302 = vadd.f32 %v301, %v287
    %v303 = vadd.f32 %v302, %v288
    %v304 = vadd.f32 %v303, %v289
    %v305 = vadd.f32 %v304, %v290
    %v306 = vadd.f32 %v305, %v291
    %v307 = vadd.f32 %v306, %v292
    %v308 = vadd.f32 %v307, %v293
    %v309 = vadd.f32 %v308, %v294
    %v310 = vadd.f32 %v309, %v295
    %v311 = vadd.f32 %v310, %v296
    %v312 = vadd.f32 %v311, %v297
    %v313 = vadd.f32 %v312, %v298
    %v314 = vadd.f32 %v313, %v299
    %v315 = vadd.f32 %v314, %v300
    %v316 = vrot.slane %v315, 4
    %v317 = vadd.f32 %v315, %v316
    %v318 = vrot.slane %v317, 2
    %v319 = vadd.f32 %v317, %v318
    %v320 = vrot.slane %v319, 1
    %v321 = vadd.f32 %v319, %v320
    %v322 = vmul.f32 %v321, %v283
    %v323 = vmul.f32 %v284, %v284
    %v324 = vsub.f32 %v322, %v323
    %v325 = vmax.f32 %v324, 0.0
    %v326 = vsub.f32 %v184, %v284
    %v327 = vsub.f32 %v189, %v284
    %v328 = vsub.f32 %v194, %v284
    %v329 = vsub.f32 %v199, %v284
    %v330 = vsub.f32 %v204, %v284
    %v331 = vsub.f32 %v209, %v284
    %v332 = vsub.f32 %v214, %v284
    %v333 = vsub.f32 %v219, %v284
    %v334 = vsub.f32 %v224, %v284
    %v335 = vsub.f32 %v229, %v284
    %v336 = vsub.f32 %v234, %v284
    %v337 = vsub.f32 %v239, %v284
    %v338 = vsub.f32 %v244, %v284
    %v339 = vsub.f32 %v249, %v284
    %v340 = vsub.f32 %v254, %v284
    %v341 = vsub.f32 %v259, %v284
    %v342 = vadd.f32 %v325, 1e-05
    %v343 = vrsqrt.pop %v342
    %v344 = vmul.f32 %v326, %v343
    %v345 = vmul.f32 %v327, %v343
    %v346 = vmul.f32 %v328, %v343
    %v347 = vmul.f32 %v329, %v343
    %v348 = vmul.f32 %v330, %v343
    %v349 = vmul.f32 %v331, %v343
    %v350 = vmul.f32 %v332, %v343
    %v351 = vmul.f32 %v333, %v343
    %v352 = vmul.f32 %v334, %v343
    %v353 = vmul.f32 %v335, %v343
    %v354 = vmul.f32 %v336, %v343
    %v355 = vmul.f32 %v337, %v343
    %v356 = vmul.f32 %v338, %v343
    %v357 = vmul.f32 %v339, %v343
    %v358 = vmul.f32 %v340, %v343
    %v359 = vmul.f32 %v341, %v343
    %v360 = vld [vmem:[%s4] sm:$0x1]
    %v362 = vlaneseq
    %v363 = vshrl.u32 %v362, 7
    %v364 = vsub.s32 0, %v363
    %v365 = vrot.slane %v360, %v364
    %v367 = vmul.f32 %v344, %v365
    %v368 = vmul.f32 %v345, %v365
    %v369 = vmul.f32 %v346, %v365
    %v370 = vmul.f32 %v347, %v365
    %v371 = vmul.f32 %v348, %v365
    %v372 = vmul.f32 %v349, %v365
    %v373 = vmul.f32 %v350, %v365
    %v374 = vmul.f32 %v351, %v365
    %v375 = vmul.f32 %v352, %v365
    %v376 = vmul.f32 %v353, %v365
    %v377 = vmul.f32 %v354, %v365
    %v378 = vmul.f32 %v355, %v365
    %v379 = vmul.f32 %v356, %v365
    %v380 = vmul.f32 %v357, %v365
    %v381 = vmul.f32 %v358, %v365
    %v382 = vmul.f32 %v359, %v365
    %v383 = vld [vmem:[%s5] sm:$0x1]
    %v385 = vlaneseq
    %v386 = vshrl.u32 %v385, 7
    %v387 = vsub.s32 0, %v386
    %v388 = vrot.slane %v383, %v387
    %v390 = vadd.f32 %v367, %v388
    %v391 = vadd.f32 %v368, %v388
    %v392 = vadd.f32 %v369, %v388
    %v393 = vadd.f32 %v370, %v388
    %v394 = vadd.f32 %v371, %v388
    %v395 = vadd.f32 %v372, %v388
    %v396 = vadd.f32 %v373, %v388
    %v397 = vadd.f32 %v374, %v388
    %v398 = vadd.f32 %v375, %v388
    %v399 = vadd.f32 %v376, %v388
    %v400 = vadd.f32 %v377, %v388
    %v401 = vadd.f32 %v378, %v388
    %v402 = vadd.f32 %v379, %v388
    %v403 = vadd.f32 %v380, %v388
    %v404 = vadd.f32 %v381, %v388
    %v405 = vadd.f32 %v382, %v388
    %v406 = vmax.f32 %v390, 0.0
    %v407 = vmax.f32 %v391, 0.0
    %v408 = vmax.f32 %v392, 0.0
    %v409 = vmax.f32 %v393, 0.0
    %v410 = vmax.f32 %v394, 0.0
    %v411 = vmax.f32 %v395, 0.0
    %v412 = vmax.f32 %v396, 0.0
    %v413 = vmax.f32 %v397, 0.0
    %v414 = vmax.f32 %v398, 0.0
    %v415 = vmax.f32 %v399, 0.0
    %v416 = vmax.f32 %v400, 0.0
    %v417 = vmax.f32 %v401, 0.0
    %v418 = vmax.f32 %v402, 0.0
    %v419 = vmax.f32 %v403, 0.0
    %v420 = vmax.f32 %v404, 0.0
    %v421 = vmax.f32 %v405, 0.0
    %v422 = vld [vmem:[%s2] sm:$0xff]
    %v423 = vld [vmem:[%s2 + $0x8] sm:$0xff]
    %v424 = vld [vmem:[%s2 + $0x10] sm:$0xff]
    %v425 = vld [vmem:[%s2 + $0x18] sm:$0xff]
    %v426 = vld [vmem:[%s2 + $0x20] sm:$0xff]
    %427 = vmatprep.subr.mxu0 0.0
    %428 = vmatpush1.msra.mxu0 %v422
    %429 = vmatprep.subr.mxu0 0.0
    %430 = vmatpush1.msra.mxu0 %v423
    %431 = vmatprep.subr.mxu0 0.0
    %432 = vmatpush1.msra.mxu0 %v424
    %433 = vmatprep.subr.mxu0 0.0
    %434 = vmatpush1.msra.mxu0 %v425
    %435 = vmatprep.subr.mxu0 0.0
    %436 = vmatpush1.msra.mxu0 %v426
    %437 = vmatprep.subr.mxu0 0.0
    %438 = vmatpush1.msra.mxu0 0.0
    %439 = vmatprep.subr.mxu0 0.0
    %440 = vmatpush1.msra.mxu0 0.0
    %441 = vmatprep.subr.mxu0 0.0
    %442 = vmatpush1.msra.mxu0 0.0
    %443 = vmatprep.subr.mxu0 0.0
    %444 = vmatpush1.msra.mxu0 0.0
    %445 = vmatprep.subr.mxu0 0.0
    %446 = vmatpush1.msra.mxu0 0.0
    %447 = vmatprep.subr.mxu0 0.0
    %448 = vmatpush1.msra.mxu0 0.0
    %449 = vmatprep.subr.mxu0 0.0
    %450 = vmatpush1.msra.mxu0 0.0
    %451 = vmatprep.subr.mxu0 0.0
    %452 = vmatpush1.msra.mxu0 0.0
    %453 = vmatprep.subr.mxu0 0.0
    %454 = vmatpush1.msra.mxu0 0.0
    %455 = vmatprep.subr.mxu0 0.0
    %456 = vmatpush1.msra.mxu0 0.0
    %457 = vmatprep.subr.mxu0 0.0
    %458 = vmatpush1.msra.mxu0 0.0
    %459 = vmatprep.subr.mxu0 0.0
    %460 = vmatpush1.msra.mxu0 0.0
    %461 = vmatprep.subr.mxu0 0.0
    %462 = vmatpush1.msra.mxu0 0.0
    %463 = vmatprep.subr.mxu0 0.0
    %464 = vmatpush1.msra.mxu0 0.0
    %465 = vmatprep.subr.mxu0 0.0
    %466 = vmatpush1.msra.mxu0 0.0
    %467 = vmatprep.subr.mxu0 0.0
    %468 = vmatpush1.msra.mxu0 0.0
    %469 = vmatprep.subr.mxu0 0.0
    %470 = vmatpush1.msra.mxu0 0.0
    %471 = vmatprep.subr.mxu0 0.0
    %472 = vmatpush1.msra.mxu0 0.0
    %473 = vmatprep.subr.mxu0 0.0
    %474 = vmatpush1.msra.mxu0 0.0
    %475 = vmatprep.subr.mxu0 0.0
    %476 = vmatpush1.msra.mxu0 0.0
    %477 = vmatprep.subr.mxu0 0.0
    %478 = vmatpush1.msra.mxu0 0.0
    %479 = vmatprep.subr.mxu0 0.0
    %480 = vmatpush1.msra.mxu0 0.0
    %481 = vmatprep.subr.mxu0 0.0
    %482 = vmatpush1.msra.mxu0 0.0
    %483 = vmatprep.subr.mxu0 0.0
    %484 = vmatpush1.msra.mxu0 0.0
    %485 = vmatprep.subr.mxu0 0.0
    %486 = vmatpush1.msra.mxu0 0.0
    %487 = vmatprep.subr.mxu0 0.0
    %488 = vmatpush1.msra.mxu0 0.0
    %489 = vmatprep.subr.mxu0 0.0
    %490 = vmatpush1.msra.mxu0 0.0
    %491 = vmatprep.mubr.f32.mxu0 0.0
    %492 = vmatmul.mubr.f32.gmra.mrb[0].mxu0 %v70
    %v493 = vpop.f32.mrb[0].mxu0
    %v494 = vadd.f32 0.0, %v493
    %v495 = vpop.f32.mrb[0].mxu0
    %496 = vmatprep.mubr.f32.mxu0 0.0
    %497 = vmatmul.mubr.f32.gmra.mrb[0].mxu0 %v73
    %v498 = vpop.f32.mrb[0].mxu0
    %v499 = vadd.f32 0.0, %v498
    %v500 = vpop.f32.mrb[0].mxu0
    %501 = vmatprep.mubr.f32.mxu0 0.0
    %502 = vmatmul.mubr.f32.gmra.mrb[0].mxu0 %v76
    %v503 = vpop.f32.mrb[0].mxu0
    %v504 = vadd.f32 0.0, %v503
    %v505 = vpop.f32.mrb[0].mxu0
    %506 = vmatprep.mubr.f32.mxu0 0.0
    %507 = vmatmul.mubr.f32.gmra.mrb[0].mxu0 %v79
    %v508 = vpop.f32.mrb[0].mxu0
    %v509 = vadd.f32 0.0, %v508
    %v510 = vpop.f32.mrb[0].mxu0
    %511 = vmatprep.mubr.f32.mxu0 0.0
    %512 = vmatmul.mubr.f32.gmra.mrb[0].mxu0 %v82
    %v513 = vpop.f32.mrb[0].mxu0
    %v514 = vadd.f32 0.0, %v513
    %v515 = vpop.f32.mrb[0].mxu0
    %516 = vmatprep.mubr.f32.mxu0 0.0
    %517 = vmatmul.mubr.f32.gmra.mrb[0].mxu0 %v85
    %v518 = vpop.f32.mrb[0].mxu0
    %v519 = vadd.f32 0.0, %v518
    %v520 = vpop.f32.mrb[0].mxu0
    %521 = vmatprep.mubr.f32.mxu0 0.0
    %522 = vmatmul.mubr.f32.gmra.mrb[0].mxu0 %v88
    %v523 = vpop.f32.mrb[0].mxu0
    %v524 = vadd.f32 0.0, %v523
    %v525 = vpop.f32.mrb[0].mxu0
    %526 = vmatprep.mubr.f32.mxu0 0.0
    %527 = vmatmul.mubr.f32.gmra.mrb[0].mxu0 %v91
    %v528 = vpop.f32.mrb[0].mxu0
    %v529 = vadd.f32 0.0, %v528
    %v530 = vpop.f32.mrb[0].mxu0
    %531 = vmatprep.mubr.f32.mxu0 0.0
    %532 = vmatmul.mubr.f32.gmra.mrb[0].mxu0 %v94
    %v533 = vpop.f32.mrb[0].mxu0
    %v534 = vadd.f32 0.0, %v533
    %v535 = vpop.f32.mrb[0].mxu0
    %536 = vmatprep.mubr.f32.mxu0 0.0
    %537 = vmatmul.mubr.f32.gmra.mrb[0].mxu0 %v97
    %v538 = vpop.f32.mrb[0].mxu0
    %v539 = vadd.f32 0.0, %v538
    %v540 = vpop.f32.mrb[0].mxu0
    %541 = vmatprep.mubr.f32.mxu0 0.0
    %542 = vmatmul.mubr.f32.gmra.mrb[0].mxu0 %v100
    %v543 = vpop.f32.mrb[0].mxu0
    %v544 = vadd.f32 0.0, %v543
    %v545 = vpop.f32.mrb[0].mxu0
    %546 = vmatprep.mubr.f32.mxu0 0.0
    %547 = vmatmul.mubr.f32.gmra.mrb[0].mxu0 %v103
    %v548 = vpop.f32.mrb[0].mxu0
    %v549 = vadd.f32 0.0, %v548
    %v550 = vpop.f32.mrb[0].mxu0
    %551 = vmatprep.mubr.f32.mxu0 0.0
    %552 = vmatmul.mubr.f32.gmra.mrb[0].mxu0 %v106
    %v553 = vpop.f32.mrb[0].mxu0
    %v554 = vadd.f32 0.0, %v553
    %v555 = vpop.f32.mrb[0].mxu0
    %556 = vmatprep.mubr.f32.mxu0 0.0
    %557 = vmatmul.mubr.f32.gmra.mrb[0].mxu0 %v109
    %v558 = vpop.f32.mrb[0].mxu0
    %v559 = vadd.f32 0.0, %v558
    %v560 = vpop.f32.mrb[0].mxu0
    %561 = vmatprep.mubr.f32.mxu0 0.0
    %562 = vmatmul.mubr.f32.gmra.mrb[0].mxu0 %v112
    %v563 = vpop.f32.mrb[0].mxu0
    %v564 = vadd.f32 0.0, %v563
    %v565 = vpop.f32.mrb[0].mxu0
    %566 = vmatprep.mubr.f32.mxu0 0.0
    %567 = vmatmul.mubr.f32.gmra.mrb[0].mxu0 %v115
    %v568 = vpop.f32.mrb[0].mxu0
    %v569 = vadd.f32 0.0, %v568
    %v570 = vpop.f32.mrb[0].mxu0
    %571 = vdwg.mxu0
    %v572 = vadd.f32 %v494, %v499
    %v573 = vadd.f32 %v572, %v504
    %v574 = vadd.f32 %v573, %v509
    %v575 = vadd.f32 %v574, %v514
    %v576 = vadd.f32 %v575, %v519
    %v577 = vadd.f32 %v576, %v524
    %v578 = vadd.f32 %v577, %v529
    %v579 = vadd.f32 %v578, %v534
    %v580 = vadd.f32 %v579, %v539
    %v581 = vadd.f32 %v580, %v544
    %v582 = vadd.f32 %v581, %v549
    %v583 = vadd.f32 %v582, %v554
    %v584 = vadd.f32 %v583, %v559
    %v585 = vadd.f32 %v584, %v564
    %v586 = vadd.f32 %v585, %v569
    %v587 = vrot.slane %v586, 4
    %v588 = vadd.f32 %v586, %v587
    %v589 = vrot.slane %v588, 2
    %v590 = vadd.f32 %v588, %v589
    %v591 = vrot.slane %v590, 1
    %v592 = vadd.f32 %v590, %v591
    %v593 = vmul.f32 %v592, %v283
    %v594 = vmul.f32 %v494, %v494
    %v595 = vmul.f32 %v499, %v499
    %v596 = vmul.f32 %v504, %v504
    %v597 = vmul.f32 %v509, %v509
    %v598 = vmul.f32 %v514, %v514
    %v599 = vmul.f32 %v519, %v519
    %v600 = vmul.f32 %v524, %v524
    %v601 = vmul.f32 %v529, %v529
    %v602 = vmul.f32 %v534, %v534
    %v603 = vmul.f32 %v539, %v539
    %v604 = vmul.f32 %v544, %v544
    %v605 = vmul.f32 %v549, %v549
    %v606 = vmul.f32 %v554, %v554
    %v607 = vmul.f32 %v559, %v559
    %v608 = vmul.f32 %v564, %v564
    %v609 = vmul.f32 %v569, %v569
    %v610 = vadd.f32 %v594, %v595
    %v611 = vadd.f32 %v610, %v596
    %v612 = vadd.f32 %v611, %v597
    %v613 = vadd.f32 %v612, %v598
    %v614 = vadd.f32 %v613, %v599
    %v615 = vadd.f32 %v614, %v600
    %v616 = vadd.f32 %v615, %v601
    %v617 = vadd.f32 %v616, %v602
    %v618 = vadd.f32 %v617, %v603
    %v619 = vadd.f32 %v618, %v604
    %v620 = vadd.f32 %v619, %v605
    %v621 = vadd.f32 %v620, %v606
    %v622 = vadd.f32 %v621, %v607
    %v623 = vadd.f32 %v622, %v608
    %v624 = vadd.f32 %v623, %v609
    %v625 = vrot.slane %v624, 4
    %v626 = vadd.f32 %v624, %v625
    %v627 = vrot.slane %v626, 2
    %v628 = vadd.f32 %v626, %v627
    %v629 = vrot.slane %v628, 1
    %v630 = vadd.f32 %v628, %v629
    %v631 = vmul.f32 %v630, %v283
    %v632 = vmul.f32 %v593, %v593
    %v633 = vsub.f32 %v631, %v632
    %v634 = vmax.f32 %v633, 0.0
    %v635 = vsub.f32 %v494, %v593
    %v636 = vsub.f32 %v499, %v593
    %v637 = vsub.f32 %v504, %v593
    %v638 = vsub.f32 %v509, %v593
    %v639 = vsub.f32 %v514, %v593
    %v640 = vsub.f32 %v519, %v593
    %v641 = vsub.f32 %v524, %v593
    %v642 = vsub.f32 %v529, %v593
    %v643 = vsub.f32 %v534, %v593
    %v644 = vsub.f32 %v539, %v593
    %v645 = vsub.f32 %v544, %v593
    %v646 = vsub.f32 %v549, %v593
    %v647 = vsub.f32 %v554, %v593
    %v648 = vsub.f32 %v559, %v593
    %v649 = vsub.f32 %v564, %v593
    %v650 = vsub.f32 %v569, %v593
    %v651 = vadd.f32 %v634, 1e-05
    %v652 = vrsqrt.pop %v651
    %v653 = vmul.f32 %v635, %v652
    %v654 = vmul.f32 %v636, %v652
    %v655 = vmul.f32 %v637, %v652
    %v656 = vmul.f32 %v638, %v652
    %v657 = vmul.f32 %v639, %v652
    %v658 = vmul.f32 %v640, %v652
    %v659 = vmul.f32 %v641, %v652
    %v660 = vmul.f32 %v642, %v652
    %v661 = vmul.f32 %v643, %v652
    %v662 = vmul.f32 %v644, %v652
    %v663 = vmul.f32 %v645, %v652
    %v664 = vmul.f32 %v646, %v652
    %v665 = vmul.f32 %v647, %v652
    %v666 = vmul.f32 %v648, %v652
    %v667 = vmul.f32 %v649, %v652
    %v668 = vmul.f32 %v650, %v652
    %v669 = vld [vmem:[%s6] sm:$0x1]
    %v671 = vlaneseq
    %v672 = vshrl.u32 %v671, 7
    %v673 = vsub.s32 0, %v672
    %v674 = vrot.slane %v669, %v673
    %v676 = vmul.f32 %v653, %v674
    %v677 = vmul.f32 %v654, %v674
    %v678 = vmul.f32 %v655, %v674
    %v679 = vmul.f32 %v656, %v674
    %v680 = vmul.f32 %v657, %v674
    %v681 = vmul.f32 %v658, %v674
    %v682 = vmul.f32 %v659, %v674
    %v683 = vmul.f32 %v660, %v674
    %v684 = vmul.f32 %v661, %v674
    %v685 = vmul.f32 %v662, %v674
    %v686 = vmul.f32 %v663, %v674
    %v687 = vmul.f32 %v664, %v674
    %v688 = vmul.f32 %v665, %v674
    %v689 = vmul.f32 %v666, %v674
    %v690 = vmul.f32 %v667, %v674
    %v691 = vmul.f32 %v668, %v674
    %v692 = vld [vmem:[%s7] sm:$0x1]
    %v694 = vlaneseq
    %v695 = vshrl.u32 %v694, 7
    %v696 = vsub.s32 0, %v695
    %v697 = vrot.slane %v692, %v696
    %v699 = vadd.f32 %v676, %v697
    %v700 = vadd.f32 %v677, %v697
    %v701 = vadd.f32 %v678, %v697
    %v702 = vadd.f32 %v679, %v697
    %v703 = vadd.f32 %v680, %v697
    %v704 = vadd.f32 %v681, %v697
    %v705 = vadd.f32 %v682, %v697
    %v706 = vadd.f32 %v683, %v697
    %v707 = vadd.f32 %v684, %v697
    %v708 = vadd.f32 %v685, %v697
    %v709 = vadd.f32 %v686, %v697
    %v710 = vadd.f32 %v687, %v697
    %v711 = vadd.f32 %v688, %v697
    %v712 = vadd.f32 %v689, %v697
    %v713 = vadd.f32 %v690, %v697
    %v714 = vadd.f32 %v691, %v697
    %715 = vst [vmem:[#allocation2] sm:$0xff] 0.0
    %716 = vst [vmem:[#allocation2 + $0x8] sm:$0x3] 0.0
    %717 = vst [vmem:[#allocation2 + $0x10] sm:$0xff] 0.0
    %718 = vst [vmem:[#allocation2 + $0x18] sm:$0x3] 0.0
    %719 = vst [vmem:[#allocation2 + $0x20] sm:$0xff] 0.0
    %720 = vst [vmem:[#allocation2 + $0x28] sm:$0x3] 0.0
    %721 = vst [vmem:[#allocation2 + $0x30] sm:$0xff] 0.0
    %722 = vst [vmem:[#allocation2 + $0x38] sm:$0x3] 0.0
    %723 = vst [vmem:[#allocation2 + $0x40] sm:$0xff] 0.0
    %724 = vst [vmem:[#allocation2 + $0x48] sm:$0x3] 0.0
    %725 = vst [vmem:[#allocation2 + $0x50] sm:$0xff] 0.0
    %726 = vst [vmem:[#allocation2 + $0x58] sm:$0x3] 0.0
    %727 = vst [vmem:[#allocation2 + $0x60] sm:$0xff] 0.0
    %728 = vst [vmem:[#allocation2 + $0x68] sm:$0x3] 0.0
    %729 = vst [vmem:[#allocation2 + $0x70] sm:$0xff] 0.0
    %730 = vst [vmem:[#allocation2 + $0x78] sm:$0x3] 0.0
    %731 = vst [vmem:[#allocation2 + $0x80] sm:$0xff] 0.0
    %732 = vst [vmem:[#allocation2 + $0x88] sm:$0x3] 0.0
    %733 = vst [vmem:[#allocation2 + $0x90] sm:$0xff] 0.0
    %734 = vst [vmem:[#allocation2 + $0x98] sm:$0x3] 0.0
    %735 = vst [vmem:[#allocation2 + $0xa0] sm:$0xff] 0.0
    %736 = vst [vmem:[#allocation2 + $0xa8] sm:$0x3] 0.0
    %737 = vst [vmem:[#allocation2 + $0xb0] sm:$0xff] 0.0
    %738 = vst [vmem:[#allocation2 + $0xb8] sm:$0x3] 0.0
    %739 = vst [vmem:[#allocation2 + $0xc0] sm:$0xff] 0.0
    %740 = vst [vmem:[#allocation2 + $0xc8] sm:$0x3] 0.0
    %741 = vst [vmem:[#allocation2 + $0xd0] sm:$0xff] 0.0
    %742 = vst [vmem:[#allocation2 + $0xd8] sm:$0x3] 0.0
    %743 = vst [vmem:[#allocation2 + $0xe0] sm:$0xff] 0.0
    %744 = vst [vmem:[#allocation2 + $0xe8] sm:$0x3] 0.0
    %745 = vst [vmem:[#allocation2 + $0xf0] sm:$0xff] 0.0
    %746 = vst [vmem:[#allocation2 + $0xf8] sm:$0x3] 0.0
    %747 = vst [vmem:[#allocation2 + $0x100] sm:$0xff] 0.0
    %748 = vst [vmem:[#allocation2 + $0x108] sm:$0x3] 0.0
    %749 = vst [vmem:[#allocation2 + $0x110] sm:$0xff] 0.0
    %750 = vst [vmem:[#allocation2 + $0x118] sm:$0x3] 0.0
    %751 = vst [vmem:[#allocation2 + $0x120] sm:$0xff] 0.0
    %752 = vst [vmem:[#allocation2 + $0x128] sm:$0x3] 0.0
    %753 = vst [vmem:[#allocation2 + $0x130] sm:$0xff] 0.0
    %754 = vst [vmem:[#allocation2 + $0x138] sm:$0x3] 0.0
    %s755 = scalar_lea.vmem [#allocation2], 16
    %756 = vst [vmem:[%s755 + $0x1] sm:$0xff] %v406
    %757 = vst [vmem:[%s755 + $0x11] sm:$0xff] %v407
    %758 = vst [vmem:[%s755 + $0x21] sm:$0xff] %v408
    %759 = vst [vmem:[%s755 + $0x31] sm:$0xff] %v409
    %760 = vst [vmem:[%s755 + $0x41] sm:$0xff] %v410
    %761 = vst [vmem:[%s755 + $0x51] sm:$0xff] %v411
    %762 = vst [vmem:[%s755 + $0x61] sm:$0xff] %v412
    %763 = vst [vmem:[%s755 + $0x71] sm:$0xff] %v413
    %764 = vst [vmem:[%s755 + $0xa1] sm:$0xff] %v414
    %765 = vst [vmem:[%s755 + $0xb1] sm:$0xff] %v415
    %766 = vst [vmem:[%s755 + $0xc1] sm:$0xff] %v416
    %767 = vst [vmem:[%s755 + $0xd1] sm:$0xff] %v417
    %768 = vst [vmem:[%s755 + $0xe1] sm:$0xff] %v418
    %769 = vst [vmem:[%s755 + $0xf1] sm:$0xff] %v419
    %770 = vst [vmem:[%s755 + $0x101] sm:$0xff] %v420
    %771 = vst [vmem:[%s755 + $0x111] sm:$0xff] %v421
    %v772 = vld [vmem:[%s8] sm:$0x1]
    %v774 = vlaneseq
    %v775 = vshrl.u32 %v774, 7
    %v776 = vsub.s32 0, %v775
    %v777 = vrot.slane %v772, %v776
    %v779 = vadd.f32 %v699, %v777
    %v780 = vadd.f32 %v700, %v777
    %v781 = vadd.f32 %v701, %v777
    %v782 = vadd.f32 %v702, %v777
    %v783 = vadd.f32 %v703, %v777
    %v784 = vadd.f32 %v704, %v777
    %v785 = vadd.f32 %v705, %v777
    %v786 = vadd.f32 %v706, %v777
    %v787 = vadd.f32 %v707, %v777
    %v788 = vadd.f32 %v708, %v777
    %v789 = vadd.f32 %v709, %v777
    %v790 = vadd.f32 %v710, %v777
    %v791 = vadd.f32 %v711, %v777
    %v792 = vadd.f32 %v712, %v777
    %v793 = vadd.f32 %v713, %v777
    %v794 = vadd.f32 %v714, %v777
    %v795 = vld [vmem:[#allocation2] sm:$0xff]
    %v796 = vld [vmem:[#allocation2 + $0x10] sm:$0xff]
    %v797 = vld [vmem:[#allocation2 + $0x20] sm:$0xff]
    %v798 = vld [vmem:[#allocation2 + $0x30] sm:$0xff]
    %v799 = vld [vmem:[#allocation2 + $0x40] sm:$0xff]
    %v800 = vld [vmem:[#allocation2 + $0x50] sm:$0xff]
    %v801 = vld [vmem:[#allocation2 + $0x60] sm:$0xff]
    %v802 = vld [vmem:[#allocation2 + $0x70] sm:$0xff]
    %v803 = vld [vmem:[#allocation2 + $0xa0] sm:$0xff]
    %v804 = vld [vmem:[#allocation2 + $0xb0] sm:$0xff]
    %v805 = vld [vmem:[#allocation2 + $0xc0] sm:$0xff]
    %v806 = vld [vmem:[#allocation2 + $0xd0] sm:$0xff]
    %v807 = vld [vmem:[#allocation2 + $0xe0] sm:$0xff]
    %v808 = vld [vmem:[#allocation2 + $0xf0] sm:$0xff]
    %v809 = vld [vmem:[#allocation2 + $0x100] sm:$0xff]
    %v810 = vld [vmem:[#allocation2 + $0x110] sm:$0xff]
    %v811 = vld [vmem:[#allocation3] sm:$0xff]
    %v812 = vld [vmem:[#allocation3 + $0x8] sm:$0xff]
    %v813 = vld [vmem:[#allocation3 + $0x10] sm:$0xff]
    %v814 = vld [vmem:[#allocation3 + $0x18] sm:$0xff]
    %v815 = vld [vmem:[#allocation3 + $0x20] sm:$0xff]
    %v816 = vld [vmem:[#allocation3 + $0x28] sm:$0xff]
    %v817 = vld [vmem:[#allocation3 + $0x30] sm:$0xff]
    %v818 = vld [vmem:[#allocation3 + $0x38] sm:$0xff]
    %v819 = vld [vmem:[#allocation3 + $0x40] sm:$0xff]
    %v820 = vld [vmem:[#allocation3 + $0x48] sm:$0xff]
    %v821 = vld [vmem:[#allocation3 + $0x50] sm:$0xff]
    %v822 = vld [vmem:[#allocation3 + $0x58] sm:$0xff]
    %v823 = vld [vmem:[#allocation3 + $0x60] sm:$0xff]
    %v824 = vld [vmem:[#allocation3 + $0x68] sm:$0xff]
    %v825 = vld [vmem:[#allocation3 + $0x70] sm:$0xff]
    %v826 = vld [vmem:[#allocation3 + $0x78] sm:$0xff]
    %827 = vmatprep.subr.mxu0 0.0
    %828 = vmatpush1.msra.mxu0 %v811
    %829 = vmatprep.subr.mxu0 0.0
    %830 = vmatpush1.msra.mxu0 %v812
    %831 = vmatprep.subr.mxu0 0.0
    %832 = vmatpush1.msra.mxu0 %v813
    %833 = vmatprep.subr.mxu0 0.0
    %834 = vmatpush1.msra.mxu0 %v814
    %835 = vmatprep.subr.mxu0 0.0
    %836 = vmatpush1.msra.mxu0 %v815
    %837 = vmatprep.subr.mxu0 0.0
    %838 = vmatpush1.msra.mxu0 %v816
    %839 = vmatprep.subr.mxu0 0.0
    %840 = vmatpush1.msra.mxu0 %v817
    %841 = vmatprep.subr.mxu0 0.0
    %842 = vmatpush1.msra.mxu0 %v818
    %843 = vmatprep.subr.mxu0 0.0
    %844 = vmatpush1.msra.mxu0 %v819
    %845 = vmatprep.subr.mxu0 0.0
    %846 = vmatpush1.msra.mxu0 %v820
    %847 = vmatprep.subr.mxu0 0.0
    %848 = vmatpush1.msra.mxu0 %v821
    %849 = vmatprep.subr.mxu0 0.0
    %850 = vmatpush1.msra.mxu0 %v822
    %851 = vmatprep.subr.mxu0 0.0
    %852 = vmatpush1.msra.mxu0 %v823
    %853 = vmatprep.subr.mxu0 0.0
    %854 = vmatpush1.msra.mxu0 %v824
    %855 = vmatprep.subr.mxu0 0.0
    %856 = vmatpush1.msra.mxu0 %v825
    %857 = vmatprep.subr.mxu0 0.0
    %858 = vmatpush1.msra.mxu0 %v826
    %859 = vmatprep.subr.mxu0 0.0
    %860 = vmatpush1.msra.mxu0 0.0
    %861 = vmatprep.subr.mxu0 0.0
    %862 = vmatpush1.msra.mxu0 0.0
    %863 = vmatprep.subr.mxu0 0.0
    %864 = vmatpush1.msra.mxu0 0.0
    %865 = vmatprep.subr.mxu0 0.0
    %866 = vmatpush1.msra.mxu0 0.0
    %867 = vmatprep.subr.mxu0 0.0
    %868 = vmatpush1.msra.mxu0 0.0
    %869 = vmatprep.subr.mxu0 0.0
    %870 = vmatpush1.msra.mxu0 0.0
    %871 = vmatprep.subr.mxu0 0.0
    %872 = vmatpush1.msra.mxu0 0.0
    %873 = vmatprep.subr.mxu0 0.0
    %874 = vmatpush1.msra.mxu0 0.0
    %875 = vmatprep.subr.mxu0 0.0
    %876 = vmatpush1.msra.mxu0 0.0
    %877 = vmatprep.subr.mxu0 0.0
    %878 = vmatpush1.msra.mxu0 0.0
    %879 = vmatprep.subr.mxu0 0.0
    %880 = vmatpush1.msra.mxu0 0.0
    %881 = vmatprep.subr.mxu0 0.0
    %882 = vmatpush1.msra.mxu0 0.0
    %883 = vmatprep.subr.mxu0 0.0
    %884 = vmatpush1.msra.mxu0 0.0
    %885 = vmatprep.subr.mxu0 0.0
    %886 = vmatpush1.msra.mxu0 0.0
    %887 = vmatprep.subr.mxu0 0.0
    %888 = vmatpush1.msra.mxu0 0.0
    %889 = vmatprep.subr.mxu0 0.0
    %890 = vmatpush1.msra.mxu0 0.0
    %891 = vmatprep.mubr.f32.mxu0 0.0
    %892 = vmatmul.mubr.f32.gmra.mrb[0].mxu0 %v795
    %v893 = vpop.f32.mrb[0].mxu0
    %v894 = vadd.f32 0.0, %v893
    %v895 = vpop.f32.mrb[0].mxu0
    %896 = vmatprep.mubr.f32.mxu0 0.0
    %897 = vmatmul.mubr.f32.gmra.mrb[0].mxu0 %v796
    %v898 = vpop.f32.mrb[0].mxu0
    %v899 = vadd.f32 0.0, %v898
    %v900 = vpop.f32.mrb[0].mxu0
    %901 = vmatprep.mubr.f32.mxu0 0.0
    %902 = vmatmul.mubr.f32.gmra.mrb[0].mxu0 %v797
    %v903 = vpop.f32.mrb[0].mxu0
    %v904 = vadd.f32 0.0, %v903
    %v905 = vpop.f32.mrb[0].mxu0
    %906 = vmatprep.mubr.f32.mxu0 0.0
    %907 = vmatmul.mubr.f32.gmra.mrb[0].mxu0 %v798
    %v908 = vpop.f32.mrb[0].mxu0
    %v909 = vadd.f32 0.0, %v908
    %v910 = vpop.f32.mrb[0].mxu0
    %911 = vmatprep.mubr.f32.mxu0 0.0
    %912 = vmatmul.mubr.f32.gmra.mrb[0].mxu0 %v799
    %v913 = vpop.f32.mrb[0].mxu0
    %v914 = vadd.f32 0.0, %v913
    %v915 = vpop.f32.mrb[0].mxu0
    %916 = vmatprep.mubr.f32.mxu0 0.0
    %917 = vmatmul.mubr.f32.gmra.mrb[0].mxu0 %v800
    %v918 = vpop.f32.mrb[0].mxu0
    %v919 = vadd.f32 0.0, %v918
    %v920 = vpop.f32.mrb[0].mxu0
    %921 = vmatprep.mubr.f32.mxu0 0.0
    %922 = vmatmul.mubr.f32.gmra.mrb[0].mxu0 %v801
    %v923 = vpop.f32.mrb[0].mxu0
    %v924 = vadd.f32 0.0, %v923
    %v925 = vpop.f32.mrb[0].mxu0
    %926 = vmatprep.mubr.f32.mxu0 0.0
    %927 = vmatmul.mubr.f32.gmra.mrb[0].mxu0 %v802
    %v928 = vpop.f32.mrb[0].mxu0
    %v929 = vadd.f32 0.0, %v928
    %v930 = vpop.f32.mrb[0].mxu0
    %931 = vmatprep.mubr.f32.mxu0 0.0
    %932 = vmatmul.mubr.f32.gmra.mrb[0].mxu0 %v803
    %v933 = vpop.f32.mrb[0].mxu0
    %v934 = vadd.f32 0.0, %v933
    %v935 = vpop.f32.mrb[0].mxu0
    %936 = vmatprep.mubr.f32.mxu0 0.0
    %937 = vmatmul.mubr.f32.gmra.mrb[0].mxu0 %v804
    %v938 = vpop.f32.mrb[0].mxu0
    %v939 = vadd.f32 0.0, %v938
    %v940 = vpop.f32.mrb[0].mxu0
    %941 = vmatprep.mubr.f32.mxu0 0.0
    %942 = vmatmul.mubr.f32.gmra.mrb[0].mxu0 %v805
    %v943 = vpop.f32.mrb[0].mxu0
    %v944 = vadd.f32 0.0, %v943
    %v945 = vpop.f32.mrb[0].mxu0
    %946 = vmatprep.mubr.f32.mxu0 0.0
    %947 = vmatmul.mubr.f32.gmra.mrb[0].mxu0 %v806
    %v948 = vpop.f32.mrb[0].mxu0
    %v949 = vadd.f32 0.0, %v948
    %v950 = vpop.f32.mrb[0].mxu0
    %951 = vmatprep.mubr.f32.mxu0 0.0
    %952 = vmatmul.mubr.f32.gmra.mrb[0].mxu0 %v807
    %v953 = vpop.f32.mrb[0].mxu0
    %v954 = vadd.f32 0.0, %v953
    %v955 = vpop.f32.mrb[0].mxu0
    %956 = vmatprep.mubr.f32.mxu0 0.0
    %957 = vmatmul.mubr.f32.gmra.mrb[0].mxu0 %v808
    %v958 = vpop.f32.mrb[0].mxu0
    %v959 = vadd.f32 0.0, %v958
    %v960 = vpop.f32.mrb[0].mxu0
    %961 = vmatprep.mubr.f32.mxu0 0.0
    %962 = vmatmul.mubr.f32.gmra.mrb[0].mxu0 %v809
    %v963 = vpop.f32.mrb[0].mxu0
    %v964 = vadd.f32 0.0, %v963
    %v965 = vpop.f32.mrb[0].mxu0
    %966 = vmatprep.mubr.f32.mxu0 0.0
    %967 = vmatmul.mubr.f32.gmra.mrb[0].mxu0 %v810
    %v968 = vpop.f32.mrb[0].mxu0
    %v969 = vadd.f32 0.0, %v968
    %v970 = vpop.f32.mrb[0].mxu0
    %971 = vdwg.mxu0
    %v972 = vadd.f32 %v779, %v894
    %v973 = vadd.f32 %v780, %v899
    %v974 = vadd.f32 %v781, %v904
    %v975 = vadd.f32 %v782, %v909
    %v976 = vadd.f32 %v783, %v914
    %v977 = vadd.f32 %v784, %v919
    %v978 = vadd.f32 %v785, %v924
    %v979 = vadd.f32 %v786, %v929
    %v980 = vadd.f32 %v787, %v934
    %v981 = vadd.f32 %v788, %v939
    %v982 = vadd.f32 %v789, %v944
    %v983 = vadd.f32 %v790, %v949
    %v984 = vadd.f32 %v791, %v954
    %v985 = vadd.f32 %v792, %v959
    %v986 = vadd.f32 %v793, %v964
    %v987 = vadd.f32 %v794, %v969
    %v988 = vld [vmem:[#allocation2 + $0x1] sm:$0xff]
    %v989 = vld [vmem:[#allocation2 + $0x11] sm:$0xff]
    %v990 = vld [vmem:[#allocation2 + $0x21] sm:$0xff]
    %v991 = vld [vmem:[#allocation2 + $0x31] sm:$0xff]
    %v992 = vld [vmem:[#allocation2 + $0x41] sm:$0xff]
    %v993 = vld [vmem:[#allocation2 + $0x51] sm:$0xff]
    %v994 = vld [vmem:[#allocation2 + $0x61] sm:$0xff]
    %v995 = vld [vmem:[#allocation2 + $0x71] sm:$0xff]
    %v996 = vld [vmem:[#allocation2 + $0xa1] sm:$0xff]
    %v997 = vld [vmem:[#allocation2 + $0xb1] sm:$0xff]
    %v998 = vld [vmem:[#allocation2 + $0xc1] sm:$0xff]
    %v999 = vld [vmem:[#allocation2 + $0xd1] sm:$0xff]
    %v1000 = vld [vmem:[#allocation2 + $0xe1] sm:$0xff]
    %v1001 = vld [vmem:[#allocation2 + $0xf1] sm:$0xff]
    %v1002 = vld [vmem:[#allocation2 + $0x101] sm:$0xff]
    %v1003 = vld [vmem:[#allocation2 + $0x111] sm:$0xff]
    %s1004 = scalar_lea.vmem [#allocation3], 128
    %v1005 = vld [vmem:[%s1004] sm:$0xff]
    %v1006 = vld [vmem:[%s1004 + $0x8] sm:$0xff]
    %v1007 = vld [vmem:[%s1004 + $0x10] sm:$0xff]
    %v1008 = vld [vmem:[%s1004 + $0x18] sm:$0xff]
    %v1009 = vld [vmem:[%s1004 + $0x20] sm:$0xff]
    %v1010 = vld [vmem:[%s1004 + $0x28] sm:$0xff]
    %v1011 = vld [vmem:[%s1004 + $0x30] sm:$0xff]
    %v1012 = vld [vmem:[%s1004 + $0x38] sm:$0xff]
    %v1013 = vld [vmem:[%s1004 + $0x40] sm:$0xff]
    %v1014 = vld [vmem:[%s1004 + $0x48] sm:$0xff]
    %v1015 = vld [vmem:[%s1004 + $0x50] sm:$0xff]
    %v1016 = vld [vmem:[%s1004 + $0x58] sm:$0xff]
    %v1017 = vld [vmem:[%s1004 + $0x60] sm:$0xff]
    %v1018 = vld [vmem:[%s1004 + $0x68] sm:$0xff]
    %v1019 = vld [vmem:[%s1004 + $0x70] sm:$0xff]
    %v1020 = vld [vmem:[%s1004 + $0x78] sm:$0xff]
    %1021 = vmatprep.subr.mxu0 0.0
    %1022 = vmatpush1.msra.mxu0 %v1005
    %1023 = vmatprep.subr.mxu0 0.0
    %1024 = vmatpush1.msra.mxu0 %v1006
    %1025 = vmatprep.subr.mxu0 0.0
    %1026 = vmatpush1.msra.mxu0 %v1007
    %1027 = vmatprep.subr.mxu0 0.0
    %1028 = vmatpush1.msra.mxu0 %v1008
    %1029 = vmatprep.subr.mxu0 0.0
    %1030 = vmatpush1.msra.mxu0 %v1009
    %1031 = vmatprep.subr.mxu0 0.0
    %1032 = vmatpush1.msra.mxu0 %v1010
    %1033 = vmatprep.subr.mxu0 0.0
    %1034 = vmatpush1.msra.mxu0 %v1011
    %1035 = vmatprep.subr.mxu0 0.0
    %1036 = vmatpush1.msra.mxu0 %v1012
    %1037 = vmatprep.subr.mxu0 0.0
    %1038 = vmatpush1.msra.mxu0 %v1013
    %1039 = vmatprep.subr.mxu0 0.0
    %1040 = vmatpush1.msra.mxu0 %v1014
    %1041 = vmatprep.subr.mxu0 0.0
    %1042 = vmatpush1.msra.mxu0 %v1015
    %1043 = vmatprep.subr.mxu0 0.0
    %1044 = vmatpush1.msra.mxu0 %v1016
    %1045 = vmatprep.subr.mxu0 0.0
    %1046 = vmatpush1.msra.mxu0 %v1017
    %1047 = vmatprep.subr.mxu0 0.0
    %1048 = vmatpush1.msra.mxu0 %v1018
    %1049 = vmatprep.subr.mxu0 0.0
    %1050 = vmatpush1.msra.mxu0 %v1019
    %1051 = vmatprep.subr.mxu0 0.0
    %1052 = vmatpush1.msra.mxu0 %v1020
    %1053 = vmatprep.subr.mxu0 0.0
    %1054 = vmatpush1.msra.mxu0 0.0
    %1055 = vmatprep.subr.mxu0 0.0
    %1056 = vmatpush1.msra.mxu0 0.0
    %1057 = vmatprep.subr.mxu0 0.0
    %1058 = vmatpush1.msra.mxu0 0.0
    %1059 = vmatprep.subr.mxu0 0.0
    %1060 = vmatpush1.msra.mxu0 0.0
    %1061 = vmatprep.subr.mxu0 0.0
    %1062 = vmatpush1.msra.mxu0 0.0
    %1063 = vmatprep.subr.mxu0 0.0
    %1064 = vmatpush1.msra.mxu0 0.0
    %1065 = vmatprep.subr.mxu0 0.0
    %1066 = vmatpush1.msra.mxu0 0.0
    %1067 = vmatprep.subr.mxu0 0.0
    %1068 = vmatpush1.msra.mxu0 0.0
    %1069 = vmatprep.subr.mxu0 0.0
    %1070 = vmatpush1.msra.mxu0 0.0
    %1071 = vmatprep.subr.mxu0 0.0
    %1072 = vmatpush1.msra.mxu0 0.0
    %1073 = vmatprep.subr.mxu0 0.0
    %1074 = vmatpush1.msra.mxu0 0.0
    %1075 = vmatprep.subr.mxu0 0.0
    %1076 = vmatpush1.msra.mxu0 0.0
    %1077 = vmatprep.subr.mxu0 0.0
    %1078 = vmatpush1.msra.mxu0 0.0
    %1079 = vmatprep.subr.mxu0 0.0
    %1080 = vmatpush1.msra.mxu0 0.0
    %1081 = vmatprep.subr.mxu0 0.0
    %1082 = vmatpush1.msra.mxu0 0.0
    %1083 = vmatprep.subr.mxu0 0.0
    %1084 = vmatpush1.msra.mxu0 0.0
    %1085 = vmatprep.mubr.f32.mxu0 0.0
    %1086 = vmatmul.mubr.f32.gmra.mrb[0].mxu0 %v988
    %v1087 = vpop.f32.mrb[0].mxu0
    %v1088 = vadd.f32 0.0, %v1087
    %v1089 = vpop.f32.mrb[0].mxu0
    %1090 = vmatprep.mubr.f32.mxu0 0.0
    %1091 = vmatmul.mubr.f32.gmra.mrb[0].mxu0 %v989
    %v1092 = vpop.f32.mrb[0].mxu0
    %v1093 = vadd.f32 0.0, %v1092
    %v1094 = vpop.f32.mrb[0].mxu0
    %1095 = vmatprep.mubr.f32.mxu0 0.0
    %1096 = vmatmul.mubr.f32.gmra.mrb[0].mxu0 %v990
    %v1097 = vpop.f32.mrb[0].mxu0
    %v1098 = vadd.f32 0.0, %v1097
    %v1099 = vpop.f32.mrb[0].mxu0
    %1100 = vmatprep.mubr.f32.mxu0 0.0
    %1101 = vmatmul.mubr.f32.gmra.mrb[0].mxu0 %v991
    %v1102 = vpop.f32.mrb[0].mxu0
    %v1103 = vadd.f32 0.0, %v1102
    %v1104 = vpop.f32.mrb[0].mxu0
    %1105 = vmatprep.mubr.f32.mxu0 0.0
    %1106 = vmatmul.mubr.f32.gmra.mrb[0].mxu0 %v992
    %v1107 = vpop.f32.mrb[0].mxu0
    %v1108 = vadd.f32 0.0, %v1107
    %v1109 = vpop.f32.mrb[0].mxu0
    %1110 = vmatprep.mubr.f32.mxu0 0.0
    %1111 = vmatmul.mubr.f32.gmra.mrb[0].mxu0 %v993
    %v1112 = vpop.f32.mrb[0].mxu0
    %v1113 = vadd.f32 0.0, %v1112
    %v1114 = vpop.f32.mrb[0].mxu0
    %1115 = vmatprep.mubr.f32.mxu0 0.0
    %1116 = vmatmul.mubr.f32.gmra.mrb[0].mxu0 %v994
    %v1117 = vpop.f32.mrb[0].mxu0
    %v1118 = vadd.f32 0.0, %v1117
    %v1119 = vpop.f32.mrb[0].mxu0
    %1120 = vmatprep.mubr.f32.mxu0 0.0
    %1121 = vmatmul.mubr.f32.gmra.mrb[0].mxu0 %v995
    %v1122 = vpop.f32.mrb[0].mxu0
    %v1123 = vadd.f32 0.0, %v1122
    %v1124 = vpop.f32.mrb[0].mxu0
    %1125 = vmatprep.mubr.f32.mxu0 0.0
    %1126 = vmatmul.mubr.f32.gmra.mrb[0].mxu0 %v996
    %v1127 = vpop.f32.mrb[0].mxu0
    %v1128 = vadd.f32 0.0, %v1127
    %v1129 = vpop.f32.mrb[0].mxu0
    %1130 = vmatprep.mubr.f32.mxu0 0.0
    %1131 = vmatmul.mubr.f32.gmra.mrb[0].mxu0 %v997
    %v1132 = vpop.f32.mrb[0].mxu0
    %v1133 = vadd.f32 0.0, %v1132
    %v1134 = vpop.f32.mrb[0].mxu0
    %1135 = vmatprep.mubr.f32.mxu0 0.0
    %1136 = vmatmul.mubr.f32.gmra.mrb[0].mxu0 %v998
    %v1137 = vpop.f32.mrb[0].mxu0
    %v1138 = vadd.f32 0.0, %v1137
    %v1139 = vpop.f32.mrb[0].mxu0
    %1140 = vmatprep.mubr.f32.mxu0 0.0
    %1141 = vmatmul.mubr.f32.gmra.mrb[0].mxu0 %v999
    %v1142 = vpop.f32.mrb[0].mxu0
    %v1143 = vadd.f32 0.0, %v1142
    %v1144 = vpop.f32.mrb[0].mxu0
    %1145 = vmatprep.mubr.f32.mxu0 0.0
    %1146 = vmatmul.mubr.f32.gmra.mrb[0].mxu0 %v1000
    %v1147 = vpop.f32.mrb[0].mxu0
    %v1148 = vadd.f32 0.0, %v1147
    %v1149 = vpop.f32.mrb[0].mxu0
    %1150 = vmatprep.mubr.f32.mxu0 0.0
    %1151 = vmatmul.mubr.f32.gmra.mrb[0].mxu0 %v1001
    %v1152 = vpop.f32.mrb[0].mxu0
    %v1153 = vadd.f32 0.0, %v1152
    %v1154 = vpop.f32.mrb[0].mxu0
    %1155 = vmatprep.mubr.f32.mxu0 0.0
    %1156 = vmatmul.mubr.f32.gmra.mrb[0].mxu0 %v1002
    %v1157 = vpop.f32.mrb[0].mxu0
    %v1158 = vadd.f32 0.0, %v1157
    %v1159 = vpop.f32.mrb[0].mxu0
    %1160 = vmatprep.mubr.f32.mxu0 0.0
    %1161 = vmatmul.mubr.f32.gmra.mrb[0].mxu0 %v1003
    %v1162 = vpop.f32.mrb[0].mxu0
    %v1163 = vadd.f32 0.0, %v1162
    %v1164 = vpop.f32.mrb[0].mxu0
    %1165 = vdwg.mxu0
    %v1166 = vadd.f32 %v972, %v1088
    %v1167 = vadd.f32 %v973, %v1093
    %v1168 = vadd.f32 %v974, %v1098
    %v1169 = vadd.f32 %v975, %v1103
    %v1170 = vadd.f32 %v976, %v1108
    %v1171 = vadd.f32 %v977, %v1113
    %v1172 = vadd.f32 %v978, %v1118
    %v1173 = vadd.f32 %v979, %v1123
    %v1174 = vadd.f32 %v980, %v1128
    %v1175 = vadd.f32 %v981, %v1133
    %v1176 = vadd.f32 %v982, %v1138
    %v1177 = vadd.f32 %v983, %v1143
    %v1178 = vadd.f32 %v984, %v1148
    %v1179 = vadd.f32 %v985, %v1153
    %v1180 = vadd.f32 %v986, %v1158
    %v1181 = vadd.f32 %v987, %v1163
    %v1182 = vld [vmem:[#allocation2 + $0x2] sm:$0xff]
    %v1183 = vld [vmem:[#allocation2 + $0x12] sm:$0xff]
    %v1184 = vld [vmem:[#allocation2 + $0x22] sm:$0xff]
    %v1185 = vld [vmem:[#allocation2 + $0x32] sm:$0xff]
    %v1186 = vld [vmem:[#allocation2 + $0x42] sm:$0xff]
    %v1187 = vld [vmem:[#allocation2 + $0x52] sm:$0xff]
    %v1188 = vld [vmem:[#allocation2 + $0x62] sm:$0xff]
    %v1189 = vld [vmem:[#allocation2 + $0x72] sm:$0xff]
    %v1190 = vld [vmem:[#allocation2 + $0xa2] sm:$0xff]
    %v1191 = vld [vmem:[#allocation2 + $0xb2] sm:$0xff]
    %v1192 = vld [vmem:[#allocation2 + $0xc2] sm:$0xff]
    %v1193 = vld [vmem:[#allocation2 + $0xd2] sm:$0xff]
    %v1194 = vld [vmem:[#allocation2 + $0xe2] sm:$0xff]
    %v1195 = vld [vmem:[#allocation2 + $0xf2] sm:$0xff]
    %v1196 = vld [vmem:[#allocation2 + $0x102] sm:$0xff]
    %v1197 = vld [vmem:[#allocation2 + $0x112] sm:$0xff]
    %s1198 = scalar_lea.vmem [#allocation3], 256
    %v1199 = vld [vmem:[%s1198] sm:$0xff]
    %v1200 = vld [vmem:[%s1198 + $0x8] sm:$0xff]
    %v1201 = vld [vmem:[%s1198 + $0x10] sm:$0xff]
    %v1202 = vld [vmem:[%s1198 + $0x18] sm:$0xff]
    %v1203 = vld [vmem:[%s1198 + $0x20] sm:$0xff]
    %v1204 = vld [vmem:[%s1198 + $0x28] sm:$0xff]
    %v1205 = vld [vmem:[%s1198 + $0x30] sm:$0xff]
    %v1206 = vld [vmem:[%s1198 + $0x38] sm:$0xff]
    %v1207 = vld [vmem:[%s1198 + $0x40] sm:$0xff]
    %v1208 = vld [vmem:[%s1198 + $0x48] sm:$0xff]
    %v1209 = vld [vmem:[%s1198 + $0x50] sm:$0xff]
    %v1210 = vld [vmem:[%s1198 + $0x58] sm:$0xff]
    %v1211 = vld [vmem:[%s1198 + $0x60] sm:$0xff]
    %v1212 = vld [vmem:[%s1198 + $0x68] sm:$0xff]
    %v1213 = vld [vmem:[%s1198 + $0x70] sm:$0xff]
    %v1214 = vld [vmem:[%s1198 + $0x78] sm:$0xff]
    %1215 = vmatprep.subr.mxu0 0.0
    %1216 = vmatpush1.msra.mxu0 %v1199
    %1217 = vmatprep.subr.mxu0 0.0
    %1218 = vmatpush1.msra.mxu0 %v1200
    %1219 = vmatprep.subr.mxu0 0.0
    %1220 = vmatpush1.msra.mxu0 %v1201
    %1221 = vmatprep.subr.mxu0 0.0
    %1222 = vmatpush1.msra.mxu0 %v1202
    %1223 = vmatprep.subr.mxu0 0.0
    %1224 = vmatpush1.msra.mxu0 %v1203
    %1225 = vmatprep.subr.mxu0 0.0
    %1226 = vmatpush1.msra.mxu0 %v1204
    %1227 = vmatprep.subr.mxu0 0.0
    %1228 = vmatpush1.msra.mxu0 %v1205
    %1229 = vmatprep.subr.mxu0 0.0
    %1230 = vmatpush1.msra.mxu0 %v1206
    %1231 = vmatprep.subr.mxu0 0.0
    %1232 = vmatpush1.msra.mxu0 %v1207
    %1233 = vmatprep.subr.mxu0 0.0
    %1234 = vmatpush1.msra.mxu0 %v1208
    %1235 = vmatprep.subr.mxu0 0.0
    %1236 = vmatpush1.msra.mxu0 %v1209
    %1237 = vmatprep.subr.mxu0 0.0
    %1238 = vmatpush1.msra.mxu0 %v1210
    %1239 = vmatprep.subr.mxu0 0.0
    %1240 = vmatpush1.msra.mxu0 %v1211
    %1241 = vmatprep.subr.mxu0 0.0
    %1242 = vmatpush1.msra.mxu0 %v1212
    %1243 = vmatprep.subr.mxu0 0.0
    %1244 = vmatpush1.msra.mxu0 %v1213
    %1245 = vmatprep.subr.mxu0 0.0
    %1246 = vmatpush1.msra.mxu0 %v1214
    %1247 = vmatprep.subr.mxu0 0.0
    %1248 = vmatpush1.msra.mxu0 0.0
    %1249 = vmatprep.subr.mxu0 0.0
    %1250 = vmatpush1.msra.mxu0 0.0
    %1251 = vmatprep.subr.mxu0 0.0
    %1252 = vmatpush1.msra.mxu0 0.0
    %1253 = vmatprep.subr.mxu0 0.0
    %1254 = vmatpush1.msra.mxu0 0.0
    %1255 = vmatprep.subr.mxu0 0.0
    %1256 = vmatpush1.msra.mxu0 0.0
    %1257 = vmatprep.subr.mxu0 0.0
    %1258 = vmatpush1.msra.mxu0 0.0
    %1259 = vmatprep.subr.mxu0 0.0
    %1260 = vmatpush1.msra.mxu0 0.0
    %1261 = vmatprep.subr.mxu0 0.0
    %1262 = vmatpush1.msra.mxu0 0.0
    %1263 = vmatprep.subr.mxu0 0.0
    %1264 = vmatpush1.msra.mxu0 0.0
    %1265 = vmatprep.subr.mxu0 0.0
    %1266 = vmatpush1.msra.mxu0 0.0
    %1267 = vmatprep.subr.mxu0 0.0
    %1268 = vmatpush1.msra.mxu0 0.0
    %1269 = vmatprep.subr.mxu0 0.0
    %1270 = vmatpush1.msra.mxu0 0.0
    %1271 = vmatprep.subr.mxu0 0.0
    %1272 = vmatpush1.msra.mxu0 0.0
    %1273 = vmatprep.subr.mxu0 0.0
    %1274 = vmatpush1.msra.mxu0 0.0
    %1275 = vmatprep.subr.mxu0 0.0
    %1276 = vmatpush1.msra.mxu0 0.0
    %1277 = vmatprep.subr.mxu0 0.0
    %1278 = vmatpush1.msra.mxu0 0.0
    %1279 = vmatprep.mubr.f32.mxu0 0.0
    %1280 = vmatmul.mubr.f32.gmra.mrb[0].mxu0 %v1182
    %v1281 = vpop.f32.mrb[0].mxu0
    %v1282 = vadd.f32 0.0, %v1281
    %v1283 = vpop.f32.mrb[0].mxu0
    %1284 = vmatprep.mubr.f32.mxu0 0.0
    %1285 = vmatmul.mubr.f32.gmra.mrb[0].mxu0 %v1183
    %v1286 = vpop.f32.mrb[0].mxu0
    %v1287 = vadd.f32 0.0, %v1286
    %v1288 = vpop.f32.mrb[0].mxu0
    %1289 = vmatprep.mubr.f32.mxu0 0.0
    %1290 = vmatmul.mubr.f32.gmra.mrb[0].mxu0 %v1184
    %v1291 = vpop.f32.mrb[0].mxu0
    %v1292 = vadd.f32 0.0, %v1291
    %v1293 = vpop.f32.mrb[0].mxu0
    %1294 = vmatprep.mubr.f32.mxu0 0.0
    %1295 = vmatmul.mubr.f32.gmra.mrb[0].mxu0 %v1185
    %v1296 = vpop.f32.mrb[0].mxu0
    %v1297 = vadd.f32 0.0, %v1296
    %v1298 = vpop.f32.mrb[0].mxu0
    %1299 = vmatprep.mubr.f32.mxu0 0.0
    %1300 = vmatmul.mubr.f32.gmra.mrb[0].mxu0 %v1186
    %v1301 = vpop.f32.mrb[0].mxu0
    %v1302 = vadd.f32 0.0, %v1301
    %v1303 = vpop.f32.mrb[0].mxu0
    %1304 = vmatprep.mubr.f32.mxu0 0.0
    %1305 = vmatmul.mubr.f32.gmra.mrb[0].mxu0 %v1187
    %v1306 = vpop.f32.mrb[0].mxu0
    %v1307 = vadd.f32 0.0, %v1306
    %v1308 = vpop.f32.mrb[0].mxu0
    %1309 = vmatprep.mubr.f32.mxu0 0.0
    %1310 = vmatmul.mubr.f32.gmra.mrb[0].mxu0 %v1188
    %v1311 = vpop.f32.mrb[0].mxu0
    %v1312 = vadd.f32 0.0, %v1311
    %v1313 = vpop.f32.mrb[0].mxu0
    %1314 = vmatprep.mubr.f32.mxu0 0.0
    %1315 = vmatmul.mubr.f32.gmra.mrb[0].mxu0 %v1189
    %v1316 = vpop.f32.mrb[0].mxu0
    %v1317 = vadd.f32 0.0, %v1316
    %v1318 = vpop.f32.mrb[0].mxu0
    %1319 = vmatprep.mubr.f32.mxu0 0.0
    %1320 = vmatmul.mubr.f32.gmra.mrb[0].mxu0 %v1190
    %v1321 = vpop.f32.mrb[0].mxu0
    %v1322 = vadd.f32 0.0, %v1321
    %v1323 = vpop.f32.mrb[0].mxu0
    %1324 = vmatprep.mubr.f32.mxu0 0.0
    %1325 = vmatmul.mubr.f32.gmra.mrb[0].mxu0 %v1191
    %v1326 = vpop.f32.mrb[0].mxu0
    %v1327 = vadd.f32 0.0, %v1326
    %v1328 = vpop.f32.mrb[0].mxu0
    %1329 = vmatprep.mubr.f32.mxu0 0.0
    %1330 = vmatmul.mubr.f32.gmra.mrb[0].mxu0 %v1192
    %v1331 = vpop.f32.mrb[0].mxu0
    %v1332 = vadd.f32 0.0, %v1331
    %v1333 = vpop.f32.mrb[0].mxu0
    %1334 = vmatprep.mubr.f32.mxu0 0.0
    %1335 = vmatmul.mubr.f32.gmra.mrb[0].mxu0 %v1193
    %v1336 = vpop.f32.mrb[0].mxu0
    %v1337 = vadd.f32 0.0, %v1336
    %v1338 = vpop.f32.mrb[0].mxu0
    %1339 = vmatprep.mubr.f32.mxu0 0.0
    %1340 = vmatmul.mubr.f32.gmra.mrb[0].mxu0 %v1194
    %v1341 = vpop.f32.mrb[0].mxu0
    %v1342 = vadd.f32 0.0, %v1341
    %v1343 = vpop.f32.mrb[0].mxu0
    %1344 = vmatprep.mubr.f32.mxu0 0.0
    %1345 = vmatmul.mubr.f32.gmra.mrb[0].mxu0 %v1195
    %v1346 = vpop.f32.mrb[0].mxu0
    %v1347 = vadd.f32 0.0, %v1346
    %v1348 = vpop.f32.mrb[0].mxu0
    %1349 = vmatprep.mubr.f32.mxu0 0.0
    %1350 = vmatmul.mubr.f32.gmra.mrb[0].mxu0 %v1196
    %v1351 = vpop.f32.mrb[0].mxu0
    %v1352 = vadd.f32 0.0, %v1351
    %v1353 = vpop.f32.mrb[0].mxu0
    %1354 = vmatprep.mubr.f32.mxu0 0.0
    %1355 = vmatmul.mubr.f32.gmra.mrb[0].mxu0 %v1197
    %v1356 = vpop.f32.mrb[0].mxu0
    %v1357 = vadd.f32 0.0, %v1356
    %v1358 = vpop.f32.mrb[0].mxu0
    %1359 = vdwg.mxu0
    %v1360 = vadd.f32 %v1166, %v1282
    %v1361 = vadd.f32 %v1167, %v1287
    %v1362 = vadd.f32 %v1168, %v1292
    %v1363 = vadd.f32 %v1169, %v1297
    %v1364 = vadd.f32 %v1170, %v1302
    %v1365 = vadd.f32 %v1171, %v1307
    %v1366 = vadd.f32 %v1172, %v1312
    %v1367 = vadd.f32 %v1173, %v1317
    %v1368 = vadd.f32 %v1174, %v1322
    %v1369 = vadd.f32 %v1175, %v1327
    %v1370 = vadd.f32 %v1176, %v1332
    %v1371 = vadd.f32 %v1177, %v1337
    %v1372 = vadd.f32 %v1178, %v1342
    %v1373 = vadd.f32 %v1179, %v1347
    %v1374 = vadd.f32 %v1180, %v1352
    %v1375 = vadd.f32 %v1181, %v1357
    %v1376 = vld [vmem:[%s755] sm:$0xff]
    %v1377 = vld [vmem:[%s755 + $0x10] sm:$0xff]
    %v1378 = vld [vmem:[%s755 + $0x20] sm:$0xff]
    %v1379 = vld [vmem:[%s755 + $0x30] sm:$0xff]
    %v1380 = vld [vmem:[%s755 + $0x40] sm:$0xff]
    %v1381 = vld [vmem:[%s755 + $0x50] sm:$0xff]
    %v1382 = vld [vmem:[%s755 + $0x60] sm:$0xff]
    %v1383 = vld [vmem:[%s755 + $0x70] sm:$0xff]
    %v1384 = vld [vmem:[%s755 + $0xa0] sm:$0xff]
    %v1385 = vld [vmem:[%s755 + $0xb0] sm:$0xff]
    %v1386 = vld [vmem:[%s755 + $0xc0] sm:$0xff]
    %v1387 = vld [vmem:[%s755 + $0xd0] sm:$0xff]
    %v1388 = vld [vmem:[%s755 + $0xe0] sm:$0xff]
    %v1389 = vld [vmem:[%s755 + $0xf0] sm:$0xff]
    %v1390 = vld [vmem:[%s755 + $0x100] sm:$0xff]
    %v1391 = vld [vmem:[%s755 + $0x110] sm:$0xff]
    %s1392 = scalar_lea.vmem [#allocation3], 384
    %v1393 = vld [vmem:[%s1392] sm:$0xff]
    %v1394 = vld [vmem:[%s1392 + $0x8] sm:$0xff]
    %v1395 = vld [vmem:[%s1392 + $0x10] sm:$0xff]
    %v1396 = vld [vmem:[%s1392 + $0x18] sm:$0xff]
    %v1397 = vld [vmem:[%s1392 + $0x20] sm:$0xff]
    %v1398 = vld [vmem:[%s1392 + $0x28] sm:$0xff]
    %v1399 = vld [vmem:[%s1392 + $0x30] sm:$0xff]
    %v1400 = vld [vmem:[%s1392 + $0x38] sm:$0xff]
    %v1401 = vld [vmem:[%s1392 + $0x40] sm:$0xff]
    %v1402 = vld [vmem:[%s1392 + $0x48] sm:$0xff]
    %v1403 = vld [vmem:[%s1392 + $0x50] sm:$0xff]
    %v1404 = vld [vmem:[%s1392 + $0x58] sm:$0xff]
    %v1405 = vld [vmem:[%s1392 + $0x60] sm:$0xff]
    %v1406 = vld [vmem:[%s1392 + $0x68] sm:$0xff]
    %v1407 = vld [vmem:[%s1392 + $0x70] sm:$0xff]
    %v1408 = vld [vmem:[%s1392 + $0x78] sm:$0xff]
    %1409 = vmatprep.subr.mxu0 0.0
    %1410 = vmatpush1.msra.mxu0 %v1393
    %1411 = vmatprep.subr.mxu0 0.0
    %1412 = vmatpush1.msra.mxu0 %v1394
    %1413 = vmatprep.subr.mxu0 0.0
    %1414 = vmatpush1.msra.mxu0 %v1395
    %1415 = vmatprep.subr.mxu0 0.0
    %1416 = vmatpush1.msra.mxu0 %v1396
    %1417 = vmatprep.subr.mxu0 0.0
    %1418 = vmatpush1.msra.mxu0 %v1397
    %1419 = vmatprep.subr.mxu0 0.0
    %1420 = vmatpush1.msra.mxu0 %v1398
    %1421 = vmatprep.subr.mxu0 0.0
    %1422 = vmatpush1.msra.mxu0 %v1399
    %1423 = vmatprep.subr.mxu0 0.0
    %1424 = vmatpush1.msra.mxu0 %v1400
    %1425 = vmatprep.subr.mxu0 0.0
    %1426 = vmatpush1.msra.mxu0 %v1401
    %1427 = vmatprep.subr.mxu0 0.0
    %1428 = vmatpush1.msra.mxu0 %v1402
    %1429 = vmatprep.subr.mxu0 0.0
    %1430 = vmatpush1.msra.mxu0 %v1403
    %1431 = vmatprep.subr.mxu0 0.0
    %1432 = vmatpush1.msra.mxu0 %v1404
    %1433 = vmatprep.subr.mxu0 0.0
    %1434 = vmatpush1.msra.mxu0 %v1405
    %1435 = vmatprep.subr.mxu0 0.0
    %1436 = vmatpush1.msra.mxu0 %v1406
    %1437 = vmatprep.subr.mxu0 0.0
    %1438 = vmatpush1.msra.mxu0 %v1407
    %1439 = vmatprep.subr.mxu0 0.0
    %1440 = vmatpush1.msra.mxu0 %v1408
    %1441 = vmatprep.subr.mxu0 0.0
    %1442 = vmatpush1.msra.mxu0 0.0
    %1443 = vmatprep.subr.mxu0 0.0
    %1444 = vmatpush1.msra.mxu0 0.0
    %1445 = vmatprep.subr.mxu0 0.0
    %1446 = vmatpush1.msra.mxu0 0.0
    %1447 = vmatprep.subr.mxu0 0.0
    %1448 = vmatpush1.msra.mxu0 0.0
    %1449 = vmatprep.subr.mxu0 0.0
    %1450 = vmatpush1.msra.mxu0 0.0
    %1451 = vmatprep.subr.mxu0 0.0
    %1452 = vmatpush1.msra.mxu0 0.0
    %1453 = vmatprep.subr.mxu0 0.0
    %1454 = vmatpush1.msra.mxu0 0.0
    %1455 = vmatprep.subr.mxu0 0.0
    %1456 = vmatpush1.msra.mxu0 0.0
    %1457 = vmatprep.subr.mxu0 0.0
    %1458 = vmatpush1.msra.mxu0 0.0
    %1459 = vmatprep.subr.mxu0 0.0
    %1460 = vmatpush1.msra.mxu0 0.0
    %1461 = vmatprep.subr.mxu0 0.0
    %1462 = vmatpush1.msra.mxu0 0.0
    %1463 = vmatprep.subr.mxu0 0.0
    %1464 = vmatpush1.msra.mxu0 0.0
    %1465 = vmatprep.subr.mxu0 0.0
    %1466 = vmatpush1.msra.mxu0 0.0
    %1467 = vmatprep.subr.mxu0 0.0
    %1468 = vmatpush1.msra.mxu0 0.0
    %1469 = vmatprep.subr.mxu0 0.0
    %1470 = vmatpush1.msra.mxu0 0.0
    %1471 = vmatprep.subr.mxu0 0.0
    %1472 = vmatpush1.msra.mxu0 0.0
    %1473 = vmatprep.mubr.f32.mxu0 0.0
    %1474 = vmatmul.mubr.f32.gmra.mrb[0].mxu0 %v1376
    %v1475 = vpop.f32.mrb[0].mxu0
    %v1476 = vadd.f32 0.0, %v1475
    %v1477 = vpop.f32.mrb[0].mxu0
    %1478 = vmatprep.mubr.f32.mxu0 0.0
    %1479 = vmatmul.mubr.f32.gmra.mrb[0].mxu0 %v1377
    %v1480 = vpop.f32.mrb[0].mxu0
    %v1481 = vadd.f32 0.0, %v1480
    %v1482 = vpop.f32.mrb[0].mxu0
    %1483 = vmatprep.mubr.f32.mxu0 0.0
    %1484 = vmatmul.mubr.f32.gmra.mrb[0].mxu0 %v1378
    %v1485 = vpop.f32.mrb[0].mxu0
    %v1486 = vadd.f32 0.0, %v1485
    %v1487 = vpop.f32.mrb[0].mxu0
    %1488 = vmatprep.mubr.f32.mxu0 0.0
    %1489 = vmatmul.mubr.f32.gmra.mrb[0].mxu0 %v1379
    %v1490 = vpop.f32.mrb[0].mxu0
    %v1491 = vadd.f32 0.0, %v1490
    %v1492 = vpop.f32.mrb[0].mxu0
    %1493 = vmatprep.mubr.f32.mxu0 0.0
    %1494 = vmatmul.mubr.f32.gmra.mrb[0].mxu0 %v1380
    %v1495 = vpop.f32.mrb[0].mxu0
    %v1496 = vadd.f32 0.0, %v1495
    %v1497 = vpop.f32.mrb[0].mxu0
    %1498 = vmatprep.mubr.f32.mxu0 0.0
    %1499 = vmatmul.mubr.f32.gmra.mrb[0].mxu0 %v1381
    %v1500 = vpop.f32.mrb[0].mxu0
    %v1501 = vadd.f32 0.0, %v1500
    %v1502 = vpop.f32.mrb[0].mxu0
    %1503 = vmatprep.mubr.f32.mxu0 0.0
    %1504 = vmatmul.mubr.f32.gmra.mrb[0].mxu0 %v1382
    %v1505 = vpop.f32.mrb[0].mxu0
    %v1506 = vadd.f32 0.0, %v1505
    %v1507 = vpop.f32.mrb[0].mxu0
    %1508 = vmatprep.mubr.f32.mxu0 0.0
    %1509 = vmatmul.mubr.f32.gmra.mrb[0].mxu0 %v1383
    %v1510 = vpop.f32.mrb[0].mxu0
    %v1511 = vadd.f32 0.0, %v1510
    %v1512 = vpop.f32.mrb[0].mxu0
    %1513 = vmatprep.mubr.f32.mxu0 0.0
    %1514 = vmatmul.mubr.f32.gmra.mrb[0].mxu0 %v1384
    %v1515 = vpop.f32.mrb[0].mxu0
    %v1516 = vadd.f32 0.0, %v1515
    %v1517 = vpop.f32.mrb[0].mxu0
    %1518 = vmatprep.mubr.f32.mxu0 0.0
    %1519 = vmatmul.mubr.f32.gmra.mrb[0].mxu0 %v1385
    %v1520 = vpop.f32.mrb[0].mxu0
    %v1521 = vadd.f32 0.0, %v1520
    %v1522 = vpop.f32.mrb[0].mxu0
    %1523 = vmatprep.mubr.f32.mxu0 0.0
    %1524 = vmatmul.mubr.f32.gmra.mrb[0].mxu0 %v1386
    %v1525 = vpop.f32.mrb[0].mxu0
    %v1526 = vadd.f32 0.0, %v1525
    %v1527 = vpop.f32.mrb[0].mxu0
    %1528 = vmatprep.mubr.f32.mxu0 0.0
    %1529 = vmatmul.mubr.f32.gmra.mrb[0].mxu0 %v1387
    %v1530 = vpop.f32.mrb[0].mxu0
    %v1531 = vadd.f32 0.0, %v1530
    %v1532 = vpop.f32.mrb[0].mxu0
    %1533 = vmatprep.mubr.f32.mxu0 0.0
    %1534 = vmatmul.mubr.f32.gmra.mrb[0].mxu0 %v1388
    %v1535 = vpop.f32.mrb[0].mxu0
    %v1536 = vadd.f32 0.0, %v1535
    %v1537 = vpop.f32.mrb[0].mxu0
    %1538 = vmatprep.mubr.f32.mxu0 0.0
    %1539 = vmatmul.mubr.f32.gmra.mrb[0].mxu0 %v1389
    %v1540 = vpop.f32.mrb[0].mxu0
    %v1541 = vadd.f32 0.0, %v1540
    %v1542 = vpop.f32.mrb[0].mxu0
    %1543 = vmatprep.mubr.f32.mxu0 0.0
    %1544 = vmatmul.mubr.f32.gmra.mrb[0].mxu0 %v1390
    %v1545 = vpop.f32.mrb[0].mxu0
    %v1546 = vadd.f32 0.0, %v1545
    %v1547 = vpop.f32.mrb[0].mxu0
    %1548 = vmatprep.mubr.f32.mxu0 0.0
    %1549 = vmatmul.mubr.f32.gmra.mrb[0].mxu0 %v1391
    %v1550 = vpop.f32.mrb[0].mxu0
    %v1551 = vadd.f32 0.0, %v1550
    %v1552 = vpop.f32.mrb[0].mxu0
    %1553 = vdwg.mxu0
    %v1554 = vadd.f32 %v1360, %v1476
    %v1555 = vadd.f32 %v1361, %v1481
    %v1556 = vadd.f32 %v1362, %v1486
    %v1557 = vadd.f32 %v1363, %v1491
    %v1558 = vadd.f32 %v1364, %v1496
    %v1559 = vadd.f32 %v1365, %v1501
    %v1560 = vadd.f32 %v1366, %v1506
    %v1561 = vadd.f32 %v1367, %v1511
    %v1562 = vadd.f32 %v1368, %v1516
    %v1563 = vadd.f32 %v1369, %v1521
    %v1564 = vadd.f32 %v1370, %v1526
    %v1565 = vadd.f32 %v1371, %v1531
    %v1566 = vadd.f32 %v1372, %v1536
    %v1567 = vadd.f32 %v1373, %v1541
    %v1568 = vadd.f32 %v1374, %v1546
    %v1569 = vadd.f32 %v1375, %v1551
    %v1570 = vld [vmem:[%s755 + $0x1] sm:$0xff]
    %v1571 = vld [vmem:[%s755 + $0x11] sm:$0xff]
    %v1572 = vld [vmem:[%s755 + $0x21] sm:$0xff]
    %v1573 = vld [vmem:[%s755 + $0x31] sm:$0xff]
    %v1574 = vld [vmem:[%s755 + $0x41] sm:$0xff]
    %v1575 = vld [vmem:[%s755 + $0x51] sm:$0xff]
    %v1576 = vld [vmem:[%s755 + $0x61] sm:$0xff]
    %v1577 = vld [vmem:[%s755 + $0x71] sm:$0xff]
    %v1578 = vld [vmem:[%s755 + $0xa1] sm:$0xff]
    %v1579 = vld [vmem:[%s755 + $0xb1] sm:$0xff]
    %v1580 = vld [vmem:[%s755 + $0xc1] sm:$0xff]
    %v1581 = vld [vmem:[%s755 + $0xd1] sm:$0xff]
    %v1582 = vld [vmem:[%s755 + $0xe1] sm:$0xff]
    %v1583 = vld [vmem:[%s755 + $0xf1] sm:$0xff]
    %v1584 = vld [vmem:[%s755 + $0x101] sm:$0xff]
    %v1585 = vld [vmem:[%s755 + $0x111] sm:$0xff]
    %s1586 = scalar_lea.vmem [#allocation3], 512
    %v1587 = vld [vmem:[%s1586] sm:$0xff]
    %v1588 = vld [vmem:[%s1586 + $0x8] sm:$0xff]
    %v1589 = vld [vmem:[%s1586 + $0x10] sm:$0xff]
    %v1590 = vld [vmem:[%s1586 + $0x18] sm:$0xff]
    %v1591 = vld [vmem:[%s1586 + $0x20] sm:$0xff]
    %v1592 = vld [vmem:[%s1586 + $0x28] sm:$0xff]
    %v1593 = vld [vmem:[%s1586 + $0x30] sm:$0xff]
    %v1594 = vld [vmem:[%s1586 + $0x38] sm:$0xff]
    %v1595 = vld [vmem:[%s1586 + $0x40] sm:$0xff]
    %v1596 = vld [vmem:[%s1586 + $0x48] sm:$0xff]
    %v1597 = vld [vmem:[%s1586 + $0x50] sm:$0xff]
    %v1598 = vld [vmem:[%s1586 + $0x58] sm:$0xff]
    %v1599 = vld [vmem:[%s1586 + $0x60] sm:$0xff]
    %v1600 = vld [vmem:[%s1586 + $0x68] sm:$0xff]
    %v1601 = vld [vmem:[%s1586 + $0x70] sm:$0xff]
    %v1602 = vld [vmem:[%s1586 + $0x78] sm:$0xff]
    %1603 = vmatprep.subr.mxu0 0.0
    %1604 = vmatpush1.msra.mxu0 %v1587
    %1605 = vmatprep.subr.mxu0 0.0
    %1606 = vmatpush1.msra.mxu0 %v1588
    %1607 = vmatprep.subr.mxu0 0.0
    %1608 = vmatpush1.msra.mxu0 %v1589
    %1609 = vmatprep.subr.mxu0 0.0
    %1610 = vmatpush1.msra.mxu0 %v1590
    %1611 = vmatprep.subr.mxu0 0.0
    %1612 = vmatpush1.msra.mxu0 %v1591
    %1613 = vmatprep.subr.mxu0 0.0
    %1614 = vmatpush1.msra.mxu0 %v1592
    %1615 = vmatprep.subr.mxu0 0.0
    %1616 = vmatpush1.msra.mxu0 %v1593
    %1617 = vmatprep.subr.mxu0 0.0
    %1618 = vmatpush1.msra.mxu0 %v1594
    %1619 = vmatprep.subr.mxu0 0.0
    %1620 = vmatpush1.msra.mxu0 %v1595
    %1621 = vmatprep.subr.mxu0 0.0
    %1622 = vmatpush1.msra.mxu0 %v1596
    %1623 = vmatprep.subr.mxu0 0.0
    %1624 = vmatpush1.msra.mxu0 %v1597
    %1625 = vmatprep.subr.mxu0 0.0
    %1626 = vmatpush1.msra.mxu0 %v1598
    %1627 = vmatprep.subr.mxu0 0.0
    %1628 = vmatpush1.msra.mxu0 %v1599
    %1629 = vmatprep.subr.mxu0 0.0
    %1630 = vmatpush1.msra.mxu0 %v1600
    %1631 = vmatprep.subr.mxu0 0.0
    %1632 = vmatpush1.msra.mxu0 %v1601
    %1633 = vmatprep.subr.mxu0 0.0
    %1634 = vmatpush1.msra.mxu0 %v1602
    %1635 = vmatprep.subr.mxu0 0.0
    %1636 = vmatpush1.msra.mxu0 0.0
    %1637 = vmatprep.subr.mxu0 0.0
    %1638 = vmatpush1.msra.mxu0 0.0
    %1639 = vmatprep.subr.mxu0 0.0
    %1640 = vmatpush1.msra.mxu0 0.0
    %1641 = vmatprep.subr.mxu0 0.0
    %1642 = vmatpush1.msra.mxu0 0.0
    %1643 = vmatprep.subr.mxu0 0.0
    %1644 = vmatpush1.msra.mxu0 0.0
    %1645 = vmatprep.subr.mxu0 0.0
    %1646 = vmatpush1.msra.mxu0 0.0
    %1647 = vmatprep.subr.mxu0 0.0
    %1648 = vmatpush1.msra.mxu0 0.0
    %1649 = vmatprep.subr.mxu0 0.0
    %1650 = vmatpush1.msra.mxu0 0.0
    %1651 = vmatprep.subr.mxu0 0.0
    %1652 = vmatpush1.msra.mxu0 0.0
    %1653 = vmatprep.subr.mxu0 0.0
    %1654 = vmatpush1.msra.mxu0 0.0
    %1655 = vmatprep.subr.mxu0 0.0
    %1656 = vmatpush1.msra.mxu0 0.0
    %1657 = vmatprep.subr.mxu0 0.0
    %1658 = vmatpush1.msra.mxu0 0.0
    %1659 = vmatprep.subr.mxu0 0.0
    %1660 = vmatpush1.msra.mxu0 0.0
    %1661 = vmatprep.subr.mxu0 0.0
    %1662 = vmatpush1.msra.mxu0 0.0
    %1663 = vmatprep.subr.mxu0 0.0
    %1664 = vmatpush1.msra.mxu0 0.0
    %1665 = vmatprep.subr.mxu0 0.0
    %1666 = vmatpush1.msra.mxu0 0.0
    %1667 = vmatprep.mubr.f32.mxu0 0.0
    %1668 = vmatmul.mubr.f32.gmra.mrb[0].mxu0 %v1570
    %v1669 = vpop.f32.mrb[0].mxu0
    %v1670 = vadd.f32 0.0, %v1669
    %v1671 = vpop.f32.mrb[0].mxu0
    %1672 = vmatprep.mubr.f32.mxu0 0.0
    %1673 = vmatmul.mubr.f32.gmra.mrb[0].mxu0 %v1571
    %v1674 = vpop.f32.mrb[0].mxu0
    %v1675 = vadd.f32 0.0, %v1674
    %v1676 = vpop.f32.mrb[0].mxu0
    %1677 = vmatprep.mubr.f32.mxu0 0.0
    %1678 = vmatmul.mubr.f32.gmra.mrb[0].mxu0 %v1572
    %v1679 = vpop.f32.mrb[0].mxu0
    %v1680 = vadd.f32 0.0, %v1679
    %v1681 = vpop.f32.mrb[0].mxu0
    %1682 = vmatprep.mubr.f32.mxu0 0.0
    %1683 = vmatmul.mubr.f32.gmra.mrb[0].mxu0 %v1573
    %v1684 = vpop.f32.mrb[0].mxu0
    %v1685 = vadd.f32 0.0, %v1684
    %v1686 = vpop.f32.mrb[0].mxu0
    %1687 = vmatprep.mubr.f32.mxu0 0.0
    %1688 = vmatmul.mubr.f32.gmra.mrb[0].mxu0 %v1574
    %v1689 = vpop.f32.mrb[0].mxu0
    %v1690 = vadd.f32 0.0, %v1689
    %v1691 = vpop.f32.mrb[0].mxu0
    %1692 = vmatprep.mubr.f32.mxu0 0.0
    %1693 = vmatmul.mubr.f32.gmra.mrb[0].mxu0 %v1575
    %v1694 = vpop.f32.mrb[0].mxu0
    %v1695 = vadd.f32 0.0, %v1694
    %v1696 = vpop.f32.mrb[0].mxu0
    %1697 = vmatprep.mubr.f32.mxu0 0.0
    %1698 = vmatmul.mubr.f32.gmra.mrb[0].mxu0 %v1576
    %v1699 = vpop.f32.mrb[0].mxu0
    %v1700 = vadd.f32 0.0, %v1699
    %v1701 = vpop.f32.mrb[0].mxu0
    %1702 = vmatprep.mubr.f32.mxu0 0.0
    %1703 = vmatmul.mubr.f32.gmra.mrb[0].mxu0 %v1577
    %v1704 = vpop.f32.mrb[0].mxu0
    %v1705 = vadd.f32 0.0, %v1704
    %v1706 = vpop.f32.mrb[0].mxu0
    %1707 = vmatprep.mubr.f32.mxu0 0.0
    %1708 = vmatmul.mubr.f32.gmra.mrb[0].mxu0 %v1578
    %v1709 = vpop.f32.mrb[0].mxu0
    %v1710 = vadd.f32 0.0, %v1709
    %v1711 = vpop.f32.mrb[0].mxu0
    %1712 = vmatprep.mubr.f32.mxu0 0.0
    %1713 = vmatmul.mubr.f32.gmra.mrb[0].mxu0 %v1579
    %v1714 = vpop.f32.mrb[0].mxu0
    %v1715 = vadd.f32 0.0, %v1714
    %v1716 = vpop.f32.mrb[0].mxu0
    %1717 = vmatprep.mubr.f32.mxu0 0.0
    %1718 = vmatmul.mubr.f32.gmra.mrb[0].mxu0 %v1580
    %v1719 = vpop.f32.mrb[0].mxu0
    %v1720 = vadd.f32 0.0, %v1719
    %v1721 = vpop.f32.mrb[0].mxu0
    %1722 = vmatprep.mubr.f32.mxu0 0.0
    %1723 = vmatmul.mubr.f32.gmra.mrb[0].mxu0 %v1581
    %v1724 = vpop.f32.mrb[0].mxu0
    %v1725 = vadd.f32 0.0, %v1724
    %v1726 = vpop.f32.mrb[0].mxu0
    %1727 = vmatprep.mubr.f32.mxu0 0.0
    %1728 = vmatmul.mubr.f32.gmra.mrb[0].mxu0 %v1582
    %v1729 = vpop.f32.mrb[0].mxu0
    %v1730 = vadd.f32 0.0, %v1729
    %v1731 = vpop.f32.mrb[0].mxu0
    %1732 = vmatprep.mubr.f32.mxu0 0.0
    %1733 = vmatmul.mubr.f32.gmra.mrb[0].mxu0 %v1583
    %v1734 = vpop.f32.mrb[0].mxu0
    %v1735 = vadd.f32 0.0, %v1734
    %v1736 = vpop.f32.mrb[0].mxu0
    %1737 = vmatprep.mubr.f32.mxu0 0.0
    %1738 = vmatmul.mubr.f32.gmra.mrb[0].mxu0 %v1584
    %v1739 = vpop.f32.mrb[0].mxu0
    %v1740 = vadd.f32 0.0, %v1739
    %v1741 = vpop.f32.mrb[0].mxu0
    %1742 = vmatprep.mubr.f32.mxu0 0.0
    %1743 = vmatmul.mubr.f32.gmra.mrb[0].mxu0 %v1585
    %v1744 = vpop.f32.mrb[0].mxu0
    %v1745 = vadd.f32 0.0, %v1744
    %v1746 = vpop.f32.mrb[0].mxu0
    %1747 = vdwg.mxu0
    %v1748 = vadd.f32 %v1554, %v1670
    %v1749 = vadd.f32 %v1555, %v1675
    %v1750 = vadd.f32 %v1556, %v1680
    %v1751 = vadd.f32 %v1557, %v1685
    %v1752 = vadd.f32 %v1558, %v1690
    %v1753 = vadd.f32 %v1559, %v1695
    %v1754 = vadd.f32 %v1560, %v1700
    %v1755 = vadd.f32 %v1561, %v1705
    %v1756 = vadd.f32 %v1562, %v1710
    %v1757 = vadd.f32 %v1563, %v1715
    %v1758 = vadd.f32 %v1564, %v1720
    %v1759 = vadd.f32 %v1565, %v1725
    %v1760 = vadd.f32 %v1566, %v1730
    %v1761 = vadd.f32 %v1567, %v1735
    %v1762 = vadd.f32 %v1568, %v1740
    %v1763 = vadd.f32 %v1569, %v1745
    %v1764 = vld [vmem:[%s755 + $0x2] sm:$0xff]
    %v1765 = vld [vmem:[%s755 + $0x12] sm:$0xff]
    %v1766 = vld [vmem:[%s755 + $0x22] sm:$0xff]
    %v1767 = vld [vmem:[%s755 + $0x32] sm:$0xff]
    %v1768 = vld [vmem:[%s755 + $0x42] sm:$0xff]
    %v1769 = vld [vmem:[%s755 + $0x52] sm:$0xff]
    %v1770 = vld [vmem:[%s755 + $0x62] sm:$0xff]
    %v1771 = vld [vmem:[%s755 + $0x72] sm:$0xff]
    %v1772 = vld [vmem:[%s755 + $0xa2] sm:$0xff]
    %v1773 = vld [vmem:[%s755 + $0xb2] sm:$0xff]
    %v1774 = vld [vmem:[%s755 + $0xc2] sm:$0xff]
    %v1775 = vld [vmem:[%s755 + $0xd2] sm:$0xff]
    %v1776 = vld [vmem:[%s755 + $0xe2] sm:$0xff]
    %v1777 = vld [vmem:[%s755 + $0xf2] sm:$0xff]
    %v1778 = vld [vmem:[%s755 + $0x102] sm:$0xff]
    %v1779 = vld [vmem:[%s755 + $0x112] sm:$0xff]
    %s1780 = scalar_lea.vmem [#allocation3], 640
    %v1781 = vld [vmem:[%s1780] sm:$0xff]
    %v1782 = vld [vmem:[%s1780 + $0x8] sm:$0xff]
    %v1783 = vld [vmem:[%s1780 + $0x10] sm:$0xff]
    %v1784 = vld [vmem:[%s1780 + $0x18] sm:$0xff]
    %v1785 = vld [vmem:[%s1780 + $0x20] sm:$0xff]
    %v1786 = vld [vmem:[%s1780 + $0x28] sm:$0xff]
    %v1787 = vld [vmem:[%s1780 + $0x30] sm:$0xff]
    %v1788 = vld [vmem:[%s1780 + $0x38] sm:$0xff]
    %v1789 = vld [vmem:[%s1780 + $0x40] sm:$0xff]
    %v1790 = vld [vmem:[%s1780 + $0x48] sm:$0xff]
    %v1791 = vld [vmem:[%s1780 + $0x50] sm:$0xff]
    %v1792 = vld [vmem:[%s1780 + $0x58] sm:$0xff]
    %v1793 = vld [vmem:[%s1780 + $0x60] sm:$0xff]
    %v1794 = vld [vmem:[%s1780 + $0x68] sm:$0xff]
    %v1795 = vld [vmem:[%s1780 + $0x70] sm:$0xff]
    %v1796 = vld [vmem:[%s1780 + $0x78] sm:$0xff]
    %1797 = vmatprep.subr.mxu0 0.0
    %1798 = vmatpush1.msra.mxu0 %v1781
    %1799 = vmatprep.subr.mxu0 0.0
    %1800 = vmatpush1.msra.mxu0 %v1782
    %1801 = vmatprep.subr.mxu0 0.0
    %1802 = vmatpush1.msra.mxu0 %v1783
    %1803 = vmatprep.subr.mxu0 0.0
    %1804 = vmatpush1.msra.mxu0 %v1784
    %1805 = vmatprep.subr.mxu0 0.0
    %1806 = vmatpush1.msra.mxu0 %v1785
    %1807 = vmatprep.subr.mxu0 0.0
    %1808 = vmatpush1.msra.mxu0 %v1786
    %1809 = vmatprep.subr.mxu0 0.0
    %1810 = vmatpush1.msra.mxu0 %v1787
    %1811 = vmatprep.subr.mxu0 0.0
    %1812 = vmatpush1.msra.mxu0 %v1788
    %1813 = vmatprep.subr.mxu0 0.0
    %1814 = vmatpush1.msra.mxu0 %v1789
    %1815 = vmatprep.subr.mxu0 0.0
    %1816 = vmatpush1.msra.mxu0 %v1790
    %1817 = vmatprep.subr.mxu0 0.0
    %1818 = vmatpush1.msra.mxu0 %v1791
    %1819 = vmatprep.subr.mxu0 0.0
    %1820 = vmatpush1.msra.mxu0 %v1792
    %1821 = vmatprep.subr.mxu0 0.0
    %1822 = vmatpush1.msra.mxu0 %v1793
    %1823 = vmatprep.subr.mxu0 0.0
    %1824 = vmatpush1.msra.mxu0 %v1794
    %1825 = vmatprep.subr.mxu0 0.0
    %1826 = vmatpush1.msra.mxu0 %v1795
    %1827 = vmatprep.subr.mxu0 0.0
    %1828 = vmatpush1.msra.mxu0 %v1796
    %1829 = vmatprep.subr.mxu0 0.0
    %1830 = vmatpush1.msra.mxu0 0.0
    %1831 = vmatprep.subr.mxu0 0.0
    %1832 = vmatpush1.msra.mxu0 0.0
    %1833 = vmatprep.subr.mxu0 0.0
    %1834 = vmatpush1.msra.mxu0 0.0
    %1835 = vmatprep.subr.mxu0 0.0
    %1836 = vmatpush1.msra.mxu0 0.0
    %1837 = vmatprep.subr.mxu0 0.0
    %1838 = vmatpush1.msra.mxu0 0.0
    %1839 = vmatprep.subr.mxu0 0.0
    %1840 = vmatpush1.msra.mxu0 0.0
    %1841 = vmatprep.subr.mxu0 0.0
    %1842 = vmatpush1.msra.mxu0 0.0
    %1843 = vmatprep.subr.mxu0 0.0
    %1844 = vmatpush1.msra.mxu0 0.0
    %1845 = vmatprep.subr.mxu0 0.0
    %1846 = vmatpush1.msra.mxu0 0.0
    %1847 = vmatprep.subr.mxu0 0.0
    %1848 = vmatpush1.msra.mxu0 0.0
    %1849 = vmatprep.subr.mxu0 0.0
    %1850 = vmatpush1.msra.mxu0 0.0
    %1851 = vmatprep.subr.mxu0 0.0
    %1852 = vmatpush1.msra.mxu0 0.0
    %1853 = vmatprep.subr.mxu0 0.0
    %1854 = vmatpush1.msra.mxu0 0.0
    %1855 = vmatprep.subr.mxu0 0.0
    %1856 = vmatpush1.msra.mxu0 0.0
    %1857 = vmatprep.subr.mxu0 0.0
    %1858 = vmatpush1.msra.mxu0 0.0
    %1859 = vmatprep.subr.mxu0 0.0
    %1860 = vmatpush1.msra.mxu0 0.0
    %1861 = vmatprep.mubr.f32.mxu0 0.0
    %1862 = vmatmul.mubr.f32.gmra.mrb[0].mxu0 %v1764
    %v1863 = vpop.f32.mrb[0].mxu0
    %v1864 = vadd.f32 0.0, %v1863
    %v1865 = vpop.f32.mrb[0].mxu0
    %1866 = vmatprep.mubr.f32.mxu0 0.0
    %1867 = vmatmul.mubr.f32.gmra.mrb[0].mxu0 %v1765
    %v1868 = vpop.f32.mrb[0].mxu0
    %v1869 = vadd.f32 0.0, %v1868
    %v1870 = vpop.f32.mrb[0].mxu0
    %1871 = vmatprep.mubr.f32.mxu0 0.0
    %1872 = vmatmul.mubr.f32.gmra.mrb[0].mxu0 %v1766
    %v1873 = vpop.f32.mrb[0].mxu0
    %v1874 = vadd.f32 0.0, %v1873
    %v1875 = vpop.f32.mrb[0].mxu0
    %1876 = vmatprep.mubr.f32.mxu0 0.0
    %1877 = vmatmul.mubr.f32.gmra.mrb[0].mxu0 %v1767
    %v1878 = vpop.f32.mrb[0].mxu0
    %v1879 = vadd.f32 0.0, %v1878
    %v1880 = vpop.f32.mrb[0].mxu0
    %1881 = vmatprep.mubr.f32.mxu0 0.0
    %1882 = vmatmul.mubr.f32.gmra.mrb[0].mxu0 %v1768
    %v1883 = vpop.f32.mrb[0].mxu0
    %v1884 = vadd.f32 0.0, %v1883
    %v1885 = vpop.f32.mrb[0].mxu0
    %1886 = vmatprep.mubr.f32.mxu0 0.0
    %1887 = vmatmul.mubr.f32.gmra.mrb[0].mxu0 %v1769
    %v1888 = vpop.f32.mrb[0].mxu0
    %v1889 = vadd.f32 0.0, %v1888
    %v1890 = vpop.f32.mrb[0].mxu0
    %1891 = vmatprep.mubr.f32.mxu0 0.0
    %1892 = vmatmul.mubr.f32.gmra.mrb[0].mxu0 %v1770
    %v1893 = vpop.f32.mrb[0].mxu0
    %v1894 = vadd.f32 0.0, %v1893
    %v1895 = vpop.f32.mrb[0].mxu0
    %1896 = vmatprep.mubr.f32.mxu0 0.0
    %1897 = vmatmul.mubr.f32.gmra.mrb[0].mxu0 %v1771
    %v1898 = vpop.f32.mrb[0].mxu0
    %v1899 = vadd.f32 0.0, %v1898
    %v1900 = vpop.f32.mrb[0].mxu0
    %1901 = vmatprep.mubr.f32.mxu0 0.0
    %1902 = vmatmul.mubr.f32.gmra.mrb[0].mxu0 %v1772
    %v1903 = vpop.f32.mrb[0].mxu0
    %v1904 = vadd.f32 0.0, %v1903
    %v1905 = vpop.f32.mrb[0].mxu0
    %1906 = vmatprep.mubr.f32.mxu0 0.0
    %1907 = vmatmul.mubr.f32.gmra.mrb[0].mxu0 %v1773
    %v1908 = vpop.f32.mrb[0].mxu0
    %v1909 = vadd.f32 0.0, %v1908
    %v1910 = vpop.f32.mrb[0].mxu0
    %1911 = vmatprep.mubr.f32.mxu0 0.0
    %1912 = vmatmul.mubr.f32.gmra.mrb[0].mxu0 %v1774
    %v1913 = vpop.f32.mrb[0].mxu0
    %v1914 = vadd.f32 0.0, %v1913
    %v1915 = vpop.f32.mrb[0].mxu0
    %1916 = vmatprep.mubr.f32.mxu0 0.0
    %1917 = vmatmul.mubr.f32.gmra.mrb[0].mxu0 %v1775
    %v1918 = vpop.f32.mrb[0].mxu0
    %v1919 = vadd.f32 0.0, %v1918
    %v1920 = vpop.f32.mrb[0].mxu0
    %1921 = vmatprep.mubr.f32.mxu0 0.0
    %1922 = vmatmul.mubr.f32.gmra.mrb[0].mxu0 %v1776
    %v1923 = vpop.f32.mrb[0].mxu0
    %v1924 = vadd.f32 0.0, %v1923
    %v1925 = vpop.f32.mrb[0].mxu0
    %1926 = vmatprep.mubr.f32.mxu0 0.0
    %1927 = vmatmul.mubr.f32.gmra.mrb[0].mxu0 %v1777
    %v1928 = vpop.f32.mrb[0].mxu0
    %v1929 = vadd.f32 0.0, %v1928
    %v1930 = vpop.f32.mrb[0].mxu0
    %1931 = vmatprep.mubr.f32.mxu0 0.0
    %1932 = vmatmul.mubr.f32.gmra.mrb[0].mxu0 %v1778
    %v1933 = vpop.f32.mrb[0].mxu0
    %v1934 = vadd.f32 0.0, %v1933
    %v1935 = vpop.f32.mrb[0].mxu0
    %1936 = vmatprep.mubr.f32.mxu0 0.0
    %1937 = vmatmul.mubr.f32.gmra.mrb[0].mxu0 %v1779
    %v1938 = vpop.f32.mrb[0].mxu0
    %v1939 = vadd.f32 0.0, %v1938
    %v1940 = vpop.f32.mrb[0].mxu0
    %1941 = vdwg.mxu0
    %v1942 = vadd.f32 %v1748, %v1864
    %v1943 = vadd.f32 %v1749, %v1869
    %v1944 = vadd.f32 %v1750, %v1874
    %v1945 = vadd.f32 %v1751, %v1879
    %v1946 = vadd.f32 %v1752, %v1884
    %v1947 = vadd.f32 %v1753, %v1889
    %v1948 = vadd.f32 %v1754, %v1894
    %v1949 = vadd.f32 %v1755, %v1899
    %v1950 = vadd.f32 %v1756, %v1904
    %v1951 = vadd.f32 %v1757, %v1909
    %v1952 = vadd.f32 %v1758, %v1914
    %v1953 = vadd.f32 %v1759, %v1919
    %v1954 = vadd.f32 %v1760, %v1924
    %v1955 = vadd.f32 %v1761, %v1929
    %v1956 = vadd.f32 %v1762, %v1934
    %v1957 = vadd.f32 %v1763, %v1939
    %s1958 = scalar_lea.vmem [#allocation2], 32
    %v1959 = vld [vmem:[%s1958] sm:$0xff]
    %v1960 = vld [vmem:[%s1958 + $0x10] sm:$0xff]
    %v1961 = vld [vmem:[%s1958 + $0x20] sm:$0xff]
    %v1962 = vld [vmem:[%s1958 + $0x30] sm:$0xff]
    %v1963 = vld [vmem:[%s1958 + $0x40] sm:$0xff]
    %v1964 = vld [vmem:[%s1958 + $0x50] sm:$0xff]
    %v1965 = vld [vmem:[%s1958 + $0x60] sm:$0xff]
    %v1966 = vld [vmem:[%s1958 + $0x70] sm:$0xff]
    %v1967 = vld [vmem:[%s1958 + $0xa0] sm:$0xff]
    %v1968 = vld [vmem:[%s1958 + $0xb0] sm:$0xff]
    %v1969 = vld [vmem:[%s1958 + $0xc0] sm:$0xff]
    %v1970 = vld [vmem:[%s1958 + $0xd0] sm:$0xff]
    %v1971 = vld [vmem:[%s1958 + $0xe0] sm:$0xff]
    %v1972 = vld [vmem:[%s1958 + $0xf0] sm:$0xff]
    %v1973 = vld [vmem:[%s1958 + $0x100] sm:$0xff]
    %v1974 = vld [vmem:[%s1958 + $0x110] sm:$0xff]
    %s1975 = scalar_lea.vmem [#allocation3], 768
    %v1976 = vld [vmem:[%s1975] sm:$0xff]
    %v1977 = vld [vmem:[%s1975 + $0x8] sm:$0xff]
    %v1978 = vld [vmem:[%s1975 + $0x10] sm:$0xff]
    %v1979 = vld [vmem:[%s1975 + $0x18] sm:$0xff]
    %v1980 = vld [vmem:[%s1975 + $0x20] sm:$0xff]
    %v1981 = vld [vmem:[%s1975 + $0x28] sm:$0xff]
    %v1982 = vld [vmem:[%s1975 + $0x30] sm:$0xff]
    %v1983 = vld [vmem:[%s1975 + $0x38] sm:$0xff]
    %v1984 = vld [vmem:[%s1975 + $0x40] sm:$0xff]
    %v1985 = vld [vmem:[%s1975 + $0x48] sm:$0xff]
    %v1986 = vld [vmem:[%s1975 + $0x50] sm:$0xff]
    %v1987 = vld [vmem:[%s1975 + $0x58] sm:$0xff]
    %v1988 = vld [vmem:[%s1975 + $0x60] sm:$0xff]
    %v1989 = vld [vmem:[%s1975 + $0x68] sm:$0xff]
    %v1990 = vld [vmem:[%s1975 + $0x70] sm:$0xff]
    %v1991 = vld [vmem:[%s1975 + $0x78] sm:$0xff]
    %1992 = vmatprep.subr.mxu0 0.0
    %1993 = vmatpush1.msra.mxu0 %v1976
    %1994 = vmatprep.subr.mxu0 0.0
    %1995 = vmatpush1.msra.mxu0 %v1977
    %1996 = vmatprep.subr.mxu0 0.0
    %1997 = vmatpush1.msra.mxu0 %v1978
    %1998 = vmatprep.subr.mxu0 0.0
    %1999 = vmatpush1.msra.mxu0 %v1979
    %2000 = vmatprep.subr.mxu0 0.0
    %2001 = vmatpush1.msra.mxu0 %v1980
    %2002 = vmatprep.subr.mxu0 0.0
    %2003 = vmatpush1.msra.mxu0 %v1981
    %2004 = vmatprep.subr.mxu0 0.0
    %2005 = vmatpush1.msra.mxu0 %v1982
    %2006 = vmatprep.subr.mxu0 0.0
    %2007 = vmatpush1.msra.mxu0 %v1983
    %2008 = vmatprep.subr.mxu0 0.0
    %2009 = vmatpush1.msra.mxu0 %v1984
    %2010 = vmatprep.subr.mxu0 0.0
    %2011 = vmatpush1.msra.mxu0 %v1985
    %2012 = vmatprep.subr.mxu0 0.0
    %2013 = vmatpush1.msra.mxu0 %v1986
    %2014 = vmatprep.subr.mxu0 0.0
    %2015 = vmatpush1.msra.mxu0 %v1987
    %2016 = vmatprep.subr.mxu0 0.0
    %2017 = vmatpush1.msra.mxu0 %v1988
    %2018 = vmatprep.subr.mxu0 0.0
    %2019 = vmatpush1.msra.mxu0 %v1989
    %2020 = vmatprep.subr.mxu0 0.0
    %2021 = vmatpush1.msra.mxu0 %v1990
    %2022 = vmatprep.subr.mxu0 0.0
    %2023 = vmatpush1.msra.mxu0 %v1991
    %2024 = vmatprep.subr.mxu0 0.0
    %2025 = vmatpush1.msra.mxu0 0.0
    %2026 = vmatprep.subr.mxu0 0.0
    %2027 = vmatpush1.msra.mxu0 0.0
    %2028 = vmatprep.subr.mxu0 0.0
    %2029 = vmatpush1.msra.mxu0 0.0
    %2030 = vmatprep.subr.mxu0 0.0
    %2031 = vmatpush1.msra.mxu0 0.0
    %2032 = vmatprep.subr.mxu0 0.0
    %2033 = vmatpush1.msra.mxu0 0.0
    %2034 = vmatprep.subr.mxu0 0.0
    %2035 = vmatpush1.msra.mxu0 0.0
    %2036 = vmatprep.subr.mxu0 0.0
    %2037 = vmatpush1.msra.mxu0 0.0
    %2038 = vmatprep.subr.mxu0 0.0
    %2039 = vmatpush1.msra.mxu0 0.0
    %2040 = vmatprep.subr.mxu0 0.0
    %2041 = vmatpush1.msra.mxu0 0.0
    %2042 = vmatprep.subr.mxu0 0.0
    %2043 = vmatpush1.msra.mxu0 0.0
    %2044 = vmatprep.subr.mxu0 0.0
    %2045 = vmatpush1.msra.mxu0 0.0
    %2046 = vmatprep.subr.mxu0 0.0
    %2047 = vmatpush1.msra.mxu0 0.0
    %2048 = vmatprep.subr.mxu0 0.0
    %2049 = vmatpush1.msra.mxu0 0.0
    %2050 = vmatprep.subr.mxu0 0.0
    %2051 = vmatpush1.msra.mxu0 0.0
    %2052 = vmatprep.subr.mxu0 0.0
    %2053 = vmatpush1.msra.mxu0 0.0
    %2054 = vmatprep.subr.mxu0 0.0
    %2055 = vmatpush1.msra.mxu0 0.0
    %2056 = vmatprep.mubr.f32.mxu0 0.0
    %2057 = vmatmul.mubr.f32.gmra.mrb[0].mxu0 %v1959
    %v2058 = vpop.f32.mrb[0].mxu0
    %v2059 = vadd.f32 0.0, %v2058
    %v2060 = vpop.f32.mrb[0].mxu0
    %2061 = vmatprep.mubr.f32.mxu0 0.0
    %2062 = vmatmul.mubr.f32.gmra.mrb[0].mxu0 %v1960
    %v2063 = vpop.f32.mrb[0].mxu0
    %v2064 = vadd.f32 0.0, %v2063
    %v2065 = vpop.f32.mrb[0].mxu0
    %2066 = vmatprep.mubr.f32.mxu0 0.0
    %2067 = vmatmul.mubr.f32.gmra.mrb[0].mxu0 %v1961
    %v2068 = vpop.f32.mrb[0].mxu0
    %v2069 = vadd.f32 0.0, %v2068
    %v2070 = vpop.f32.mrb[0].mxu0
    %2071 = vmatprep.mubr.f32.mxu0 0.0
    %2072 = vmatmul.mubr.f32.gmra.mrb[0].mxu0 %v1962
    %v2073 = vpop.f32.mrb[0].mxu0
    %v2074 = vadd.f32 0.0, %v2073
    %v2075 = vpop.f32.mrb[0].mxu0
    %2076 = vmatprep.mubr.f32.mxu0 0.0
    %2077 = vmatmul.mubr.f32.gmra.mrb[0].mxu0 %v1963
    %v2078 = vpop.f32.mrb[0].mxu0
    %v2079 = vadd.f32 0.0, %v2078
    %v2080 = vpop.f32.mrb[0].mxu0
    %2081 = vmatprep.mubr.f32.mxu0 0.0
    %2082 = vmatmul.mubr.f32.gmra.mrb[0].mxu0 %v1964
    %v2083 = vpop.f32.mrb[0].mxu0
    %v2084 = vadd.f32 0.0, %v2083
    %v2085 = vpop.f32.mrb[0].mxu0
    %2086 = vmatprep.mubr.f32.mxu0 0.0
    %2087 = vmatmul.mubr.f32.gmra.mrb[0].mxu0 %v1965
    %v2088 = vpop.f32.mrb[0].mxu0
    %v2089 = vadd.f32 0.0, %v2088
    %v2090 = vpop.f32.mrb[0].mxu0
    %2091 = vmatprep.mubr.f32.mxu0 0.0
    %2092 = vmatmul.mubr.f32.gmra.mrb[0].mxu0 %v1966
    %v2093 = vpop.f32.mrb[0].mxu0
    %v2094 = vadd.f32 0.0, %v2093
    %v2095 = vpop.f32.mrb[0].mxu0
    %2096 = vmatprep.mubr.f32.mxu0 0.0
    %2097 = vmatmul.mubr.f32.gmra.mrb[0].mxu0 %v1967
    %v2098 = vpop.f32.mrb[0].mxu0
    %v2099 = vadd.f32 0.0, %v2098
    %v2100 = vpop.f32.mrb[0].mxu0
    %2101 = vmatprep.mubr.f32.mxu0 0.0
    %2102 = vmatmul.mubr.f32.gmra.mrb[0].mxu0 %v1968
    %v2103 = vpop.f32.mrb[0].mxu0
    %v2104 = vadd.f32 0.0, %v2103
    %v2105 = vpop.f32.mrb[0].mxu0
    %2106 = vmatprep.mubr.f32.mxu0 0.0
    %2107 = vmatmul.mubr.f32.gmra.mrb[0].mxu0 %v1969
    %v2108 = vpop.f32.mrb[0].mxu0
    %v2109 = vadd.f32 0.0, %v2108
    %v2110 = vpop.f32.mrb[0].mxu0
    %2111 = vmatprep.mubr.f32.mxu0 0.0
    %2112 = vmatmul.mubr.f32.gmra.mrb[0].mxu0 %v1970
    %v2113 = vpop.f32.mrb[0].mxu0
    %v2114 = vadd.f32 0.0, %v2113
    %v2115 = vpop.f32.mrb[0].mxu0
    %2116 = vmatprep.mubr.f32.mxu0 0.0
    %2117 = vmatmul.mubr.f32.gmra.mrb[0].mxu0 %v1971
    %v2118 = vpop.f32.mrb[0].mxu0
    %v2119 = vadd.f32 0.0, %v2118
    %v2120 = vpop.f32.mrb[0].mxu0
    %2121 = vmatprep.mubr.f32.mxu0 0.0
    %2122 = vmatmul.mubr.f32.gmra.mrb[0].mxu0 %v1972
    %v2123 = vpop.f32.mrb[0].mxu0
    %v2124 = vadd.f32 0.0, %v2123
    %v2125 = vpop.f32.mrb[0].mxu0
    %2126 = vmatprep.mubr.f32.mxu0 0.0
    %2127 = vmatmul.mubr.f32.gmra.mrb[0].mxu0 %v1973
    %v2128 = vpop.f32.mrb[0].mxu0
    %v2129 = vadd.f32 0.0, %v2128
    %v2130 = vpop.f32.mrb[0].mxu0
    %2131 = vmatprep.mubr.f32.mxu0 0.0
    %2132 = vmatmul.mubr.f32.gmra.mrb[0].mxu0 %v1974
    %v2133 = vpop.f32.mrb[0].mxu0
    %v2134 = vadd.f32 0.0, %v2133
    %v2135 = vpop.f32.mrb[0].mxu0
    %2136 = vdwg.mxu0
    %v2137 = vadd.f32 %v1942, %v2059
    %v2138 = vadd.f32 %v1943, %v2064
    %v2139 = vadd.f32 %v1944, %v2069
    %v2140 = vadd.f32 %v1945, %v2074
    %v2141 = vadd.f32 %v1946, %v2079
    %v2142 = vadd.f32 %v1947, %v2084
    %v2143 = vadd.f32 %v1948, %v2089
    %v2144 = vadd.f32 %v1949, %v2094
    %v2145 = vadd.f32 %v1950, %v2099
    %v2146 = vadd.f32 %v1951, %v2104
    %v2147 = vadd.f32 %v1952, %v2109
    %v2148 = vadd.f32 %v1953, %v2114
    %v2149 = vadd.f32 %v1954, %v2119
    %v2150 = vadd.f32 %v1955, %v2124
    %v2151 = vadd.f32 %v1956, %v2129
    %v2152 = vadd.f32 %v1957, %v2134
    %v2153 = vld [vmem:[%s1958 + $0x1] sm:$0xff]
    %v2154 = vld [vmem:[%s1958 + $0x11] sm:$0xff]
    %v2155 = vld [vmem:[%s1958 + $0x21] sm:$0xff]
    %v2156 = vld [vmem:[%s1958 + $0x31] sm:$0xff]
    %v2157 = vld [vmem:[%s1958 + $0x41] sm:$0xff]
    %v2158 = vld [vmem:[%s1958 + $0x51] sm:$0xff]
    %v2159 = vld [vmem:[%s1958 + $0x61] sm:$0xff]
    %v2160 = vld [vmem:[%s1958 + $0x71] sm:$0xff]
    %v2161 = vld [vmem:[%s1958 + $0xa1] sm:$0xff]
    %v2162 = vld [vmem:[%s1958 + $0xb1] sm:$0xff]
    %v2163 = vld [vmem:[%s1958 + $0xc1] sm:$0xff]
    %v2164 = vld [vmem:[%s1958 + $0xd1] sm:$0xff]
    %v2165 = vld [vmem:[%s1958 + $0xe1] sm:$0xff]
    %v2166 = vld [vmem:[%s1958 + $0xf1] sm:$0xff]
    %v2167 = vld [vmem:[%s1958 + $0x101] sm:$0xff]
    %v2168 = vld [vmem:[%s1958 + $0x111] sm:$0xff]
    %s2169 = scalar_lea.vmem [#allocation3], 896
    %v2170 = vld [vmem:[%s2169] sm:$0xff]
    %v2171 = vld [vmem:[%s2169 + $0x8] sm:$0xff]
    %v2172 = vld [vmem:[%s2169 + $0x10] sm:$0xff]
    %v2173 = vld [vmem:[%s2169 + $0x18] sm:$0xff]
    %v2174 = vld [vmem:[%s2169 + $0x20] sm:$0xff]
    %v2175 = vld [vmem:[%s2169 + $0x28] sm:$0xff]
    %v2176 = vld [vmem:[%s2169 + $0x30] sm:$0xff]
    %v2177 = vld [vmem:[%s2169 + $0x38] sm:$0xff]
    %v2178 = vld [vmem:[%s2169 + $0x40] sm:$0xff]
    %v2179 = vld [vmem:[%s2169 + $0x48] sm:$0xff]
    %v2180 = vld [vmem:[%s2169 + $0x50] sm:$0xff]
    %v2181 = vld [vmem:[%s2169 + $0x58] sm:$0xff]
    %v2182 = vld [vmem:[%s2169 + $0x60] sm:$0xff]
    %v2183 = vld [vmem:[%s2169 + $0x68] sm:$0xff]
    %v2184 = vld [vmem:[%s2169 + $0x70] sm:$0xff]
    %v2185 = vld [vmem:[%s2169 + $0x78] sm:$0xff]
    %2186 = vmatprep.subr.mxu0 0.0
    %2187 = vmatpush1.msra.mxu0 %v2170
    %2188 = vmatprep.subr.mxu0 0.0
    %2189 = vmatpush1.msra.mxu0 %v2171
    %2190 = vmatprep.subr.mxu0 0.0
    %2191 = vmatpush1.msra.mxu0 %v2172
    %2192 = vmatprep.subr.mxu0 0.0
    %2193 = vmatpush1.msra.mxu0 %v2173
    %2194 = vmatprep.subr.mxu0 0.0
    %2195 = vmatpush1.msra.mxu0 %v2174
    %2196 = vmatprep.subr.mxu0 0.0
    %2197 = vmatpush1.msra.mxu0 %v2175
    %2198 = vmatprep.subr.mxu0 0.0
    %2199 = vmatpush1.msra.mxu0 %v2176
    %2200 = vmatprep.subr.mxu0 0.0
    %2201 = vmatpush1.msra.mxu0 %v2177
    %2202 = vmatprep.subr.mxu0 0.0
    %2203 = vmatpush1.msra.mxu0 %v2178
    %2204 = vmatprep.subr.mxu0 0.0
    %2205 = vmatpush1.msra.mxu0 %v2179
    %2206 = vmatprep.subr.mxu0 0.0
    %2207 = vmatpush1.msra.mxu0 %v2180
    %2208 = vmatprep.subr.mxu0 0.0
    %2209 = vmatpush1.msra.mxu0 %v2181
    %2210 = vmatprep.subr.mxu0 0.0
    %2211 = vmatpush1.msra.mxu0 %v2182
    %2212 = vmatprep.subr.mxu0 0.0
    %2213 = vmatpush1.msra.mxu0 %v2183
    %2214 = vmatprep.subr.mxu0 0.0
    %2215 = vmatpush1.msra.mxu0 %v2184
    %2216 = vmatprep.subr.mxu0 0.0
    %2217 = vmatpush1.msra.mxu0 %v2185
    %2218 = vmatprep.subr.mxu0 0.0
    %2219 = vmatpush1.msra.mxu0 0.0
    %2220 = vmatprep.subr.mxu0 0.0
    %2221 = vmatpush1.msra.mxu0 0.0
    %2222 = vmatprep.subr.mxu0 0.0
    %2223 = vmatpush1.msra.mxu0 0.0
    %2224 = vmatprep.subr.mxu0 0.0
    %2225 = vmatpush1.msra.mxu0 0.0
    %2226 = vmatprep.subr.mxu0 0.0
    %2227 = vmatpush1.msra.mxu0 0.0
    %2228 = vmatprep.subr.mxu0 0.0
    %2229 = vmatpush1.msra.mxu0 0.0
    %2230 = vmatprep.subr.mxu0 0.0
    %2231 = vmatpush1.msra.mxu0 0.0
    %2232 = vmatprep.subr.mxu0 0.0
    %2233 = vmatpush1.msra.mxu0 0.0
    %2234 = vmatprep.subr.mxu0 0.0
    %2235 = vmatpush1.msra.mxu0 0.0
    %2236 = vmatprep.subr.mxu0 0.0
    %2237 = vmatpush1.msra.mxu0 0.0
    %2238 = vmatprep.subr.mxu0 0.0
    %2239 = vmatpush1.msra.mxu0 0.0
    %2240 = vmatprep.subr.mxu0 0.0
    %2241 = vmatpush1.msra.mxu0 0.0
    %2242 = vmatprep.subr.mxu0 0.0
    %2243 = vmatpush1.msra.mxu0 0.0
    %2244 = vmatprep.subr.mxu0 0.0
    %2245 = vmatpush1.msra.mxu0 0.0
    %2246 = vmatprep.subr.mxu0 0.0
    %2247 = vmatpush1.msra.mxu0 0.0
    %2248 = vmatprep.subr.mxu0 0.0
    %2249 = vmatpush1.msra.mxu0 0.0
    %2250 = vmatprep.mubr.f32.mxu0 0.0
    %2251 = vmatmul.mubr.f32.gmra.mrb[0].mxu0 %v2153
    %v2252 = vpop.f32.mrb[0].mxu0
    %v2253 = vadd.f32 0.0, %v2252
    %v2254 = vpop.f32.mrb[0].mxu0
    %2255 = vmatprep.mubr.f32.mxu0 0.0
    %2256 = vmatmul.mubr.f32.gmra.mrb[0].mxu0 %v2154
    %v2257 = vpop.f32.mrb[0].mxu0
    %v2258 = vadd.f32 0.0, %v2257
    %v2259 = vpop.f32.mrb[0].mxu0
    %2260 = vmatprep.mubr.f32.mxu0 0.0
    %2261 = vmatmul.mubr.f32.gmra.mrb[0].mxu0 %v2155
    %v2262 = vpop.f32.mrb[0].mxu0
    %v2263 = vadd.f32 0.0, %v2262
    %v2264 = vpop.f32.mrb[0].mxu0
    %2265 = vmatprep.mubr.f32.mxu0 0.0
    %2266 = vmatmul.mubr.f32.gmra.mrb[0].mxu0 %v2156
    %v2267 = vpop.f32.mrb[0].mxu0
    %v2268 = vadd.f32 0.0, %v2267
    %v2269 = vpop.f32.mrb[0].mxu0
    %2270 = vmatprep.mubr.f32.mxu0 0.0
    %2271 = vmatmul.mubr.f32.gmra.mrb[0].mxu0 %v2157
    %v2272 = vpop.f32.mrb[0].mxu0
    %v2273 = vadd.f32 0.0, %v2272
    %v2274 = vpop.f32.mrb[0].mxu0
    %2275 = vmatprep.mubr.f32.mxu0 0.0
    %2276 = vmatmul.mubr.f32.gmra.mrb[0].mxu0 %v2158
    %v2277 = vpop.f32.mrb[0].mxu0
    %v2278 = vadd.f32 0.0, %v2277
    %v2279 = vpop.f32.mrb[0].mxu0
    %2280 = vmatprep.mubr.f32.mxu0 0.0
    %2281 = vmatmul.mubr.f32.gmra.mrb[0].mxu0 %v2159
    %v2282 = vpop.f32.mrb[0].mxu0
    %v2283 = vadd.f32 0.0, %v2282
    %v2284 = vpop.f32.mrb[0].mxu0
    %2285 = vmatprep.mubr.f32.mxu0 0.0
    %2286 = vmatmul.mubr.f32.gmra.mrb[0].mxu0 %v2160
    %v2287 = vpop.f32.mrb[0].mxu0
    %v2288 = vadd.f32 0.0, %v2287
    %v2289 = vpop.f32.mrb[0].mxu0
    %2290 = vmatprep.mubr.f32.mxu0 0.0
    %2291 = vmatmul.mubr.f32.gmra.mrb[0].mxu0 %v2161
    %v2292 = vpop.f32.mrb[0].mxu0
    %v2293 = vadd.f32 0.0, %v2292
    %v2294 = vpop.f32.mrb[0].mxu0
    %2295 = vmatprep.mubr.f32.mxu0 0.0
    %2296 = vmatmul.mubr.f32.gmra.mrb[0].mxu0 %v2162
    %v2297 = vpop.f32.mrb[0].mxu0
    %v2298 = vadd.f32 0.0, %v2297
    %v2299 = vpop.f32.mrb[0].mxu0
    %2300 = vmatprep.mubr.f32.mxu0 0.0
    %2301 = vmatmul.mubr.f32.gmra.mrb[0].mxu0 %v2163
    %v2302 = vpop.f32.mrb[0].mxu0
    %v2303 = vadd.f32 0.0, %v2302
    %v2304 = vpop.f32.mrb[0].mxu0
    %2305 = vmatprep.mubr.f32.mxu0 0.0
    %2306 = vmatmul.mubr.f32.gmra.mrb[0].mxu0 %v2164
    %v2307 = vpop.f32.mrb[0].mxu0
    %v2308 = vadd.f32 0.0, %v2307
    %v2309 = vpop.f32.mrb[0].mxu0
    %2310 = vmatprep.mubr.f32.mxu0 0.0
    %2311 = vmatmul.mubr.f32.gmra.mrb[0].mxu0 %v2165
    %v2312 = vpop.f32.mrb[0].mxu0
    %v2313 = vadd.f32 0.0, %v2312
    %v2314 = vpop.f32.mrb[0].mxu0
    %2315 = vmatprep.mubr.f32.mxu0 0.0
    %2316 = vmatmul.mubr.f32.gmra.mrb[0].mxu0 %v2166
    %v2317 = vpop.f32.mrb[0].mxu0
    %v2318 = vadd.f32 0.0, %v2317
    %v2319 = vpop.f32.mrb[0].mxu0
    %2320 = vmatprep.mubr.f32.mxu0 0.0
    %2321 = vmatmul.mubr.f32.gmra.mrb[0].mxu0 %v2167
    %v2322 = vpop.f32.mrb[0].mxu0
    %v2323 = vadd.f32 0.0, %v2322
    %v2324 = vpop.f32.mrb[0].mxu0
    %2325 = vmatprep.mubr.f32.mxu0 0.0
    %2326 = vmatmul.mubr.f32.gmra.mrb[0].mxu0 %v2168
    %v2327 = vpop.f32.mrb[0].mxu0
    %v2328 = vadd.f32 0.0, %v2327
    %v2329 = vpop.f32.mrb[0].mxu0
    %2330 = vdwg.mxu0
    %v2331 = vadd.f32 %v2137, %v2253
    %v2332 = vadd.f32 %v2138, %v2258
    %v2333 = vadd.f32 %v2139, %v2263
    %v2334 = vadd.f32 %v2140, %v2268
    %v2335 = vadd.f32 %v2141, %v2273
    %v2336 = vadd.f32 %v2142, %v2278
    %v2337 = vadd.f32 %v2143, %v2283
    %v2338 = vadd.f32 %v2144, %v2288
    %v2339 = vadd.f32 %v2145, %v2293
    %v2340 = vadd.f32 %v2146, %v2298
    %v2341 = vadd.f32 %v2147, %v2303
    %v2342 = vadd.f32 %v2148, %v2308
    %v2343 = vadd.f32 %v2149, %v2313
    %v2344 = vadd.f32 %v2150, %v2318
    %v2345 = vadd.f32 %v2151, %v2323
    %v2346 = vadd.f32 %v2152, %v2328
    %v2347 = vld [vmem:[%s1958 + $0x2] sm:$0xff]
    %v2348 = vld [vmem:[%s1958 + $0x12] sm:$0xff]
    %v2349 = vld [vmem:[%s1958 + $0x22] sm:$0xff]
    %v2350 = vld [vmem:[%s1958 + $0x32] sm:$0xff]
    %v2351 = vld [vmem:[%s1958 + $0x42] sm:$0xff]
    %v2352 = vld [vmem:[%s1958 + $0x52] sm:$0xff]
    %v2353 = vld [vmem:[%s1958 + $0x62] sm:$0xff]
    %v2354 = vld [vmem:[%s1958 + $0x72] sm:$0xff]
    %v2355 = vld [vmem:[%s1958 + $0xa2] sm:$0xff]
    %v2356 = vld [vmem:[%s1958 + $0xb2] sm:$0xff]
    %v2357 = vld [vmem:[%s1958 + $0xc2] sm:$0xff]
    %v2358 = vld [vmem:[%s1958 + $0xd2] sm:$0xff]
    %v2359 = vld [vmem:[%s1958 + $0xe2] sm:$0xff]
    %v2360 = vld [vmem:[%s1958 + $0xf2] sm:$0xff]
    %v2361 = vld [vmem:[%s1958 + $0x102] sm:$0xff]
    %v2362 = vld [vmem:[%s1958 + $0x112] sm:$0xff]
    %s2363 = scalar_lea.vmem [#allocation3], 1024
    %v2364 = vld [vmem:[%s2363] sm:$0xff]
    %v2365 = vld [vmem:[%s2363 + $0x8] sm:$0xff]
    %v2366 = vld [vmem:[%s2363 + $0x10] sm:$0xff]
    %v2367 = vld [vmem:[%s2363 + $0x18] sm:$0xff]
    %v2368 = vld [vmem:[%s2363 + $0x20] sm:$0xff]
    %v2369 = vld [vmem:[%s2363 + $0x28] sm:$0xff]
    %v2370 = vld [vmem:[%s2363 + $0x30] sm:$0xff]
    %v2371 = vld [vmem:[%s2363 + $0x38] sm:$0xff]
    %v2372 = vld [vmem:[%s2363 + $0x40] sm:$0xff]
    %v2373 = vld [vmem:[%s2363 + $0x48] sm:$0xff]
    %v2374 = vld [vmem:[%s2363 + $0x50] sm:$0xff]
    %v2375 = vld [vmem:[%s2363 + $0x58] sm:$0xff]
    %v2376 = vld [vmem:[%s2363 + $0x60] sm:$0xff]
    %v2377 = vld [vmem:[%s2363 + $0x68] sm:$0xff]
    %v2378 = vld [vmem:[%s2363 + $0x70] sm:$0xff]
    %v2379 = vld [vmem:[%s2363 + $0x78] sm:$0xff]
    %2380 = vmatprep.subr.mxu0 0.0
    %2381 = vmatpush1.msra.mxu0 %v2364
    %2382 = vmatprep.subr.mxu0 0.0
    %2383 = vmatpush1.msra.mxu0 %v2365
    %2384 = vmatprep.subr.mxu0 0.0
    %2385 = vmatpush1.msra.mxu0 %v2366
    %2386 = vmatprep.subr.mxu0 0.0
    %2387 = vmatpush1.msra.mxu0 %v2367
    %2388 = vmatprep.subr.mxu0 0.0
    %2389 = vmatpush1.msra.mxu0 %v2368
    %2390 = vmatprep.subr.mxu0 0.0
    %2391 = vmatpush1.msra.mxu0 %v2369
    %2392 = vmatprep.subr.mxu0 0.0
    %2393 = vmatpush1.msra.mxu0 %v2370
    %2394 = vmatprep.subr.mxu0 0.0
    %2395 = vmatpush1.msra.mxu0 %v2371
    %2396 = vmatprep.subr.mxu0 0.0
    %2397 = vmatpush1.msra.mxu0 %v2372
    %2398 = vmatprep.subr.mxu0 0.0
    %2399 = vmatpush1.msra.mxu0 %v2373
    %2400 = vmatprep.subr.mxu0 0.0
    %2401 = vmatpush1.msra.mxu0 %v2374
    %2402 = vmatprep.subr.mxu0 0.0
    %2403 = vmatpush1.msra.mxu0 %v2375
    %2404 = vmatprep.subr.mxu0 0.0
    %2405 = vmatpush1.msra.mxu0 %v2376
    %2406 = vmatprep.subr.mxu0 0.0
    %2407 = vmatpush1.msra.mxu0 %v2377
    %2408 = vmatprep.subr.mxu0 0.0
    %2409 = vmatpush1.msra.mxu0 %v2378
    %2410 = vmatprep.subr.mxu0 0.0
    %2411 = vmatpush1.msra.mxu0 %v2379
    %2412 = vmatprep.subr.mxu0 0.0
    %2413 = vmatpush1.msra.mxu0 0.0
    %2414 = vmatprep.subr.mxu0 0.0
    %2415 = vmatpush1.msra.mxu0 0.0
    %2416 = vmatprep.subr.mxu0 0.0
    %2417 = vmatpush1.msra.mxu0 0.0
    %2418 = vmatprep.subr.mxu0 0.0
    %2419 = vmatpush1.msra.mxu0 0.0
    %2420 = vmatprep.subr.mxu0 0.0
    %2421 = vmatpush1.msra.mxu0 0.0
    %2422 = vmatprep.subr.mxu0 0.0
    %2423 = vmatpush1.msra.mxu0 0.0
    %2424 = vmatprep.subr.mxu0 0.0
    %2425 = vmatpush1.msra.mxu0 0.0
    %2426 = vmatprep.subr.mxu0 0.0
    %2427 = vmatpush1.msra.mxu0 0.0
    %2428 = vmatprep.subr.mxu0 0.0
    %2429 = vmatpush1.msra.mxu0 0.0
    %2430 = vmatprep.subr.mxu0 0.0
    %2431 = vmatpush1.msra.mxu0 0.0
    %2432 = vmatprep.subr.mxu0 0.0
    %2433 = vmatpush1.msra.mxu0 0.0
    %2434 = vmatprep.subr.mxu0 0.0
    %2435 = vmatpush1.msra.mxu0 0.0
    %2436 = vmatprep.subr.mxu0 0.0
    %2437 = vmatpush1.msra.mxu0 0.0
    %2438 = vmatprep.subr.mxu0 0.0
    %2439 = vmatpush1.msra.mxu0 0.0
    %2440 = vmatprep.subr.mxu0 0.0
    %2441 = vmatpush1.msra.mxu0 0.0
    %2442 = vmatprep.subr.mxu0 0.0
    %2443 = vmatpush1.msra.mxu0 0.0
    %2444 = vmatprep.mubr.f32.mxu0 0.0
    %2445 = vmatmul.mubr.f32.gmra.mrb[0].mxu0 %v2347
    %v2446 = vpop.f32.mrb[0].mxu0
    %v2447 = vadd.f32 0.0, %v2446
    %v2448 = vpop.f32.mrb[0].mxu0
    %2449 = vmatprep.mubr.f32.mxu0 0.0
    %2450 = vmatmul.mubr.f32.gmra.mrb[0].mxu0 %v2348
    %v2451 = vpop.f32.mrb[0].mxu0
    %v2452 = vadd.f32 0.0, %v2451
    %v2453 = vpop.f32.mrb[0].mxu0
    %2454 = vmatprep.mubr.f32.mxu0 0.0
    %2455 = vmatmul.mubr.f32.gmra.mrb[0].mxu0 %v2349
    %v2456 = vpop.f32.mrb[0].mxu0
    %v2457 = vadd.f32 0.0, %v2456
    %v2458 = vpop.f32.mrb[0].mxu0
    %2459 = vmatprep.mubr.f32.mxu0 0.0
    %2460 = vmatmul.mubr.f32.gmra.mrb[0].mxu0 %v2350
    %v2461 = vpop.f32.mrb[0].mxu0
    %v2462 = vadd.f32 0.0, %v2461
    %v2463 = vpop.f32.mrb[0].mxu0
    %2464 = vmatprep.mubr.f32.mxu0 0.0
    %2465 = vmatmul.mubr.f32.gmra.mrb[0].mxu0 %v2351
    %v2466 = vpop.f32.mrb[0].mxu0
    %v2467 = vadd.f32 0.0, %v2466
    %v2468 = vpop.f32.mrb[0].mxu0
    %2469 = vmatprep.mubr.f32.mxu0 0.0
    %2470 = vmatmul.mubr.f32.gmra.mrb[0].mxu0 %v2352
    %v2471 = vpop.f32.mrb[0].mxu0
    %v2472 = vadd.f32 0.0, %v2471
    %v2473 = vpop.f32.mrb[0].mxu0
    %2474 = vmatprep.mubr.f32.mxu0 0.0
    %2475 = vmatmul.mubr.f32.gmra.mrb[0].mxu0 %v2353
    %v2476 = vpop.f32.mrb[0].mxu0
    %v2477 = vadd.f32 0.0, %v2476
    %v2478 = vpop.f32.mrb[0].mxu0
    %2479 = vmatprep.mubr.f32.mxu0 0.0
    %2480 = vmatmul.mubr.f32.gmra.mrb[0].mxu0 %v2354
    %v2481 = vpop.f32.mrb[0].mxu0
    %v2482 = vadd.f32 0.0, %v2481
    %v2483 = vpop.f32.mrb[0].mxu0
    %2484 = vmatprep.mubr.f32.mxu0 0.0
    %2485 = vmatmul.mubr.f32.gmra.mrb[0].mxu0 %v2355
    %v2486 = vpop.f32.mrb[0].mxu0
    %v2487 = vadd.f32 0.0, %v2486
    %v2488 = vpop.f32.mrb[0].mxu0
    %2489 = vmatprep.mubr.f32.mxu0 0.0
    %2490 = vmatmul.mubr.f32.gmra.mrb[0].mxu0 %v2356
    %v2491 = vpop.f32.mrb[0].mxu0
    %v2492 = vadd.f32 0.0, %v2491
    %v2493 = vpop.f32.mrb[0].mxu0
    %2494 = vmatprep.mubr.f32.mxu0 0.0
    %2495 = vmatmul.mubr.f32.gmra.mrb[0].mxu0 %v2357
    %v2496 = vpop.f32.mrb[0].mxu0
    %v2497 = vadd.f32 0.0, %v2496
    %v2498 = vpop.f32.mrb[0].mxu0
    %2499 = vmatprep.mubr.f32.mxu0 0.0
    %2500 = vmatmul.mubr.f32.gmra.mrb[0].mxu0 %v2358
    %v2501 = vpop.f32.mrb[0].mxu0
    %v2502 = vadd.f32 0.0, %v2501
    %v2503 = vpop.f32.mrb[0].mxu0
    %2504 = vmatprep.mubr.f32.mxu0 0.0
    %2505 = vmatmul.mubr.f32.gmra.mrb[0].mxu0 %v2359
    %v2506 = vpop.f32.mrb[0].mxu0
    %v2507 = vadd.f32 0.0, %v2506
    %v2508 = vpop.f32.mrb[0].mxu0
    %2509 = vmatprep.mubr.f32.mxu0 0.0
    %2510 = vmatmul.mubr.f32.gmra.mrb[0].mxu0 %v2360
    %v2511 = vpop.f32.mrb[0].mxu0
    %v2512 = vadd.f32 0.0, %v2511
    %v2513 = vpop.f32.mrb[0].mxu0
    %2514 = vmatprep.mubr.f32.mxu0 0.0
    %2515 = vmatmul.mubr.f32.gmra.mrb[0].mxu0 %v2361
    %v2516 = vpop.f32.mrb[0].mxu0
    %v2517 = vadd.f32 0.0, %v2516
    %v2518 = vpop.f32.mrb[0].mxu0
    %2519 = vmatprep.mubr.f32.mxu0 0.0
    %2520 = vmatmul.mubr.f32.gmra.mrb[0].mxu0 %v2362
    %v2521 = vpop.f32.mrb[0].mxu0
    %v2522 = vadd.f32 0.0, %v2521
    %v2523 = vpop.f32.mrb[0].mxu0
    %2524 = vdwg.mxu0
    %v2525 = vadd.f32 %v2331, %v2447
    %v2526 = vadd.f32 %v2332, %v2452
    %v2527 = vadd.f32 %v2333, %v2457
    %v2528 = vadd.f32 %v2334, %v2462
    %v2529 = vadd.f32 %v2335, %v2467
    %v2530 = vadd.f32 %v2336, %v2472
    %v2531 = vadd.f32 %v2337, %v2477
    %v2532 = vadd.f32 %v2338, %v2482
    %v2533 = vadd.f32 %v2339, %v2487
    %v2534 = vadd.f32 %v2340, %v2492
    %v2535 = vadd.f32 %v2341, %v2497
    %v2536 = vadd.f32 %v2342, %v2502
    %v2537 = vadd.f32 %v2343, %v2507
    %v2538 = vadd.f32 %v2344, %v2512
    %v2539 = vadd.f32 %v2345, %v2517
    %v2540 = vadd.f32 %v2346, %v2522
    %v2541 = vmax.f32 %v2525, 0.0
    %v2542 = vmax.f32 %v2526, 0.0
    %v2543 = vmax.f32 %v2527, 0.0
    %v2544 = vmax.f32 %v2528, 0.0
    %v2545 = vmax.f32 %v2529, 0.0
    %v2546 = vmax.f32 %v2530, 0.0
    %v2547 = vmax.f32 %v2531, 0.0
    %v2548 = vmax.f32 %v2532, 0.0
    %v2549 = vmax.f32 %v2533, 0.0
    %v2550 = vmax.f32 %v2534, 0.0
    %v2551 = vmax.f32 %v2535, 0.0
    %v2552 = vmax.f32 %v2536, 0.0
    %v2553 = vmax.f32 %v2537, 0.0
    %v2554 = vmax.f32 %v2538, 0.0
    %v2555 = vmax.f32 %v2539, 0.0
    %v2556 = vmax.f32 %v2540, 0.0
    %2557 = vst [vmem:[#allocation6] sm:$0xff] %v2541
    %2558 = vst [vmem:[#allocation6 + $0x8] sm:$0xff] %v2542
    %2559 = vst [vmem:[#allocation6 + $0x10] sm:$0xff] %v2543
    %2560 = vst [vmem:[#allocation6 + $0x18] sm:$0xff] %v2544
    %2561 = vst [vmem:[#allocation6 + $0x20] sm:$0xff] %v2545
    %2562 = vst [vmem:[#allocation6 + $0x28] sm:$0xff] %v2546
    %2563 = vst [vmem:[#allocation6 + $0x30] sm:$0xff] %v2547
    %2564 = vst [vmem:[#allocation6 + $0x38] sm:$0xff] %v2548
    %2565 = vst [vmem:[#allocation6 + $0x40] sm:$0xff] %v2549
    %2566 = vst [vmem:[#allocation6 + $0x48] sm:$0xff] %v2550
    %2567 = vst [vmem:[#allocation6 + $0x50] sm:$0xff] %v2551
    %2568 = vst [vmem:[#allocation6 + $0x58] sm:$0xff] %v2552
    %2569 = vst [vmem:[#allocation6 + $0x60] sm:$0xff] %v2553
    %2570 = vst [vmem:[#allocation6 + $0x68] sm:$0xff] %v2554
    %2571 = vst [vmem:[#allocation6 + $0x70] sm:$0xff] %v2555
    %2572 = vst [vmem:[#allocation6 + $0x78] sm:$0xff] %v2556
    // Predicated region
    $region42: #{tpu_custom_call.1} parent=1 // pred_check
      _
    $region43: #{tpu_custom_call.1} parent=1 // pred_check_branch
      %2574 = sbr.rel (0) target = $region45
    $region44: #{tpu_custom_call.1} parent=1 // pred_region
      %s2576 = ssub.s32 2048, 2048
      %2577 = vsyncadd [#allocation5], %s2576
      %s2578 = sshll.u32 [#allocation6], 4
      %s2579 = int_to_ptr.vmem [resolvable:$true] %s2578
      %2584 = dma.vmem_to_hbm [thread:$0]  %s2579, 2048, %s9, [#allocation5], 128, 128, 8
    $region45: #{tpu_custom_call.1} parent=1 // pred_fallthru
      _
    // Predicated region
    $region46: #{tpu_custom_call.1} parent=1 // pred_check
      _
    $region47: #{tpu_custom_call.1} parent=1 // pred_check_branch
      %2586 = sbr.rel (0) target = $region49
    $region48: #{tpu_custom_call.1} parent=1 // pred_region
      %2587 = dma.done [#allocation5], 2048
    $region49: #{tpu_custom_call.1} parent=1 // pred_fallthru
      _
    %2588 = vsyncpa [#allocation4], 1
    %2589 = vsyncpa [#allocation5], 1

</llo_original>
